<compile_context>
chip_gen: v6e
topology: v6e:2x2x1
jax: 0.10.0
libtpu: 0.0.40
codegen_flags: <defaults>
</compile_context>

<pallas_src>
import functools

import jax
import jax.numpy as jnp
from jax import lax
from jax.experimental import pallas as pl
from jax.experimental.pallas import tpu as pltpu


def _cla_kernel(w_in_s, w_pool_s, w_attn_s,
                x1_t0_ref, x1_t1_ref, x1_main_ref, x1_bot_ref,
                x2_ref, out_ref):
    """Fused CLA forward for one (batch, row-tile) grid step.

    Refs:
      w_in_s      : SMEM (C*C*9,)   in_conv weights, idx ((co*C+ci)*3+kh)*3+kw
      w_pool_s    : SMEM (C,)       pool_conv (1x1) weights
      w_attn_s    : SMEM (27,)      attn_conv weights, idx (cp*3+kh)*3+kw
      x1_t0_ref   : VMEM (1, C, 1, 2, W1)   feats1 row-pair r*TH-2   (junk if r==0)
      x1_t1_ref   : VMEM (1, C, 1, 2, W1)   feats1 row-pair r*TH-1   (junk if r==0)
      x1_main_ref : VMEM (1, C, TH, 2*W1)   feats1 row-pairs [r*TH, r*TH+TH)
      x1_bot_ref  : VMEM (1, C, 1, 2, W1)   feats1 row-pair r*TH+TH  (junk if last)
      x2_ref      : VMEM (1, C, TH, W2)     feats2 tile (NCHW)
      out_ref     : VMEM (1, C, TH, W2)     output tile (NCHW)

    A "row-pair" y holds feats1 rows (2y, 2y+1): lanes [0, W1) = even row,
    lanes [W1, 2*W1) = odd row.  Conv results live on even lanes of W1-wide arrays
    (odd lanes carry harmless garbage) and are compacted once at the end.
    """
    C = x1_main_ref.shape[1]
    TH = x1_main_ref.shape[2]
    HALF = x1_main_ref.shape[3] // 2          # = W1 (feats1 width)
    W2 = out_ref.shape[3]

    r = pl.program_id(1)
    n_r = pl.num_programs(1)
    not_first = jnp.where(r == 0, 0.0, 1.0)          # 0 at the image top boundary
    not_last = jnp.where(r == n_r - 1, 0.0, 1.0)     # 0 at the image bottom boundary

    # --- cached iota masks (hoisted; JAX does not CSE broadcasts) -------------
    mask_cache = {}

    def _col_mask(shape, kind, val):
        key = (shape, kind, val)
        if key not in mask_cache:
            it = lax.broadcasted_iota(jnp.int32, shape, 1)
            mask_cache[key] = (it < val) if kind == "lt" else (it >= val)
        return mask_cache[key]

    def _row_mask(shape, val):
        key = (shape, "row", val)
        if key not in mask_cache:
            mask_cache[key] = lax.broadcasted_iota(jnp.int32, shape, 0) == val
        return mask_cache[key]

    def shift_cols(a, d):
        """result[:, c] = a[:, c + d]; zero where c + d falls outside [0, width)."""
        n, w = a.shape
        rolled = pltpu.roll(a, (-d) % w, axis=1)
        if d > 0:
            return jnp.where(_col_mask((n, w), "lt", w - d), rolled, 0.0)
        return jnp.where(_col_mask((n, w), "ge", -d), rolled, 0.0)

    def patched_row_shift(a, repl_row, down):
        """down: result[t]=a[t-1], result[0]=repl_row;  up: result[t]=a[t+1], result[-1]=repl_row."""
        n, w = a.shape
        amt = (1 if down else n - 1) % n
        rolled = pltpu.roll(a, amt, axis=0)
        tgt = 0 if down else n - 1
        return jnp.where(_row_mask((n, w), tgt),
                         jnp.broadcast_to(repl_row, (n, w)), rolled)

    # ---- in_conv: 3x3 / stride 2 / pad 1, accumulated per input channel ------
    # f1_main[co] : (TH, HALF)  conv output rows [r*TH, r*TH+TH)       (even lanes valid)
    # f1_top[co]  : (1, HALF)   conv output row  r*TH-1 (halo, recomputed)
    # f1_bot[co]  : (1, HALF)   conv output row  r*TH+TH (halo, recomputed)
    f1_main = [None] * C
    f1_top = [None] * C
    f1_bot = [None] * C

    for ci in range(C):
        xm = x1_main_ref[0, ci, :, :].astype(jnp.float32)        # (TH, 2*HALF)
        E = xm[:, :HALF]                                         # feats1 rows 2y
        O = xm[:, HALF:]                                         # feats1 rows 2y+1
        t0 = x1_t0_ref[0, ci, 0, :, :].astype(jnp.float32)       # (2, HALF) pair r*TH-2
        t1 = x1_t1_ref[0, ci, 0, :, :].astype(jnp.float32)       # (2, HALF) pair r*TH-1
        bt = x1_bot_ref[0, ci, 0, :, :].astype(jnp.float32)      # (2, HALF) pair r*TH+TH
        t0_odd = t0[1:2, :]
        t1_even, t1_odd = t1[0:1, :], t1[1:2, :]
        b_even, b_odd = bt[0:1, :], bt[1:2, :]

        # odd row directly above main row 0 (zero when it is the image's pad row)
        om_top = t1_odd * not_first
        Om = patched_row_shift(O, om_top, down=True)             # feats1 rows 2y-1

        # row taps (kh = 0, 1, 2) for main rows, the top halo row and the bottom halo row
        taps_main = (Om, E, O)
        taps_top = (t0_odd, t1_even, t1_odd)                     # f1 row r*TH-1
        taps_bot = (O[TH - 1:TH, :], b_even, b_odd)              # f1 row r*TH+TH

        for i in range(3):
            for j in range(3):
                d = j - 1
                tm = taps_main[i] if d == 0 else shift_cols(taps_main[i], d)
                tt = taps_top[i] if d == 0 else shift_cols(taps_top[i], d)
                tb = taps_bot[i] if d == 0 else shift_cols(taps_bot[i], d)
                for co in range(C):
                    w = w_in_s[((co * C + ci) * 3 + i) * 3 + j]
                    f1_main[co] = tm * w if f1_main[co] is None else f1_main[co] + tm * w
                    f1_top[co] = tt * w if f1_top[co] is None else f1_top[co] + tt * w
                    f1_bot[co] = tb * w if f1_bot[co] is None else f1_bot[co] + tb * w

    # ---- channel pooling: [max, mean, 1x1 conv] in one channel sweep ----------
    def channel_pool(f1):
        mx = f1[0]
        sm = f1[0]
        cv = f1[0] * w_pool_s[0]
        for c in range(1, C):
            mx = jnp.maximum(mx, f1[c])
            sm = sm + f1[c]
            cv = cv + f1[c] * w_pool_s[c]
        return (mx, sm * (1.0 / C), cv)          # order matches torch.cat

    pool_main = channel_pool(f1_main)                                  # 3 x (TH, HALF)
    pool_top = tuple(p * not_first for p in channel_pool(f1_top))      # 3 x (1, HALF)
    pool_bot = tuple(p * not_last for p in channel_pool(f1_bot))       # 3 x (1, HALF)

    # ---- attn_conv: 3x3 / pad 1 over the 3 pooled channels (even lanes) -------
    logit = None                                                       # (TH, HALF)
    for cp in range(3):
        P = pool_main[cp]
        rows = (patched_row_shift(P, pool_top[cp], down=True),         # kh = 0
                P,                                                     # kh = 1
                patched_row_shift(P, pool_bot[cp], down=False))        # kh = 2
        for i in range(3):
            for j in range(3):
                d = 2 * (j - 1)          # pooled pixels sit on even lanes -> +/-2 lane shifts
                T = rows[i] if d == 0 else shift_cols(rows[i], d)
                w = w_attn_s[(cp * 3 + i) * 3 + j]
                logit = T * w if logit is None else logit + T * w

    # compact even lanes (lane 2x -> x) once, with a 0/1 selection matmul (MXU is idle)
    sel = (lax.broadcasted_iota(jnp.int32, (HALF, W2), 0)
           == 2 * lax.broadcasted_iota(jnp.int32, (HALF, W2), 1)).astype(jnp.float32)
    logit_c = jnp.dot(logit, sel, preferred_element_type=jnp.float32)  # (TH, W2)
    attn = jax.nn.sigmoid(logit_c)

    # ---- residual: feats2 * attn + feats2 == feats2 * (attn + 1) --------------
    x2 = x2_ref[0].astype(jnp.float32)                                 # (C, TH, W2)
    out_ref[0] = (x2 * (attn + 1.0)[None, :, :]).astype(out_ref.dtype)


def _pick_row_tile(C, H2, W2, itemsize=4, budget_bytes=16 * 1024 * 1024):
    """Largest row tile TH (divides H2; multiple of 8 or == H2) whose double-buffered
    streamed blocks fit a conservative VMEM budget (headroom kept for v7x's 64 MiB)."""
    cands = [t for t in range(1, H2 + 1)
             if H2 % t == 0 and (t % 8 == 0 or t == H2)]
    per_row = C * (4 * W2 + 2 * W2) * itemsize      # feats1 row-pair + feats2 + out
    fitting = [t for t in cands if 2 * t * per_row <= budget_bytes]
    return max(fitting) if fitting else min(cands)


def _cla_forward(feats1, feats2, w_in, w_pool, w_attn,
                 row_tile=None, vmem_limit_bytes=48 * 1024 * 1024):
    """feats1: (B, C, H1, W1), feats2: (B, C, H1//2, W1//2)  -- PyTorch NCHW layout.

    Weights follow PyTorch OIHW layout:
      w_in   : (C, C, 3, 3)   in_conv   (3x3, stride 2, pad 1, no bias)
      w_pool : (1, C, 1, 1)   pool_conv (1x1, no bias)
      w_attn : (1, 3, 3, 3)   attn_conv (3x3, pad 1, no bias)
    """
    B, C, H1, W1 = feats1.shape
    B2, C2, H2, W2 = feats2.shape
    assert (B, C) == (B2, C2), "feats1/feats2 batch or channel mismatch"
    assert H1 == 2 * H2 and W1 == 2 * W2, "feats2 must be the stride-2 size of feats1"
    assert w_in.shape == (C, C, 3, 3)
    assert w_pool.shape == (1, C, 1, 1)
    assert w_attn.shape == (1, 3, 3, 3)

    itemsize = jnp.dtype(feats1.dtype).itemsize
    TH = row_tile if row_tile is not None else _pick_row_tile(C, H2, W2, itemsize)
    assert H2 % TH == 0 and (TH % 8 == 0 or TH == H2), f"bad row tile {TH} for H2={H2}"
    R = H2 // TH

    # Free (bitcast) views of feats1 -- no HBM pre-pass, no pad, no phase gather.
    x1_pairs = feats1.reshape(B, C, H2, 2 * W1)      # row pairs on the lane axis
    x1_split = feats1.reshape(B, C, H2, 2, W1)       # for the 1-row halo blocks

    # Tiny conv weights, flattened and resident in SMEM (scalar-indexed in-kernel).
    w_in_flat = w_in.reshape(-1).astype(jnp.float32)        # (C*C*9,)
    w_pool_flat = w_pool.reshape(-1).astype(jnp.float32)    # (C,)
    w_attn_flat = w_attn.reshape(-1).astype(jnp.float32)    # (27,)

    smem_spec = pl.BlockSpec(memory_space=pltpu.MemorySpace.SMEM)
    main_spec = pl.BlockSpec((1, C, TH, 2 * W1), lambda b, r: (b, 0, r, 0))
    top0_spec = pl.BlockSpec((1, C, 1, 2, W1),
                             lambda b, r: (b, 0, jnp.maximum(r * TH - 2, 0), 0, 0))
    top1_spec = pl.BlockSpec((1, C, 1, 2, W1),
                             lambda b, r: (b, 0, jnp.maximum(r * TH - 1, 0), 0, 0))
    bot_spec = pl.BlockSpec((1, C, 1, 2, W1),
                            lambda b, r: (b, 0, jnp.minimum(r * TH + TH, H2 - 1), 0, 0))
    feat_spec = pl.BlockSpec((1, C, TH, W2), lambda b, r: (b, 0, r, 0))

    return pl.pallas_call(
        _cla_kernel,
        out_shape=jax.ShapeDtypeStruct((B, C, H2, W2), feats2.dtype),
        grid=(B, R),
        in_specs=[smem_spec, smem_spec, smem_spec,
                  top0_spec, top1_spec, main_spec, bot_spec,
                  feat_spec],
        out_specs=feat_spec,
        compiler_params=pltpu.CompilerParams(
            dimension_semantics=("parallel", "parallel"),
            vmem_limit_bytes=vmem_limit_bytes,
        ),
    )(w_in_flat, w_pool_flat, w_attn_flat,
      x1_split, x1_split, x1_pairs, x1_split, feats2)


cla_forward = jax.jit(_cla_forward, static_argnames=("row_tile", "vmem_limit_bytes"))


def cla_reference(feats1, feats2, w_in, w_pool, w_attn):
    """Pure-JAX reference (XLA convs) for correctness checking."""
    prec = lax.Precision.HIGHEST
    dn = ('NCHW', 'OIHW', 'NCHW')
    f1 = lax.conv_general_dilated(feats1, w_in, (2, 2), ((1, 1), (1, 1)),
                                  dimension_numbers=dn, precision=prec)
    max_out = jnp.max(f1, axis=1, keepdims=True)
    avg_out = jnp.mean(f1, axis=1, keepdims=True)
    conv_out = lax.conv_general_dilated(f1, w_pool, (1, 1), ((0, 0), (0, 0)),
                                        dimension_numbers=dn, precision=prec)
    pool = jnp.concatenate([max_out, avg_out, conv_out], axis=1)
    attn = jax.nn.sigmoid(
        lax.conv_general_dilated(pool, w_attn, (1, 1), ((1, 1), (1, 1)),
                                 dimension_numbers=dn, precision=prec))
    return feats2 * attn + feats2


if __name__ == "__main__":
    key = jax.random.PRNGKey(0)
    k1, k2, k3, k4, k5 = jax.random.split(key, 5)

    # Config 1: small shapes implied by the module (single row tile per batch).
    B, C, H1, W1 = 2, 4, 16, 16
    feats1 = jax.random.normal(k1, (B, C, H1, W1), jnp.float32)
    feats2 = jax.random.normal(k2, (B, C, H1 // 2, W1 // 2), jnp.float32)

    # Deterministic synthetic parameters (PyTorch OIHW shapes).
    w_in = 0.1 * jax.random.normal(k3, (C, C, 3, 3), jnp.float32)     # in_conv
    w_pool = 0.1 * jax.random.normal(k4, (1, C, 1, 1), jnp.float32)   # pool_conv
    w_attn = 0.1 * jax.random.normal(k5, (1, 3, 3, 3), jnp.float32)   # attn_conv

    out = jax.block_until_ready(cla_forward(feats1, feats2, w_in, w_pool, w_attn))
    ref = jax.block_until_ready(cla_reference(feats1, feats2, w_in, w_pool, w_attn))
    assert out.shape == feats2.shape and out.dtype == feats2.dtype
    err1 = float(jnp.max(jnp.abs(out - ref)))
    assert jnp.allclose(out, ref, atol=2e-3, rtol=2e-3), f"max abs err = {err1}"

    # Config 2: forces two row tiles per batch (row_tile=8, H2=16) to exercise the
    # cross-tile halo recompute paths of the fused stencil.
    kb1, kb2 = jax.random.split(jax.random.PRNGKey(1), 2)
    f1b = jax.random.normal(kb1, (2, 4, 32, 32), jnp.float32)
    f2b = jax.random.normal(kb2, (2, 4, 16, 16), jnp.float32)
    out2 = jax.block_until_ready(cla_forward(f1b, f2b, w_in, w_pool, w_attn, row_tile=8))
    ref2 = jax.block_until_ready(cla_reference(f1b, f2b, w_in, w_pool, w_attn))
    err2 = float(jnp.max(jnp.abs(out2 - ref2)))
    assert jnp.allclose(out2, ref2, atol=2e-3, rtol=2e-3), f"max abs err (tiled) = {err2}"

    print("KERNEL_OK")
</pallas_src>

<mosaic_0001>
module attributes {stable_mosaic.version = 11 : i64} {
  func.func @_cla_kernel(%arg0: i32, %arg1: i32, %arg2: memref<144xf32, #tpu.memory_space<smem>>, %arg3: memref<4xf32, #tpu.memory_space<smem>>, %arg4: memref<27xf32, #tpu.memory_space<smem>>, %arg5: memref<1x4x1x2x16xf32, #tpu.memory_space<vmem>>, %arg6: memref<1x4x1x2x16xf32, #tpu.memory_space<vmem>>, %arg7: memref<1x4x8x32xf32, #tpu.memory_space<vmem>>, %arg8: memref<1x4x1x2x16xf32, #tpu.memory_space<vmem>>, %arg9: memref<1x4x8x8xf32, #tpu.memory_space<vmem>>, %arg10: memref<1x4x8x8xf32, #tpu.memory_space<vmem>>) attributes {dimension_semantics = [#tpu.dimension_semantics<parallel>, #tpu.dimension_semantics<parallel>], iteration_bounds = array<i64: 2, 1>, scalar_prefetch = 0 : i64, scratch_operands = 0 : i64, tpu.core_type = #tpu.core_type<tc>, window_params = [{transform_indices = @transform_0, window_bounds = array<i64: 144>}, {transform_indices = @transform_1, window_bounds = array<i64: 4>}, {transform_indices = @transform_2, window_bounds = array<i64: 27>}, {transform_indices = @transform_3, window_bounds = array<i64: 1, 4, 1, 2, 16>}, {transform_indices = @transform_4, window_bounds = array<i64: 1, 4, 1, 2, 16>}, {transform_indices = @transform_5, window_bounds = array<i64: 1, 4, 8, 32>}, {transform_indices = @transform_6, window_bounds = array<i64: 1, 4, 1, 2, 16>}, {transform_indices = @transform_7, window_bounds = array<i64: 1, 4, 8, 8>}, {transform_indices = @transform_8, window_bounds = array<i64: 1, 4, 8, 8>}]} {
    %c0_i32 = arith.constant 0 : i32
    %0 = arith.cmpi eq, %arg1, %c0_i32 : i32
    %cst = arith.constant 0.000000e+00 : f32
    %cst_0 = arith.constant 1.000000e+00 : f32
    %1 = arith.select %0, %cst, %cst_0 : f32
    %c0_i32_1 = arith.constant 0 : i32
    %2 = arith.cmpi eq, %arg1, %c0_i32_1 : i32
    %cst_2 = arith.constant 0.000000e+00 : f32
    %cst_3 = arith.constant 1.000000e+00 : f32
    %3 = arith.select %2, %cst_2, %cst_3 : f32
    %c0 = arith.constant 0 : index
    %c0_4 = arith.constant 0 : index
    %c0_5 = arith.constant 0 : index
    %c0_6 = arith.constant 0 : index
    %4 = vector.load %arg7[%c0, %c0_4, %c0_5, %c0_6] : memref<1x4x8x32xf32, #tpu.memory_space<vmem>>, vector<1x1x8x32xf32>
    %5 = vector.shape_cast %4 : vector<1x1x8x32xf32> to vector<8x32xf32>
    %6 = vector.extract_strided_slice %5 {offsets = [0, 0], sizes = [8, 16], strides = [1, 1]} : vector<8x32xf32> to vector<8x16xf32>
    %7 = vector.extract_strided_slice %5 {offsets = [0, 16], sizes = [8, 16], strides = [1, 1]} : vector<8x32xf32> to vector<8x16xf32>
    %c0_7 = arith.constant 0 : index
    %c0_8 = arith.constant 0 : index
    %c0_9 = arith.constant 0 : index
    %c0_10 = arith.constant 0 : index
    %c0_11 = arith.constant 0 : index
    %8 = vector.load %arg5[%c0_7, %c0_8, %c0_9, %c0_10, %c0_11] : memref<1x4x1x2x16xf32, #tpu.memory_space<vmem>>, vector<1x1x1x2x16xf32>
    %9 = vector.shape_cast %8 : vector<1x1x1x2x16xf32> to vector<2x16xf32>
    %c0_12 = arith.constant 0 : index
    %c0_13 = arith.constant 0 : index
    %c0_14 = arith.constant 0 : index
    %c0_15 = arith.constant 0 : index
    %c0_16 = arith.constant 0 : index
    %10 = vector.load %arg6[%c0_12, %c0_13, %c0_14, %c0_15, %c0_16] : memref<1x4x1x2x16xf32, #tpu.memory_space<vmem>>, vector<1x1x1x2x16xf32>
    %11 = vector.shape_cast %10 : vector<1x1x1x2x16xf32> to vector<2x16xf32>
    %c0_17 = arith.constant 0 : index
    %c0_18 = arith.constant 0 : index
    %c0_19 = arith.constant 0 : index
    %c0_20 = arith.constant 0 : index
    %c0_21 = arith.constant 0 : index
    %12 = vector.load %arg8[%c0_17, %c0_18, %c0_19, %c0_20, %c0_21] : memref<1x4x1x2x16xf32, #tpu.memory_space<vmem>>, vector<1x1x1x2x16xf32>
    %13 = vector.shape_cast %12 : vector<1x1x1x2x16xf32> to vector<2x16xf32>
    %14 = vector.extract_strided_slice %9 {offsets = [1, 0], sizes = [1, 16], strides = [1, 1]} : vector<2x16xf32> to vector<1x16xf32>
    %15 = vector.extract_strided_slice %11 {offsets = [0, 0], sizes = [1, 16], strides = [1, 1]} : vector<2x16xf32> to vector<1x16xf32>
    %16 = vector.extract_strided_slice %11 {offsets = [1, 0], sizes = [1, 16], strides = [1, 1]} : vector<2x16xf32> to vector<1x16xf32>
    %17 = vector.extract_strided_slice %13 {offsets = [0, 0], sizes = [1, 16], strides = [1, 1]} : vector<2x16xf32> to vector<1x16xf32>
    %18 = vector.extract_strided_slice %13 {offsets = [1, 0], sizes = [1, 16], strides = [1, 1]} : vector<2x16xf32> to vector<1x16xf32>
    %19 = vector.broadcast %1 : f32 to vector<1x16xf32>
    %20 = arith.mulf %16, %19 : vector<1x16xf32>
    %c1_i32 = arith.constant 1 : i32
    %21 = tpu.dynamic_rotate %7 by %c1_i32 dim 0 : vector<8x16xf32>, i32 -> vector<8x16xf32>
    %22 = tpu.iota {dimensions = array<i32: 0>} : vector<8x16xi32>
    %c0_i32_22 = arith.constant 0 : i32
    %23 = vector.broadcast %c0_i32_22 : i32 to vector<8x16xi32>
    %24 = arith.cmpi eq, %22, %23 : vector<8x16xi32>
    %25 = vector.shape_cast %20 : vector<1x16xf32> to vector<1x16xf32>
    %26 = vector.broadcast %25 : vector<1x16xf32> to vector<8x16xf32>
    %27 = arith.select %24, %26, %21 : vector<8x16xi1>, vector<8x16xf32>
    %28 = vector.extract_strided_slice %7 {offsets = [7, 0], sizes = [1, 16], strides = [1, 1]} : vector<8x16xf32> to vector<1x16xf32>
    %c1_i32_23 = arith.constant 1 : i32
    %29 = tpu.dynamic_rotate %27 by %c1_i32_23 dim 1 : vector<8x16xf32>, i32 -> vector<8x16xf32>
    %30 = tpu.iota {dimensions = array<i32: 1>} : vector<8x16xi32>
    %c1_i32_24 = arith.constant 1 : i32
    %31 = vector.broadcast %c1_i32_24 : i32 to vector<8x16xi32>
    %32 = arith.cmpi sge, %30, %31 : vector<8x16xi32>
    %cst_25 = arith.constant 0.000000e+00 : f32
    %33 = vector.broadcast %cst_25 : f32 to vector<8x16xf32>
    %34 = arith.select %32, %29, %33 : vector<8x16xi1>, vector<8x16xf32>
    %c1_i32_26 = arith.constant 1 : i32
    %35 = tpu.dynamic_rotate %14 by %c1_i32_26 dim 1 : vector<1x16xf32>, i32 -> vector<1x16xf32>
    %36 = tpu.iota {dimensions = array<i32: 1>} : vector<1x16xi32>
    %c1_i32_27 = arith.constant 1 : i32
    %37 = vector.broadcast %c1_i32_27 : i32 to vector<1x16xi32>
    %38 = arith.cmpi sge, %36, %37 : vector<1x16xi32>
    %cst_28 = arith.constant 0.000000e+00 : f32
    %39 = vector.broadcast %cst_28 : f32 to vector<1x16xf32>
    %40 = arith.select %38, %35, %39 : vector<1x16xi1>, vector<1x16xf32>
    %c1_i32_29 = arith.constant 1 : i32
    %41 = tpu.dynamic_rotate %28 by %c1_i32_29 dim 1 : vector<1x16xf32>, i32 -> vector<1x16xf32>
    %cst_30 = arith.constant 0.000000e+00 : f32
    %42 = vector.broadcast %cst_30 : f32 to vector<1x16xf32>
    %43 = arith.select %38, %41, %42 : vector<1x16xi1>, vector<1x16xf32>
    %c0_31 = arith.constant 0 : index
    %44 = memref.load %arg2[%c0_31] : memref<144xf32, #tpu.memory_space<smem>>
    %45 = vector.broadcast %44 : f32 to vector<8x16xf32>
    %46 = arith.mulf %34, %45 : vector<8x16xf32>
    %47 = vector.broadcast %44 : f32 to vector<1x16xf32>
    %48 = arith.mulf %40, %47 : vector<1x16xf32>
    %49 = vector.broadcast %44 : f32 to vector<1x16xf32>
    %50 = arith.mulf %43, %49 : vector<1x16xf32>
    %c36 = arith.constant 36 : index
    %51 = memref.load %arg2[%c36] : memref<144xf32, #tpu.memory_space<smem>>
    %52 = vector.broadcast %51 : f32 to vector<8x16xf32>
    %53 = arith.mulf %34, %52 : vector<8x16xf32>
    %54 = vector.broadcast %51 : f32 to vector<1x16xf32>
    %55 = arith.mulf %40, %54 : vector<1x16xf32>
    %56 = vector.broadcast %51 : f32 to vector<1x16xf32>
    %57 = arith.mulf %43, %56 : vector<1x16xf32>
    %c72 = arith.constant 72 : index
    %58 = memref.load %arg2[%c72] : memref<144xf32, #tpu.memory_space<smem>>
    %59 = vector.broadcast %58 : f32 to vector<8x16xf32>
    %60 = arith.mulf %34, %59 : vector<8x16xf32>
    %61 = vector.broadcast %58 : f32 to vector<1x16xf32>
    %62 = arith.mulf %40, %61 : vector<1x16xf32>
    %63 = vector.broadcast %58 : f32 to vector<1x16xf32>
    %64 = arith.mulf %43, %63 : vector<1x16xf32>
    %c108 = arith.constant 108 : index
    %65 = memref.load %arg2[%c108] : memref<144xf32, #tpu.memory_space<smem>>
    %66 = vector.broadcast %65 : f32 to vector<8x16xf32>
    %67 = arith.mulf %34, %66 : vector<8x16xf32>
    %68 = vector.broadcast %65 : f32 to vector<1x16xf32>
    %69 = arith.mulf %40, %68 : vector<1x16xf32>
    %70 = vector.broadcast %65 : f32 to vector<1x16xf32>
    %71 = arith.mulf %43, %70 : vector<1x16xf32>
    %c1 = arith.constant 1 : index
    %72 = memref.load %arg2[%c1] : memref<144xf32, #tpu.memory_space<smem>>
    %73 = vector.broadcast %72 : f32 to vector<8x16xf32>
    %74 = arith.mulf %27, %73 : vector<8x16xf32>
    %75 = arith.addf %46, %74 : vector<8x16xf32>
    %76 = vector.broadcast %72 : f32 to vector<1x16xf32>
    %77 = arith.mulf %14, %76 : vector<1x16xf32>
    %78 = arith.addf %48, %77 : vector<1x16xf32>
    %79 = vector.broadcast %72 : f32 to vector<1x16xf32>
    %80 = arith.mulf %28, %79 : vector<1x16xf32>
    %81 = arith.addf %50, %80 : vector<1x16xf32>
    %c37 = arith.constant 37 : index
    %82 = memref.load %arg2[%c37] : memref<144xf32, #tpu.memory_space<smem>>
    %83 = vector.broadcast %82 : f32 to vector<8x16xf32>
    %84 = arith.mulf %27, %83 : vector<8x16xf32>
    %85 = arith.addf %53, %84 : vector<8x16xf32>
    %86 = vector.broadcast %82 : f32 to vector<1x16xf32>
    %87 = arith.mulf %14, %86 : vector<1x16xf32>
    %88 = arith.addf %55, %87 : vector<1x16xf32>
    %89 = vector.broadcast %82 : f32 to vector<1x16xf32>
    %90 = arith.mulf %28, %89 : vector<1x16xf32>
    %91 = arith.addf %57, %90 : vector<1x16xf32>
    %c73 = arith.constant 73 : index
    %92 = memref.load %arg2[%c73] : memref<144xf32, #tpu.memory_space<smem>>
    %93 = vector.broadcast %92 : f32 to vector<8x16xf32>
    %94 = arith.mulf %27, %93 : vector<8x16xf32>
    %95 = arith.addf %60, %94 : vector<8x16xf32>
    %96 = vector.broadcast %92 : f32 to vector<1x16xf32>
    %97 = arith.mulf %14, %96 : vector<1x16xf32>
    %98 = arith.addf %62, %97 : vector<1x16xf32>
    %99 = vector.broadcast %92 : f32 to vector<1x16xf32>
    %100 = arith.mulf %28, %99 : vector<1x16xf32>
    %101 = arith.addf %64, %100 : vector<1x16xf32>
    %c109 = arith.constant 109 : index
    %102 = memref.load %arg2[%c109] : memref<144xf32, #tpu.memory_space<smem>>
    %103 = vector.broadcast %102 : f32 to vector<8x16xf32>
    %104 = arith.mulf %27, %103 : vector<8x16xf32>
    %105 = arith.addf %67, %104 : vector<8x16xf32>
    %106 = vector.broadcast %102 : f32 to vector<1x16xf32>
    %107 = arith.mulf %14, %106 : vector<1x16xf32>
    %108 = arith.addf %69, %107 : vector<1x16xf32>
    %109 = vector.broadcast %102 : f32 to vector<1x16xf32>
    %110 = arith.mulf %28, %109 : vector<1x16xf32>
    %111 = arith.addf %71, %110 : vector<1x16xf32>
    %c15_i32 = arith.constant 15 : i32
    %112 = tpu.dynamic_rotate %27 by %c15_i32 dim 1 : vector<8x16xf32>, i32 -> vector<8x16xf32>
    %113 = tpu.iota {dimensions = array<i32: 1>} : vector<8x16xi32>
    %c15_i32_32 = arith.constant 15 : i32
    %114 = vector.broadcast %c15_i32_32 : i32 to vector<8x16xi32>
    %115 = arith.cmpi slt, %113, %114 : vector<8x16xi32>
    %cst_33 = arith.constant 0.000000e+00 : f32
    %116 = vector.broadcast %cst_33 : f32 to vector<8x16xf32>
    %117 = arith.select %115, %112, %116 : vector<8x16xi1>, vector<8x16xf32>
    %c15_i32_34 = arith.constant 15 : i32
    %118 = tpu.dynamic_rotate %14 by %c15_i32_34 dim 1 : vector<1x16xf32>, i32 -> vector<1x16xf32>
    %119 = tpu.iota {dimensions = array<i32: 1>} : vector<1x16xi32>
    %c15_i32_35 = arith.constant 15 : i32
    %120 = vector.broadcast %c15_i32_35 : i32 to vector<1x16xi32>
    %121 = arith.cmpi slt, %119, %120 : vector<1x16xi32>
    %cst_36 = arith.constant 0.000000e+00 : f32
    %122 = vector.broadcast %cst_36 : f32 to vector<1x16xf32>
    %123 = arith.select %121, %118, %122 : vector<1x16xi1>, vector<1x16xf32>
    %c15_i32_37 = arith.constant 15 : i32
    %124 = tpu.dynamic_rotate %28 by %c15_i32_37 dim 1 : vector<1x16xf32>, i32 -> vector<1x16xf32>
    %cst_38 = arith.constant 0.000000e+00 : f32
    %125 = vector.broadcast %cst_38 : f32 to vector<1x16xf32>
    %126 = arith.select %121, %124, %125 : vector<1x16xi1>, vector<1x16xf32>
    %c2 = arith.constant 2 : index
    %127 = memref.load %arg2[%c2] : memref<144xf32, #tpu.memory_space<smem>>
    %128 = vector.broadcast %127 : f32 to vector<8x16xf32>
    %129 = arith.mulf %117, %128 : vector<8x16xf32>
    %130 = arith.addf %75, %129 : vector<8x16xf32>
    %131 = vector.broadcast %127 : f32 to vector<1x16xf32>
    %132 = arith.mulf %123, %131 : vector<1x16xf32>
    %133 = arith.addf %78, %132 : vector<1x16xf32>
    %134 = vector.broadcast %127 : f32 to vector<1x16xf32>
    %135 = arith.mulf %126, %134 : vector<1x16xf32>
    %136 = arith.addf %81, %135 : vector<1x16xf32>
    %c38 = arith.constant 38 : index
    %137 = memref.load %arg2[%c38] : memref<144xf32, #tpu.memory_space<smem>>
    %138 = vector.broadcast %137 : f32 to vector<8x16xf32>
    %139 = arith.mulf %117, %138 : vector<8x16xf32>
    %140 = arith.addf %85, %139 : vector<8x16xf32>
    %141 = vector.broadcast %137 : f32 to vector<1x16xf32>
    %142 = arith.mulf %123, %141 : vector<1x16xf32>
    %143 = arith.addf %88, %142 : vector<1x16xf32>
    %144 = vector.broadcast %137 : f32 to vector<1x16xf32>
    %145 = arith.mulf %126, %144 : vector<1x16xf32>
    %146 = arith.addf %91, %145 : vector<1x16xf32>
    %c74 = arith.constant 74 : index
    %147 = memref.load %arg2[%c74] : memref<144xf32, #tpu.memory_space<smem>>
    %148 = vector.broadcast %147 : f32 to vector<8x16xf32>
    %149 = arith.mulf %117, %148 : vector<8x16xf32>
    %150 = arith.addf %95, %149 : vector<8x16xf32>
    %151 = vector.broadcast %147 : f32 to vector<1x16xf32>
    %152 = arith.mulf %123, %151 : vector<1x16xf32>
    %153 = arith.addf %98, %152 : vector<1x16xf32>
    %154 = vector.broadcast %147 : f32 to vector<1x16xf32>
    %155 = arith.mulf %126, %154 : vector<1x16xf32>
    %156 = arith.addf %101, %155 : vector<1x16xf32>
    %c110 = arith.constant 110 : index
    %157 = memref.load %arg2[%c110] : memref<144xf32, #tpu.memory_space<smem>>
    %158 = vector.broadcast %157 : f32 to vector<8x16xf32>
    %159 = arith.mulf %117, %158 : vector<8x16xf32>
    %160 = arith.addf %105, %159 : vector<8x16xf32>
    %161 = vector.broadcast %157 : f32 to vector<1x16xf32>
    %162 = arith.mulf %123, %161 : vector<1x16xf32>
    %163 = arith.addf %108, %162 : vector<1x16xf32>
    %164 = vector.broadcast %157 : f32 to vector<1x16xf32>
    %165 = arith.mulf %126, %164 : vector<1x16xf32>
    %166 = arith.addf %111, %165 : vector<1x16xf32>
    %c1_i32_39 = arith.constant 1 : i32
    %167 = tpu.dynamic_rotate %6 by %c1_i32_39 dim 1 : vector<8x16xf32>, i32 -> vector<8x16xf32>
    %cst_40 = arith.constant 0.000000e+00 : f32
    %168 = vector.broadcast %cst_40 : f32 to vector<8x16xf32>
    %169 = arith.select %32, %167, %168 : vector<8x16xi1>, vector<8x16xf32>
    %c1_i32_41 = arith.constant 1 : i32
    %170 = tpu.dynamic_rotate %15 by %c1_i32_41 dim 1 : vector<1x16xf32>, i32 -> vector<1x16xf32>
    %cst_42 = arith.constant 0.000000e+00 : f32
    %171 = vector.broadcast %cst_42 : f32 to vector<1x16xf32>
    %172 = arith.select %38, %170, %171 : vector<1x16xi1>, vector<1x16xf32>
    %c1_i32_43 = arith.constant 1 : i32
    %173 = tpu.dynamic_rotate %17 by %c1_i32_43 dim 1 : vector<1x16xf32>, i32 -> vector<1x16xf32>
    %cst_44 = arith.constant 0.000000e+00 : f32
    %174 = vector.broadcast %cst_44 : f32 to vector<1x16xf32>
    %175 = arith.select %38, %173, %174 : vector<1x16xi1>, vector<1x16xf32>
    %c3 = arith.constant 3 : index
    %176 = memref.load %arg2[%c3] : memref<144xf32, #tpu.memory_space<smem>>
    %177 = vector.broadcast %176 : f32 to vector<8x16xf32>
    %178 = arith.mulf %169, %177 : vector<8x16xf32>
    %179 = arith.addf %130, %178 : vector<8x16xf32>
    %180 = vector.broadcast %176 : f32 to vector<1x16xf32>
    %181 = arith.mulf %172, %180 : vector<1x16xf32>
    %182 = arith.addf %133, %181 : vector<1x16xf32>
    %183 = vector.broadcast %176 : f32 to vector<1x16xf32>
    %184 = arith.mulf %175, %183 : vector<1x16xf32>
    %185 = arith.addf %136, %184 : vector<1x16xf32>
    %c39 = arith.constant 39 : index
    %186 = memref.load %arg2[%c39] : memref<144xf32, #tpu.memory_space<smem>>
    %187 = vector.broadcast %186 : f32 to vector<8x16xf32>
    %188 = arith.mulf %169, %187 : vector<8x16xf32>
    %189 = arith.addf %140, %188 : vector<8x16xf32>
    %190 = vector.broadcast %186 : f32 to vector<1x16xf32>
    %191 = arith.mulf %172, %190 : vector<1x16xf32>
    %192 = arith.addf %143, %191 : vector<1x16xf32>
    %193 = vector.broadcast %186 : f32 to vector<1x16xf32>
    %194 = arith.mulf %175, %193 : vector<1x16xf32>
    %195 = arith.addf %146, %194 : vector<1x16xf32>
    %c75 = arith.constant 75 : index
    %196 = memref.load %arg2[%c75] : memref<144xf32, #tpu.memory_space<smem>>
    %197 = vector.broadcast %196 : f32 to vector<8x16xf32>
    %198 = arith.mulf %169, %197 : vector<8x16xf32>
    %199 = arith.addf %150, %198 : vector<8x16xf32>
    %200 = vector.broadcast %196 : f32 to vector<1x16xf32>
    %201 = arith.mulf %172, %200 : vector<1x16xf32>
    %202 = arith.addf %153, %201 : vector<1x16xf32>
    %203 = vector.broadcast %196 : f32 to vector<1x16xf32>
    %204 = arith.mulf %175, %203 : vector<1x16xf32>
    %205 = arith.addf %156, %204 : vector<1x16xf32>
    %c111 = arith.constant 111 : index
    %206 = memref.load %arg2[%c111] : memref<144xf32, #tpu.memory_space<smem>>
    %207 = vector.broadcast %206 : f32 to vector<8x16xf32>
    %208 = arith.mulf %169, %207 : vector<8x16xf32>
    %209 = arith.addf %160, %208 : vector<8x16xf32>
    %210 = vector.broadcast %206 : f32 to vector<1x16xf32>
    %211 = arith.mulf %172, %210 : vector<1x16xf32>
    %212 = arith.addf %163, %211 : vector<1x16xf32>
    %213 = vector.broadcast %206 : f32 to vector<1x16xf32>
    %214 = arith.mulf %175, %213 : vector<1x16xf32>
    %215 = arith.addf %166, %214 : vector<1x16xf32>
    %c4 = arith.constant 4 : index
    %216 = memref.load %arg2[%c4] : memref<144xf32, #tpu.memory_space<smem>>
    %217 = vector.broadcast %216 : f32 to vector<8x16xf32>
    %218 = arith.mulf %6, %217 : vector<8x16xf32>
    %219 = arith.addf %179, %218 : vector<8x16xf32>
    %220 = vector.broadcast %216 : f32 to vector<1x16xf32>
    %221 = arith.mulf %15, %220 : vector<1x16xf32>
    %222 = arith.addf %182, %221 : vector<1x16xf32>
    %223 = vector.broadcast %216 : f32 to vector<1x16xf32>
    %224 = arith.mulf %17, %223 : vector<1x16xf32>
    %225 = arith.addf %185, %224 : vector<1x16xf32>
    %c40 = arith.constant 40 : index
    %226 = memref.load %arg2[%c40] : memref<144xf32, #tpu.memory_space<smem>>
    %227 = vector.broadcast %226 : f32 to vector<8x16xf32>
    %228 = arith.mulf %6, %227 : vector<8x16xf32>
    %229 = arith.addf %189, %228 : vector<8x16xf32>
    %230 = vector.broadcast %226 : f32 to vector<1x16xf32>
    %231 = arith.mulf %15, %230 : vector<1x16xf32>
    %232 = arith.addf %192, %231 : vector<1x16xf32>
    %233 = vector.broadcast %226 : f32 to vector<1x16xf32>
    %234 = arith.mulf %17, %233 : vector<1x16xf32>
    %235 = arith.addf %195, %234 : vector<1x16xf32>
    %c76 = arith.constant 76 : index
    %236 = memref.load %arg2[%c76] : memref<144xf32, #tpu.memory_space<smem>>
    %237 = vector.broadcast %236 : f32 to vector<8x16xf32>
    %238 = arith.mulf %6, %237 : vector<8x16xf32>
    %239 = arith.addf %199, %238 : vector<8x16xf32>
    %240 = vector.broadcast %236 : f32 to vector<1x16xf32>
    %241 = arith.mulf %15, %240 : vector<1x16xf32>
    %242 = arith.addf %202, %241 : vector<1x16xf32>
    %243 = vector.broadcast %236 : f32 to vector<1x16xf32>
    %244 = arith.mulf %17, %243 : vector<1x16xf32>
    %245 = arith.addf %205, %244 : vector<1x16xf32>
    %c112 = arith.constant 112 : index
    %246 = memref.load %arg2[%c112] : memref<144xf32, #tpu.memory_space<smem>>
    %247 = vector.broadcast %246 : f32 to vector<8x16xf32>
    %248 = arith.mulf %6, %247 : vector<8x16xf32>
    %249 = arith.addf %209, %248 : vector<8x16xf32>
    %250 = vector.broadcast %246 : f32 to vector<1x16xf32>
    %251 = arith.mulf %15, %250 : vector<1x16xf32>
    %252 = arith.addf %212, %251 : vector<1x16xf32>
    %253 = vector.broadcast %246 : f32 to vector<1x16xf32>
    %254 = arith.mulf %17, %253 : vector<1x16xf32>
    %255 = arith.addf %215, %254 : vector<1x16xf32>
    %c15_i32_45 = arith.constant 15 : i32
    %256 = tpu.dynamic_rotate %6 by %c15_i32_45 dim 1 : vector<8x16xf32>, i32 -> vector<8x16xf32>
    %cst_46 = arith.constant 0.000000e+00 : f32
    %257 = vector.broadcast %cst_46 : f32 to vector<8x16xf32>
    %258 = arith.select %115, %256, %257 : vector<8x16xi1>, vector<8x16xf32>
    %c15_i32_47 = arith.constant 15 : i32
    %259 = tpu.dynamic_rotate %15 by %c15_i32_47 dim 1 : vector<1x16xf32>, i32 -> vector<1x16xf32>
    %cst_48 = arith.constant 0.000000e+00 : f32
    %260 = vector.broadcast %cst_48 : f32 to vector<1x16xf32>
    %261 = arith.select %121, %259, %260 : vector<1x16xi1>, vector<1x16xf32>
    %c15_i32_49 = arith.constant 15 : i32
    %262 = tpu.dynamic_rotate %17 by %c15_i32_49 dim 1 : vector<1x16xf32>, i32 -> vector<1x16xf32>
    %cst_50 = arith.constant 0.000000e+00 : f32
    %263 = vector.broadcast %cst_50 : f32 to vector<1x16xf32>
    %264 = arith.select %121, %262, %263 : vector<1x16xi1>, vector<1x16xf32>
    %c5 = arith.constant 5 : index
    %265 = memref.load %arg2[%c5] : memref<144xf32, #tpu.memory_space<smem>>
    %266 = vector.broadcast %265 : f32 to vector<8x16xf32>
    %267 = arith.mulf %258, %266 : vector<8x16xf32>
    %268 = arith.addf %219, %267 : vector<8x16xf32>
    %269 = vector.broadcast %265 : f32 to vector<1x16xf32>
    %270 = arith.mulf %261, %269 : vector<1x16xf32>
    %271 = arith.addf %222, %270 : vector<1x16xf32>
    %272 = vector.broadcast %265 : f32 to vector<1x16xf32>
    %273 = arith.mulf %264, %272 : vector<1x16xf32>
    %274 = arith.addf %225, %273 : vector<1x16xf32>
    %c41 = arith.constant 41 : index
    %275 = memref.load %arg2[%c41] : memref<144xf32, #tpu.memory_space<smem>>
    %276 = vector.broadcast %275 : f32 to vector<8x16xf32>
    %277 = arith.mulf %258, %276 : vector<8x16xf32>
    %278 = arith.addf %229, %277 : vector<8x16xf32>
    %279 = vector.broadcast %275 : f32 to vector<1x16xf32>
    %280 = arith.mulf %261, %279 : vector<1x16xf32>
    %281 = arith.addf %232, %280 : vector<1x16xf32>
    %282 = vector.broadcast %275 : f32 to vector<1x16xf32>
    %283 = arith.mulf %264, %282 : vector<1x16xf32>
    %284 = arith.addf %235, %283 : vector<1x16xf32>
    %c77 = arith.constant 77 : index
    %285 = memref.load %arg2[%c77] : memref<144xf32, #tpu.memory_space<smem>>
    %286 = vector.broadcast %285 : f32 to vector<8x16xf32>
    %287 = arith.mulf %258, %286 : vector<8x16xf32>
    %288 = arith.addf %239, %287 : vector<8x16xf32>
    %289 = vector.broadcast %285 : f32 to vector<1x16xf32>
    %290 = arith.mulf %261, %289 : vector<1x16xf32>
    %291 = arith.addf %242, %290 : vector<1x16xf32>
    %292 = vector.broadcast %285 : f32 to vector<1x16xf32>
    %293 = arith.mulf %264, %292 : vector<1x16xf32>
    %294 = arith.addf %245, %293 : vector<1x16xf32>
    %c113 = arith.constant 113 : index
    %295 = memref.load %arg2[%c113] : memref<144xf32, #tpu.memory_space<smem>>
    %296 = vector.broadcast %295 : f32 to vector<8x16xf32>
    %297 = arith.mulf %258, %296 : vector<8x16xf32>
    %298 = arith.addf %249, %297 : vector<8x16xf32>
    %299 = vector.broadcast %295 : f32 to vector<1x16xf32>
    %300 = arith.mulf %261, %299 : vector<1x16xf32>
    %301 = arith.addf %252, %300 : vector<1x16xf32>
    %302 = vector.broadcast %295 : f32 to vector<1x16xf32>
    %303 = arith.mulf %264, %302 : vector<1x16xf32>
    %304 = arith.addf %255, %303 : vector<1x16xf32>
    %c1_i32_51 = arith.constant 1 : i32
    %305 = tpu.dynamic_rotate %7 by %c1_i32_51 dim 1 : vector<8x16xf32>, i32 -> vector<8x16xf32>
    %cst_52 = arith.constant 0.000000e+00 : f32
    %306 = vector.broadcast %cst_52 : f32 to vector<8x16xf32>
    %307 = arith.select %32, %305, %306 : vector<8x16xi1>, vector<8x16xf32>
    %c1_i32_53 = arith.constant 1 : i32
    %308 = tpu.dynamic_rotate %16 by %c1_i32_53 dim 1 : vector<1x16xf32>, i32 -> vector<1x16xf32>
    %cst_54 = arith.constant 0.000000e+00 : f32
    %309 = vector.broadcast %cst_54 : f32 to vector<1x16xf32>
    %310 = arith.select %38, %308, %309 : vector<1x16xi1>, vector<1x16xf32>
    %c1_i32_55 = arith.constant 1 : i32
    %311 = tpu.dynamic_rotate %18 by %c1_i32_55 dim 1 : vector<1x16xf32>, i32 -> vector<1x16xf32>
    %cst_56 = arith.constant 0.000000e+00 : f32
    %312 = vector.broadcast %cst_56 : f32 to vector<1x16xf32>
    %313 = arith.select %38, %311, %312 : vector<1x16xi1>, vector<1x16xf32>
    %c6 = arith.constant 6 : index
    %314 = memref.load %arg2[%c6] : memref<144xf32, #tpu.memory_space<smem>>
    %315 = vector.broadcast %314 : f32 to vector<8x16xf32>
    %316 = arith.mulf %307, %315 : vector<8x16xf32>
    %317 = arith.addf %268, %316 : vector<8x16xf32>
    %318 = vector.broadcast %314 : f32 to vector<1x16xf32>
    %319 = arith.mulf %310, %318 : vector<1x16xf32>
    %320 = arith.addf %271, %319 : vector<1x16xf32>
    %321 = vector.broadcast %314 : f32 to vector<1x16xf32>
    %322 = arith.mulf %313, %321 : vector<1x16xf32>
    %323 = arith.addf %274, %322 : vector<1x16xf32>
    %c42 = arith.constant 42 : index
    %324 = memref.load %arg2[%c42] : memref<144xf32, #tpu.memory_space<smem>>
    %325 = vector.broadcast %324 : f32 to vector<8x16xf32>
    %326 = arith.mulf %307, %325 : vector<8x16xf32>
    %327 = arith.addf %278, %326 : vector<8x16xf32>
    %328 = vector.broadcast %324 : f32 to vector<1x16xf32>
    %329 = arith.mulf %310, %328 : vector<1x16xf32>
    %330 = arith.addf %281, %329 : vector<1x16xf32>
    %331 = vector.broadcast %324 : f32 to vector<1x16xf32>
    %332 = arith.mulf %313, %331 : vector<1x16xf32>
    %333 = arith.addf %284, %332 : vector<1x16xf32>
    %c78 = arith.constant 78 : index
    %334 = memref.load %arg2[%c78] : memref<144xf32, #tpu.memory_space<smem>>
    %335 = vector.broadcast %334 : f32 to vector<8x16xf32>
    %336 = arith.mulf %307, %335 : vector<8x16xf32>
    %337 = arith.addf %288, %336 : vector<8x16xf32>
    %338 = vector.broadcast %334 : f32 to vector<1x16xf32>
    %339 = arith.mulf %310, %338 : vector<1x16xf32>
    %340 = arith.addf %291, %339 : vector<1x16xf32>
    %341 = vector.broadcast %334 : f32 to vector<1x16xf32>
    %342 = arith.mulf %313, %341 : vector<1x16xf32>
    %343 = arith.addf %294, %342 : vector<1x16xf32>
    %c114 = arith.constant 114 : index
    %344 = memref.load %arg2[%c114] : memref<144xf32, #tpu.memory_space<smem>>
    %345 = vector.broadcast %344 : f32 to vector<8x16xf32>
    %346 = arith.mulf %307, %345 : vector<8x16xf32>
    %347 = arith.addf %298, %346 : vector<8x16xf32>
    %348 = vector.broadcast %344 : f32 to vector<1x16xf32>
    %349 = arith.mulf %310, %348 : vector<1x16xf32>
    %350 = arith.addf %301, %349 : vector<1x16xf32>
    %351 = vector.broadcast %344 : f32 to vector<1x16xf32>
    %352 = arith.mulf %313, %351 : vector<1x16xf32>
    %353 = arith.addf %304, %352 : vector<1x16xf32>
    %c7 = arith.constant 7 : index
    %354 = memref.load %arg2[%c7] : memref<144xf32, #tpu.memory_space<smem>>
    %355 = vector.broadcast %354 : f32 to vector<8x16xf32>
    %356 = arith.mulf %7, %355 : vector<8x16xf32>
    %357 = arith.addf %317, %356 : vector<8x16xf32>
    %358 = vector.broadcast %354 : f32 to vector<1x16xf32>
    %359 = arith.mulf %16, %358 : vector<1x16xf32>
    %360 = arith.addf %320, %359 : vector<1x16xf32>
    %361 = vector.broadcast %354 : f32 to vector<1x16xf32>
    %362 = arith.mulf %18, %361 : vector<1x16xf32>
    %363 = arith.addf %323, %362 : vector<1x16xf32>
    %c43 = arith.constant 43 : index
    %364 = memref.load %arg2[%c43] : memref<144xf32, #tpu.memory_space<smem>>
    %365 = vector.broadcast %364 : f32 to vector<8x16xf32>
    %366 = arith.mulf %7, %365 : vector<8x16xf32>
    %367 = arith.addf %327, %366 : vector<8x16xf32>
    %368 = vector.broadcast %364 : f32 to vector<1x16xf32>
    %369 = arith.mulf %16, %368 : vector<1x16xf32>
    %370 = arith.addf %330, %369 : vector<1x16xf32>
    %371 = vector.broadcast %364 : f32 to vector<1x16xf32>
    %372 = arith.mulf %18, %371 : vector<1x16xf32>
    %373 = arith.addf %333, %372 : vector<1x16xf32>
    %c79 = arith.constant 79 : index
    %374 = memref.load %arg2[%c79] : memref<144xf32, #tpu.memory_space<smem>>
    %375 = vector.broadcast %374 : f32 to vector<8x16xf32>
    %376 = arith.mulf %7, %375 : vector<8x16xf32>
    %377 = arith.addf %337, %376 : vector<8x16xf32>
    %378 = vector.broadcast %374 : f32 to vector<1x16xf32>
    %379 = arith.mulf %16, %378 : vector<1x16xf32>
    %380 = arith.addf %340, %379 : vector<1x16xf32>
    %381 = vector.broadcast %374 : f32 to vector<1x16xf32>
    %382 = arith.mulf %18, %381 : vector<1x16xf32>
    %383 = arith.addf %343, %382 : vector<1x16xf32>
    %c115 = arith.constant 115 : index
    %384 = memref.load %arg2[%c115] : memref<144xf32, #tpu.memory_space<smem>>
    %385 = vector.broadcast %384 : f32 to vector<8x16xf32>
    %386 = arith.mulf %7, %385 : vector<8x16xf32>
    %387 = arith.addf %347, %386 : vector<8x16xf32>
    %388 = vector.broadcast %384 : f32 to vector<1x16xf32>
    %389 = arith.mulf %16, %388 : vector<1x16xf32>
    %390 = arith.addf %350, %389 : vector<1x16xf32>
    %391 = vector.broadcast %384 : f32 to vector<1x16xf32>
    %392 = arith.mulf %18, %391 : vector<1x16xf32>
    %393 = arith.addf %353, %392 : vector<1x16xf32>
    %c15_i32_57 = arith.constant 15 : i32
    %394 = tpu.dynamic_rotate %7 by %c15_i32_57 dim 1 : vector<8x16xf32>, i32 -> vector<8x16xf32>
    %cst_58 = arith.constant 0.000000e+00 : f32
    %395 = vector.broadcast %cst_58 : f32 to vector<8x16xf32>
    %396 = arith.select %115, %394, %395 : vector<8x16xi1>, vector<8x16xf32>
    %c15_i32_59 = arith.constant 15 : i32
    %397 = tpu.dynamic_rotate %16 by %c15_i32_59 dim 1 : vector<1x16xf32>, i32 -> vector<1x16xf32>
    %cst_60 = arith.constant 0.000000e+00 : f32
    %398 = vector.broadcast %cst_60 : f32 to vector<1x16xf32>
    %399 = arith.select %121, %397, %398 : vector<1x16xi1>, vector<1x16xf32>
    %c15_i32_61 = arith.constant 15 : i32
    %400 = tpu.dynamic_rotate %18 by %c15_i32_61 dim 1 : vector<1x16xf32>, i32 -> vector<1x16xf32>
    %cst_62 = arith.constant 0.000000e+00 : f32
    %401 = vector.broadcast %cst_62 : f32 to vector<1x16xf32>
    %402 = arith.select %121, %400, %401 : vector<1x16xi1>, vector<1x16xf32>
    %c8 = arith.constant 8 : index
    %403 = memref.load %arg2[%c8] : memref<144xf32, #tpu.memory_space<smem>>
    %404 = vector.broadcast %403 : f32 to vector<8x16xf32>
    %405 = arith.mulf %396, %404 : vector<8x16xf32>
    %406 = arith.addf %357, %405 : vector<8x16xf32>
    %407 = vector.broadcast %403 : f32 to vector<1x16xf32>
    %408 = arith.mulf %399, %407 : vector<1x16xf32>
    %409 = arith.addf %360, %408 : vector<1x16xf32>
    %410 = vector.broadcast %403 : f32 to vector<1x16xf32>
    %411 = arith.mulf %402, %410 : vector<1x16xf32>
    %412 = arith.addf %363, %411 : vector<1x16xf32>
    %c44 = arith.constant 44 : index
    %413 = memref.load %arg2[%c44] : memref<144xf32, #tpu.memory_space<smem>>
    %414 = vector.broadcast %413 : f32 to vector<8x16xf32>
    %415 = arith.mulf %396, %414 : vector<8x16xf32>
    %416 = arith.addf %367, %415 : vector<8x16xf32>
    %417 = vector.broadcast %413 : f32 to vector<1x16xf32>
    %418 = arith.mulf %399, %417 : vector<1x16xf32>
    %419 = arith.addf %370, %418 : vector<1x16xf32>
    %420 = vector.broadcast %413 : f32 to vector<1x16xf32>
    %421 = arith.mulf %402, %420 : vector<1x16xf32>
    %422 = arith.addf %373, %421 : vector<1x16xf32>
    %c80 = arith.constant 80 : index
    %423 = memref.load %arg2[%c80] : memref<144xf32, #tpu.memory_space<smem>>
    %424 = vector.broadcast %423 : f32 to vector<8x16xf32>
    %425 = arith.mulf %396, %424 : vector<8x16xf32>
    %426 = arith.addf %377, %425 : vector<8x16xf32>
    %427 = vector.broadcast %423 : f32 to vector<1x16xf32>
    %428 = arith.mulf %399, %427 : vector<1x16xf32>
    %429 = arith.addf %380, %428 : vector<1x16xf32>
    %430 = vector.broadcast %423 : f32 to vector<1x16xf32>
    %431 = arith.mulf %402, %430 : vector<1x16xf32>
    %432 = arith.addf %383, %431 : vector<1x16xf32>
    %c116 = arith.constant 116 : index
    %433 = memref.load %arg2[%c116] : memref<144xf32, #tpu.memory_space<smem>>
    %434 = vector.broadcast %433 : f32 to vector<8x16xf32>
    %435 = arith.mulf %396, %434 : vector<8x16xf32>
    %436 = arith.addf %387, %435 : vector<8x16xf32>
    %437 = vector.broadcast %433 : f32 to vector<1x16xf32>
    %438 = arith.mulf %399, %437 : vector<1x16xf32>
    %439 = arith.addf %390, %438 : vector<1x16xf32>
    %440 = vector.broadcast %433 : f32 to vector<1x16xf32>
    %441 = arith.mulf %402, %440 : vector<1x16xf32>
    %442 = arith.addf %393, %441 : vector<1x16xf32>
    %c0_63 = arith.constant 0 : index
    %c1_64 = arith.constant 1 : index
    %c0_65 = arith.constant 0 : index
    %c0_66 = arith.constant 0 : index
    %443 = vector.load %arg7[%c0_63, %c1_64, %c0_65, %c0_66] : memref<1x4x8x32xf32, #tpu.memory_space<vmem>>, vector<1x1x8x32xf32>
    %444 = vector.shape_cast %443 : vector<1x1x8x32xf32> to vector<8x32xf32>
    %445 = vector.extract_strided_slice %444 {offsets = [0, 0], sizes = [8, 16], strides = [1, 1]} : vector<8x32xf32> to vector<8x16xf32>
    %446 = vector.extract_strided_slice %444 {offsets = [0, 16], sizes = [8, 16], strides = [1, 1]} : vector<8x32xf32> to vector<8x16xf32>
    %c0_67 = arith.constant 0 : index
    %c1_68 = arith.constant 1 : index
    %c0_69 = arith.constant 0 : index
    %c0_70 = arith.constant 0 : index
    %c0_71 = arith.constant 0 : index
    %447 = vector.load %arg5[%c0_67, %c1_68, %c0_69, %c0_70, %c0_71] : memref<1x4x1x2x16xf32, #tpu.memory_space<vmem>>, vector<1x1x1x2x16xf32>
    %448 = vector.shape_cast %447 : vector<1x1x1x2x16xf32> to vector<2x16xf32>
    %c0_72 = arith.constant 0 : index
    %c1_73 = arith.constant 1 : index
    %c0_74 = arith.constant 0 : index
    %c0_75 = arith.constant 0 : index
    %c0_76 = arith.constant 0 : index
    %449 = vector.load %arg6[%c0_72, %c1_73, %c0_74, %c0_75, %c0_76] : memref<1x4x1x2x16xf32, #tpu.memory_space<vmem>>, vector<1x1x1x2x16xf32>
    %450 = vector.shape_cast %449 : vector<1x1x1x2x16xf32> to vector<2x16xf32>
    %c0_77 = arith.constant 0 : index
    %c1_78 = arith.constant 1 : index
    %c0_79 = arith.constant 0 : index
    %c0_80 = arith.constant 0 : index
    %c0_81 = arith.constant 0 : index
    %451 = vector.load %arg8[%c0_77, %c1_78, %c0_79, %c0_80, %c0_81] : memref<1x4x1x2x16xf32, #tpu.memory_space<vmem>>, vector<1x1x1x2x16xf32>
    %452 = vector.shape_cast %451 : vector<1x1x1x2x16xf32> to vector<2x16xf32>
    %453 = vector.extract_strided_slice %448 {offsets = [1, 0], sizes = [1, 16], strides = [1, 1]} : vector<2x16xf32> to vector<1x16xf32>
    %454 = vector.extract_strided_slice %450 {offsets = [0, 0], sizes = [1, 16], strides = [1, 1]} : vector<2x16xf32> to vector<1x16xf32>
    %455 = vector.extract_strided_slice %450 {offsets = [1, 0], sizes = [1, 16], strides = [1, 1]} : vector<2x16xf32> to vector<1x16xf32>
    %456 = vector.extract_strided_slice %452 {offsets = [0, 0], sizes = [1, 16], strides = [1, 1]} : vector<2x16xf32> to vector<1x16xf32>
    %457 = vector.extract_strided_slice %452 {offsets = [1, 0], sizes = [1, 16], strides = [1, 1]} : vector<2x16xf32> to vector<1x16xf32>
    %458 = vector.broadcast %1 : f32 to vector<1x16xf32>
    %459 = arith.mulf %455, %458 : vector<1x16xf32>
    %c1_i32_82 = arith.constant 1 : i32
    %460 = tpu.dynamic_rotate %446 by %c1_i32_82 dim 0 : vector<8x16xf32>, i32 -> vector<8x16xf32>
    %461 = vector.shape_cast %459 : vector<1x16xf32> to vector<1x16xf32>
    %462 = vector.broadcast %461 : vector<1x16xf32> to vector<8x16xf32>
    %463 = arith.select %24, %462, %460 : vector<8x16xi1>, vector<8x16xf32>
    %464 = vector.extract_strided_slice %446 {offsets = [7, 0], sizes = [1, 16], strides = [1, 1]} : vector<8x16xf32> to vector<1x16xf32>
    %c1_i32_83 = arith.constant 1 : i32
    %465 = tpu.dynamic_rotate %463 by %c1_i32_83 dim 1 : vector<8x16xf32>, i32 -> vector<8x16xf32>
    %cst_84 = arith.constant 0.000000e+00 : f32
    %466 = vector.broadcast %cst_84 : f32 to vector<8x16xf32>
    %467 = arith.select %32, %465, %466 : vector<8x16xi1>, vector<8x16xf32>
    %c1_i32_85 = arith.constant 1 : i32
    %468 = tpu.dynamic_rotate %453 by %c1_i32_85 dim 1 : vector<1x16xf32>, i32 -> vector<1x16xf32>
    %cst_86 = arith.constant 0.000000e+00 : f32
    %469 = vector.broadcast %cst_86 : f32 to vector<1x16xf32>
    %470 = arith.select %38, %468, %469 : vector<1x16xi1>, vector<1x16xf32>
    %c1_i32_87 = arith.constant 1 : i32
    %471 = tpu.dynamic_rotate %464 by %c1_i32_87 dim 1 : vector<1x16xf32>, i32 -> vector<1x16xf32>
    %cst_88 = arith.constant 0.000000e+00 : f32
    %472 = vector.broadcast %cst_88 : f32 to vector<1x16xf32>
    %473 = arith.select %38, %471, %472 : vector<1x16xi1>, vector<1x16xf32>
    %c9 = arith.constant 9 : index
    %474 = memref.load %arg2[%c9] : memref<144xf32, #tpu.memory_space<smem>>
    %475 = vector.broadcast %474 : f32 to vector<8x16xf32>
    %476 = arith.mulf %467, %475 : vector<8x16xf32>
    %477 = arith.addf %406, %476 : vector<8x16xf32>
    %478 = vector.broadcast %474 : f32 to vector<1x16xf32>
    %479 = arith.mulf %470, %478 : vector<1x16xf32>
    %480 = arith.addf %409, %479 : vector<1x16xf32>
    %481 = vector.broadcast %474 : f32 to vector<1x16xf32>
    %482 = arith.mulf %473, %481 : vector<1x16xf32>
    %483 = arith.addf %412, %482 : vector<1x16xf32>
    %c45 = arith.constant 45 : index
    %484 = memref.load %arg2[%c45] : memref<144xf32, #tpu.memory_space<smem>>
    %485 = vector.broadcast %484 : f32 to vector<8x16xf32>
    %486 = arith.mulf %467, %485 : vector<8x16xf32>
    %487 = arith.addf %416, %486 : vector<8x16xf32>
    %488 = vector.broadcast %484 : f32 to vector<1x16xf32>
    %489 = arith.mulf %470, %488 : vector<1x16xf32>
    %490 = arith.addf %419, %489 : vector<1x16xf32>
    %491 = vector.broadcast %484 : f32 to vector<1x16xf32>
    %492 = arith.mulf %473, %491 : vector<1x16xf32>
    %493 = arith.addf %422, %492 : vector<1x16xf32>
    %c81 = arith.constant 81 : index
    %494 = memref.load %arg2[%c81] : memref<144xf32, #tpu.memory_space<smem>>
    %495 = vector.broadcast %494 : f32 to vector<8x16xf32>
    %496 = arith.mulf %467, %495 : vector<8x16xf32>
    %497 = arith.addf %426, %496 : vector<8x16xf32>
    %498 = vector.broadcast %494 : f32 to vector<1x16xf32>
    %499 = arith.mulf %470, %498 : vector<1x16xf32>
    %500 = arith.addf %429, %499 : vector<1x16xf32>
    %501 = vector.broadcast %494 : f32 to vector<1x16xf32>
    %502 = arith.mulf %473, %501 : vector<1x16xf32>
    %503 = arith.addf %432, %502 : vector<1x16xf32>
    %c117 = arith.constant 117 : index
    %504 = memref.load %arg2[%c117] : memref<144xf32, #tpu.memory_space<smem>>
    %505 = vector.broadcast %504 : f32 to vector<8x16xf32>
    %506 = arith.mulf %467, %505 : vector<8x16xf32>
    %507 = arith.addf %436, %506 : vector<8x16xf32>
    %508 = vector.broadcast %504 : f32 to vector<1x16xf32>
    %509 = arith.mulf %470, %508 : vector<1x16xf32>
    %510 = arith.addf %439, %509 : vector<1x16xf32>
    %511 = vector.broadcast %504 : f32 to vector<1x16xf32>
    %512 = arith.mulf %473, %511 : vector<1x16xf32>
    %513 = arith.addf %442, %512 : vector<1x16xf32>
    %c10 = arith.constant 10 : index
    %514 = memref.load %arg2[%c10] : memref<144xf32, #tpu.memory_space<smem>>
    %515 = vector.broadcast %514 : f32 to vector<8x16xf32>
    %516 = arith.mulf %463, %515 : vector<8x16xf32>
    %517 = arith.addf %477, %516 : vector<8x16xf32>
    %518 = vector.broadcast %514 : f32 to vector<1x16xf32>
    %519 = arith.mulf %453, %518 : vector<1x16xf32>
    %520 = arith.addf %480, %519 : vector<1x16xf32>
    %521 = vector.broadcast %514 : f32 to vector<1x16xf32>
    %522 = arith.mulf %464, %521 : vector<1x16xf32>
    %523 = arith.addf %483, %522 : vector<1x16xf32>
    %c46 = arith.constant 46 : index
    %524 = memref.load %arg2[%c46] : memref<144xf32, #tpu.memory_space<smem>>
    %525 = vector.broadcast %524 : f32 to vector<8x16xf32>
    %526 = arith.mulf %463, %525 : vector<8x16xf32>
    %527 = arith.addf %487, %526 : vector<8x16xf32>
    %528 = vector.broadcast %524 : f32 to vector<1x16xf32>
    %529 = arith.mulf %453, %528 : vector<1x16xf32>
    %530 = arith.addf %490, %529 : vector<1x16xf32>
    %531 = vector.broadcast %524 : f32 to vector<1x16xf32>
    %532 = arith.mulf %464, %531 : vector<1x16xf32>
    %533 = arith.addf %493, %532 : vector<1x16xf32>
    %c82 = arith.constant 82 : index
    %534 = memref.load %arg2[%c82] : memref<144xf32, #tpu.memory_space<smem>>
    %535 = vector.broadcast %534 : f32 to vector<8x16xf32>
    %536 = arith.mulf %463, %535 : vector<8x16xf32>
    %537 = arith.addf %497, %536 : vector<8x16xf32>
    %538 = vector.broadcast %534 : f32 to vector<1x16xf32>
    %539 = arith.mulf %453, %538 : vector<1x16xf32>
    %540 = arith.addf %500, %539 : vector<1x16xf32>
    %541 = vector.broadcast %534 : f32 to vector<1x16xf32>
    %542 = arith.mulf %464, %541 : vector<1x16xf32>
    %543 = arith.addf %503, %542 : vector<1x16xf32>
    %c118 = arith.constant 118 : index
    %544 = memref.load %arg2[%c118] : memref<144xf32, #tpu.memory_space<smem>>
    %545 = vector.broadcast %544 : f32 to vector<8x16xf32>
    %546 = arith.mulf %463, %545 : vector<8x16xf32>
    %547 = arith.addf %507, %546 : vector<8x16xf32>
    %548 = vector.broadcast %544 : f32 to vector<1x16xf32>
    %549 = arith.mulf %453, %548 : vector<1x16xf32>
    %550 = arith.addf %510, %549 : vector<1x16xf32>
    %551 = vector.broadcast %544 : f32 to vector<1x16xf32>
    %552 = arith.mulf %464, %551 : vector<1x16xf32>
    %553 = arith.addf %513, %552 : vector<1x16xf32>
    %c15_i32_89 = arith.constant 15 : i32
    %554 = tpu.dynamic_rotate %463 by %c15_i32_89 dim 1 : vector<8x16xf32>, i32 -> vector<8x16xf32>
    %cst_90 = arith.constant 0.000000e+00 : f32
    %555 = vector.broadcast %cst_90 : f32 to vector<8x16xf32>
    %556 = arith.select %115, %554, %555 : vector<8x16xi1>, vector<8x16xf32>
    %c15_i32_91 = arith.constant 15 : i32
    %557 = tpu.dynamic_rotate %453 by %c15_i32_91 dim 1 : vector<1x16xf32>, i32 -> vector<1x16xf32>
    %cst_92 = arith.constant 0.000000e+00 : f32
    %558 = vector.broadcast %cst_92 : f32 to vector<1x16xf32>
    %559 = arith.select %121, %557, %558 : vector<1x16xi1>, vector<1x16xf32>
    %c15_i32_93 = arith.constant 15 : i32
    %560 = tpu.dynamic_rotate %464 by %c15_i32_93 dim 1 : vector<1x16xf32>, i32 -> vector<1x16xf32>
    %cst_94 = arith.constant 0.000000e+00 : f32
    %561 = vector.broadcast %cst_94 : f32 to vector<1x16xf32>
    %562 = arith.select %121, %560, %561 : vector<1x16xi1>, vector<1x16xf32>
    %c11 = arith.constant 11 : index
    %563 = memref.load %arg2[%c11] : memref<144xf32, #tpu.memory_space<smem>>
    %564 = vector.broadcast %563 : f32 to vector<8x16xf32>
    %565 = arith.mulf %556, %564 : vector<8x16xf32>
    %566 = arith.addf %517, %565 : vector<8x16xf32>
    %567 = vector.broadcast %563 : f32 to vector<1x16xf32>
    %568 = arith.mulf %559, %567 : vector<1x16xf32>
    %569 = arith.addf %520, %568 : vector<1x16xf32>
    %570 = vector.broadcast %563 : f32 to vector<1x16xf32>
    %571 = arith.mulf %562, %570 : vector<1x16xf32>
    %572 = arith.addf %523, %571 : vector<1x16xf32>
    %c47 = arith.constant 47 : index
    %573 = memref.load %arg2[%c47] : memref<144xf32, #tpu.memory_space<smem>>
    %574 = vector.broadcast %573 : f32 to vector<8x16xf32>
    %575 = arith.mulf %556, %574 : vector<8x16xf32>
    %576 = arith.addf %527, %575 : vector<8x16xf32>
    %577 = vector.broadcast %573 : f32 to vector<1x16xf32>
    %578 = arith.mulf %559, %577 : vector<1x16xf32>
    %579 = arith.addf %530, %578 : vector<1x16xf32>
    %580 = vector.broadcast %573 : f32 to vector<1x16xf32>
    %581 = arith.mulf %562, %580 : vector<1x16xf32>
    %582 = arith.addf %533, %581 : vector<1x16xf32>
    %c83 = arith.constant 83 : index
    %583 = memref.load %arg2[%c83] : memref<144xf32, #tpu.memory_space<smem>>
    %584 = vector.broadcast %583 : f32 to vector<8x16xf32>
    %585 = arith.mulf %556, %584 : vector<8x16xf32>
    %586 = arith.addf %537, %585 : vector<8x16xf32>
    %587 = vector.broadcast %583 : f32 to vector<1x16xf32>
    %588 = arith.mulf %559, %587 : vector<1x16xf32>
    %589 = arith.addf %540, %588 : vector<1x16xf32>
    %590 = vector.broadcast %583 : f32 to vector<1x16xf32>
    %591 = arith.mulf %562, %590 : vector<1x16xf32>
    %592 = arith.addf %543, %591 : vector<1x16xf32>
    %c119 = arith.constant 119 : index
    %593 = memref.load %arg2[%c119] : memref<144xf32, #tpu.memory_space<smem>>
    %594 = vector.broadcast %593 : f32 to vector<8x16xf32>
    %595 = arith.mulf %556, %594 : vector<8x16xf32>
    %596 = arith.addf %547, %595 : vector<8x16xf32>
    %597 = vector.broadcast %593 : f32 to vector<1x16xf32>
    %598 = arith.mulf %559, %597 : vector<1x16xf32>
    %599 = arith.addf %550, %598 : vector<1x16xf32>
    %600 = vector.broadcast %593 : f32 to vector<1x16xf32>
    %601 = arith.mulf %562, %600 : vector<1x16xf32>
    %602 = arith.addf %553, %601 : vector<1x16xf32>
    %c1_i32_95 = arith.constant 1 : i32
    %603 = tpu.dynamic_rotate %445 by %c1_i32_95 dim 1 : vector<8x16xf32>, i32 -> vector<8x16xf32>
    %cst_96 = arith.constant 0.000000e+00 : f32
    %604 = vector.broadcast %cst_96 : f32 to vector<8x16xf32>
    %605 = arith.select %32, %603, %604 : vector<8x16xi1>, vector<8x16xf32>
    %c1_i32_97 = arith.constant 1 : i32
    %606 = tpu.dynamic_rotate %454 by %c1_i32_97 dim 1 : vector<1x16xf32>, i32 -> vector<1x16xf32>
    %cst_98 = arith.constant 0.000000e+00 : f32
    %607 = vector.broadcast %cst_98 : f32 to vector<1x16xf32>
    %608 = arith.select %38, %606, %607 : vector<1x16xi1>, vector<1x16xf32>
    %c1_i32_99 = arith.constant 1 : i32
    %609 = tpu.dynamic_rotate %456 by %c1_i32_99 dim 1 : vector<1x16xf32>, i32 -> vector<1x16xf32>
    %cst_100 = arith.constant 0.000000e+00 : f32
    %610 = vector.broadcast %cst_100 : f32 to vector<1x16xf32>
    %611 = arith.select %38, %609, %610 : vector<1x16xi1>, vector<1x16xf32>
    %c12 = arith.constant 12 : index
    %612 = memref.load %arg2[%c12] : memref<144xf32, #tpu.memory_space<smem>>
    %613 = vector.broadcast %612 : f32 to vector<8x16xf32>
    %614 = arith.mulf %605, %613 : vector<8x16xf32>
    %615 = arith.addf %566, %614 : vector<8x16xf32>
    %616 = vector.broadcast %612 : f32 to vector<1x16xf32>
    %617 = arith.mulf %608, %616 : vector<1x16xf32>
    %618 = arith.addf %569, %617 : vector<1x16xf32>
    %619 = vector.broadcast %612 : f32 to vector<1x16xf32>
    %620 = arith.mulf %611, %619 : vector<1x16xf32>
    %621 = arith.addf %572, %620 : vector<1x16xf32>
    %c48 = arith.constant 48 : index
    %622 = memref.load %arg2[%c48] : memref<144xf32, #tpu.memory_space<smem>>
    %623 = vector.broadcast %622 : f32 to vector<8x16xf32>
    %624 = arith.mulf %605, %623 : vector<8x16xf32>
    %625 = arith.addf %576, %624 : vector<8x16xf32>
    %626 = vector.broadcast %622 : f32 to vector<1x16xf32>
    %627 = arith.mulf %608, %626 : vector<1x16xf32>
    %628 = arith.addf %579, %627 : vector<1x16xf32>
    %629 = vector.broadcast %622 : f32 to vector<1x16xf32>
    %630 = arith.mulf %611, %629 : vector<1x16xf32>
    %631 = arith.addf %582, %630 : vector<1x16xf32>
    %c84 = arith.constant 84 : index
    %632 = memref.load %arg2[%c84] : memref<144xf32, #tpu.memory_space<smem>>
    %633 = vector.broadcast %632 : f32 to vector<8x16xf32>
    %634 = arith.mulf %605, %633 : vector<8x16xf32>
    %635 = arith.addf %586, %634 : vector<8x16xf32>
    %636 = vector.broadcast %632 : f32 to vector<1x16xf32>
    %637 = arith.mulf %608, %636 : vector<1x16xf32>
    %638 = arith.addf %589, %637 : vector<1x16xf32>
    %639 = vector.broadcast %632 : f32 to vector<1x16xf32>
    %640 = arith.mulf %611, %639 : vector<1x16xf32>
    %641 = arith.addf %592, %640 : vector<1x16xf32>
    %c120 = arith.constant 120 : index
    %642 = memref.load %arg2[%c120] : memref<144xf32, #tpu.memory_space<smem>>
    %643 = vector.broadcast %642 : f32 to vector<8x16xf32>
    %644 = arith.mulf %605, %643 : vector<8x16xf32>
    %645 = arith.addf %596, %644 : vector<8x16xf32>
    %646 = vector.broadcast %642 : f32 to vector<1x16xf32>
    %647 = arith.mulf %608, %646 : vector<1x16xf32>
    %648 = arith.addf %599, %647 : vector<1x16xf32>
    %649 = vector.broadcast %642 : f32 to vector<1x16xf32>
    %650 = arith.mulf %611, %649 : vector<1x16xf32>
    %651 = arith.addf %602, %650 : vector<1x16xf32>
    %c13 = arith.constant 13 : index
    %652 = memref.load %arg2[%c13] : memref<144xf32, #tpu.memory_space<smem>>
    %653 = vector.broadcast %652 : f32 to vector<8x16xf32>
    %654 = arith.mulf %445, %653 : vector<8x16xf32>
    %655 = arith.addf %615, %654 : vector<8x16xf32>
    %656 = vector.broadcast %652 : f32 to vector<1x16xf32>
    %657 = arith.mulf %454, %656 : vector<1x16xf32>
    %658 = arith.addf %618, %657 : vector<1x16xf32>
    %659 = vector.broadcast %652 : f32 to vector<1x16xf32>
    %660 = arith.mulf %456, %659 : vector<1x16xf32>
    %661 = arith.addf %621, %660 : vector<1x16xf32>
    %c49 = arith.constant 49 : index
    %662 = memref.load %arg2[%c49] : memref<144xf32, #tpu.memory_space<smem>>
    %663 = vector.broadcast %662 : f32 to vector<8x16xf32>
    %664 = arith.mulf %445, %663 : vector<8x16xf32>
    %665 = arith.addf %625, %664 : vector<8x16xf32>
    %666 = vector.broadcast %662 : f32 to vector<1x16xf32>
    %667 = arith.mulf %454, %666 : vector<1x16xf32>
    %668 = arith.addf %628, %667 : vector<1x16xf32>
    %669 = vector.broadcast %662 : f32 to vector<1x16xf32>
    %670 = arith.mulf %456, %669 : vector<1x16xf32>
    %671 = arith.addf %631, %670 : vector<1x16xf32>
    %c85 = arith.constant 85 : index
    %672 = memref.load %arg2[%c85] : memref<144xf32, #tpu.memory_space<smem>>
    %673 = vector.broadcast %672 : f32 to vector<8x16xf32>
    %674 = arith.mulf %445, %673 : vector<8x16xf32>
    %675 = arith.addf %635, %674 : vector<8x16xf32>
    %676 = vector.broadcast %672 : f32 to vector<1x16xf32>
    %677 = arith.mulf %454, %676 : vector<1x16xf32>
    %678 = arith.addf %638, %677 : vector<1x16xf32>
    %679 = vector.broadcast %672 : f32 to vector<1x16xf32>
    %680 = arith.mulf %456, %679 : vector<1x16xf32>
    %681 = arith.addf %641, %680 : vector<1x16xf32>
    %c121 = arith.constant 121 : index
    %682 = memref.load %arg2[%c121] : memref<144xf32, #tpu.memory_space<smem>>
    %683 = vector.broadcast %682 : f32 to vector<8x16xf32>
    %684 = arith.mulf %445, %683 : vector<8x16xf32>
    %685 = arith.addf %645, %684 : vector<8x16xf32>
    %686 = vector.broadcast %682 : f32 to vector<1x16xf32>
    %687 = arith.mulf %454, %686 : vector<1x16xf32>
    %688 = arith.addf %648, %687 : vector<1x16xf32>
    %689 = vector.broadcast %682 : f32 to vector<1x16xf32>
    %690 = arith.mulf %456, %689 : vector<1x16xf32>
    %691 = arith.addf %651, %690 : vector<1x16xf32>
    %c15_i32_101 = arith.constant 15 : i32
    %692 = tpu.dynamic_rotate %445 by %c15_i32_101 dim 1 : vector<8x16xf32>, i32 -> vector<8x16xf32>
    %cst_102 = arith.constant 0.000000e+00 : f32
    %693 = vector.broadcast %cst_102 : f32 to vector<8x16xf32>
    %694 = arith.select %115, %692, %693 : vector<8x16xi1>, vector<8x16xf32>
    %c15_i32_103 = arith.constant 15 : i32
    %695 = tpu.dynamic_rotate %454 by %c15_i32_103 dim 1 : vector<1x16xf32>, i32 -> vector<1x16xf32>
    %cst_104 = arith.constant 0.000000e+00 : f32
    %696 = vector.broadcast %cst_104 : f32 to vector<1x16xf32>
    %697 = arith.select %121, %695, %696 : vector<1x16xi1>, vector<1x16xf32>
    %c15_i32_105 = arith.constant 15 : i32
    %698 = tpu.dynamic_rotate %456 by %c15_i32_105 dim 1 : vector<1x16xf32>, i32 -> vector<1x16xf32>
    %cst_106 = arith.constant 0.000000e+00 : f32
    %699 = vector.broadcast %cst_106 : f32 to vector<1x16xf32>
    %700 = arith.select %121, %698, %699 : vector<1x16xi1>, vector<1x16xf32>
    %c14 = arith.constant 14 : index
    %701 = memref.load %arg2[%c14] : memref<144xf32, #tpu.memory_space<smem>>
    %702 = vector.broadcast %701 : f32 to vector<8x16xf32>
    %703 = arith.mulf %694, %702 : vector<8x16xf32>
    %704 = arith.addf %655, %703 : vector<8x16xf32>
    %705 = vector.broadcast %701 : f32 to vector<1x16xf32>
    %706 = arith.mulf %697, %705 : vector<1x16xf32>
    %707 = arith.addf %658, %706 : vector<1x16xf32>
    %708 = vector.broadcast %701 : f32 to vector<1x16xf32>
    %709 = arith.mulf %700, %708 : vector<1x16xf32>
    %710 = arith.addf %661, %709 : vector<1x16xf32>
    %c50 = arith.constant 50 : index
    %711 = memref.load %arg2[%c50] : memref<144xf32, #tpu.memory_space<smem>>
    %712 = vector.broadcast %711 : f32 to vector<8x16xf32>
    %713 = arith.mulf %694, %712 : vector<8x16xf32>
    %714 = arith.addf %665, %713 : vector<8x16xf32>
    %715 = vector.broadcast %711 : f32 to vector<1x16xf32>
    %716 = arith.mulf %697, %715 : vector<1x16xf32>
    %717 = arith.addf %668, %716 : vector<1x16xf32>
    %718 = vector.broadcast %711 : f32 to vector<1x16xf32>
    %719 = arith.mulf %700, %718 : vector<1x16xf32>
    %720 = arith.addf %671, %719 : vector<1x16xf32>
    %c86 = arith.constant 86 : index
    %721 = memref.load %arg2[%c86] : memref<144xf32, #tpu.memory_space<smem>>
    %722 = vector.broadcast %721 : f32 to vector<8x16xf32>
    %723 = arith.mulf %694, %722 : vector<8x16xf32>
    %724 = arith.addf %675, %723 : vector<8x16xf32>
    %725 = vector.broadcast %721 : f32 to vector<1x16xf32>
    %726 = arith.mulf %697, %725 : vector<1x16xf32>
    %727 = arith.addf %678, %726 : vector<1x16xf32>
    %728 = vector.broadcast %721 : f32 to vector<1x16xf32>
    %729 = arith.mulf %700, %728 : vector<1x16xf32>
    %730 = arith.addf %681, %729 : vector<1x16xf32>
    %c122 = arith.constant 122 : index
    %731 = memref.load %arg2[%c122] : memref<144xf32, #tpu.memory_space<smem>>
    %732 = vector.broadcast %731 : f32 to vector<8x16xf32>
    %733 = arith.mulf %694, %732 : vector<8x16xf32>
    %734 = arith.addf %685, %733 : vector<8x16xf32>
    %735 = vector.broadcast %731 : f32 to vector<1x16xf32>
    %736 = arith.mulf %697, %735 : vector<1x16xf32>
    %737 = arith.addf %688, %736 : vector<1x16xf32>
    %738 = vector.broadcast %731 : f32 to vector<1x16xf32>
    %739 = arith.mulf %700, %738 : vector<1x16xf32>
    %740 = arith.addf %691, %739 : vector<1x16xf32>
    %c1_i32_107 = arith.constant 1 : i32
    %741 = tpu.dynamic_rotate %446 by %c1_i32_107 dim 1 : vector<8x16xf32>, i32 -> vector<8x16xf32>
    %cst_108 = arith.constant 0.000000e+00 : f32
    %742 = vector.broadcast %cst_108 : f32 to vector<8x16xf32>
    %743 = arith.select %32, %741, %742 : vector<8x16xi1>, vector<8x16xf32>
    %c1_i32_109 = arith.constant 1 : i32
    %744 = tpu.dynamic_rotate %455 by %c1_i32_109 dim 1 : vector<1x16xf32>, i32 -> vector<1x16xf32>
    %cst_110 = arith.constant 0.000000e+00 : f32
    %745 = vector.broadcast %cst_110 : f32 to vector<1x16xf32>
    %746 = arith.select %38, %744, %745 : vector<1x16xi1>, vector<1x16xf32>
    %c1_i32_111 = arith.constant 1 : i32
    %747 = tpu.dynamic_rotate %457 by %c1_i32_111 dim 1 : vector<1x16xf32>, i32 -> vector<1x16xf32>
    %cst_112 = arith.constant 0.000000e+00 : f32
    %748 = vector.broadcast %cst_112 : f32 to vector<1x16xf32>
    %749 = arith.select %38, %747, %748 : vector<1x16xi1>, vector<1x16xf32>
    %c15 = arith.constant 15 : index
    %750 = memref.load %arg2[%c15] : memref<144xf32, #tpu.memory_space<smem>>
    %751 = vector.broadcast %750 : f32 to vector<8x16xf32>
    %752 = arith.mulf %743, %751 : vector<8x16xf32>
    %753 = arith.addf %704, %752 : vector<8x16xf32>
    %754 = vector.broadcast %750 : f32 to vector<1x16xf32>
    %755 = arith.mulf %746, %754 : vector<1x16xf32>
    %756 = arith.addf %707, %755 : vector<1x16xf32>
    %757 = vector.broadcast %750 : f32 to vector<1x16xf32>
    %758 = arith.mulf %749, %757 : vector<1x16xf32>
    %759 = arith.addf %710, %758 : vector<1x16xf32>
    %c51 = arith.constant 51 : index
    %760 = memref.load %arg2[%c51] : memref<144xf32, #tpu.memory_space<smem>>
    %761 = vector.broadcast %760 : f32 to vector<8x16xf32>
    %762 = arith.mulf %743, %761 : vector<8x16xf32>
    %763 = arith.addf %714, %762 : vector<8x16xf32>
    %764 = vector.broadcast %760 : f32 to vector<1x16xf32>
    %765 = arith.mulf %746, %764 : vector<1x16xf32>
    %766 = arith.addf %717, %765 : vector<1x16xf32>
    %767 = vector.broadcast %760 : f32 to vector<1x16xf32>
    %768 = arith.mulf %749, %767 : vector<1x16xf32>
    %769 = arith.addf %720, %768 : vector<1x16xf32>
    %c87 = arith.constant 87 : index
    %770 = memref.load %arg2[%c87] : memref<144xf32, #tpu.memory_space<smem>>
    %771 = vector.broadcast %770 : f32 to vector<8x16xf32>
    %772 = arith.mulf %743, %771 : vector<8x16xf32>
    %773 = arith.addf %724, %772 : vector<8x16xf32>
    %774 = vector.broadcast %770 : f32 to vector<1x16xf32>
    %775 = arith.mulf %746, %774 : vector<1x16xf32>
    %776 = arith.addf %727, %775 : vector<1x16xf32>
    %777 = vector.broadcast %770 : f32 to vector<1x16xf32>
    %778 = arith.mulf %749, %777 : vector<1x16xf32>
    %779 = arith.addf %730, %778 : vector<1x16xf32>
    %c123 = arith.constant 123 : index
    %780 = memref.load %arg2[%c123] : memref<144xf32, #tpu.memory_space<smem>>
    %781 = vector.broadcast %780 : f32 to vector<8x16xf32>
    %782 = arith.mulf %743, %781 : vector<8x16xf32>
    %783 = arith.addf %734, %782 : vector<8x16xf32>
    %784 = vector.broadcast %780 : f32 to vector<1x16xf32>
    %785 = arith.mulf %746, %784 : vector<1x16xf32>
    %786 = arith.addf %737, %785 : vector<1x16xf32>
    %787 = vector.broadcast %780 : f32 to vector<1x16xf32>
    %788 = arith.mulf %749, %787 : vector<1x16xf32>
    %789 = arith.addf %740, %788 : vector<1x16xf32>
    %c16 = arith.constant 16 : index
    %790 = memref.load %arg2[%c16] : memref<144xf32, #tpu.memory_space<smem>>
    %791 = vector.broadcast %790 : f32 to vector<8x16xf32>
    %792 = arith.mulf %446, %791 : vector<8x16xf32>
    %793 = arith.addf %753, %792 : vector<8x16xf32>
    %794 = vector.broadcast %790 : f32 to vector<1x16xf32>
    %795 = arith.mulf %455, %794 : vector<1x16xf32>
    %796 = arith.addf %756, %795 : vector<1x16xf32>
    %797 = vector.broadcast %790 : f32 to vector<1x16xf32>
    %798 = arith.mulf %457, %797 : vector<1x16xf32>
    %799 = arith.addf %759, %798 : vector<1x16xf32>
    %c52 = arith.constant 52 : index
    %800 = memref.load %arg2[%c52] : memref<144xf32, #tpu.memory_space<smem>>
    %801 = vector.broadcast %800 : f32 to vector<8x16xf32>
    %802 = arith.mulf %446, %801 : vector<8x16xf32>
    %803 = arith.addf %763, %802 : vector<8x16xf32>
    %804 = vector.broadcast %800 : f32 to vector<1x16xf32>
    %805 = arith.mulf %455, %804 : vector<1x16xf32>
    %806 = arith.addf %766, %805 : vector<1x16xf32>
    %807 = vector.broadcast %800 : f32 to vector<1x16xf32>
    %808 = arith.mulf %457, %807 : vector<1x16xf32>
    %809 = arith.addf %769, %808 : vector<1x16xf32>
    %c88 = arith.constant 88 : index
    %810 = memref.load %arg2[%c88] : memref<144xf32, #tpu.memory_space<smem>>
    %811 = vector.broadcast %810 : f32 to vector<8x16xf32>
    %812 = arith.mulf %446, %811 : vector<8x16xf32>
    %813 = arith.addf %773, %812 : vector<8x16xf32>
    %814 = vector.broadcast %810 : f32 to vector<1x16xf32>
    %815 = arith.mulf %455, %814 : vector<1x16xf32>
    %816 = arith.addf %776, %815 : vector<1x16xf32>
    %817 = vector.broadcast %810 : f32 to vector<1x16xf32>
    %818 = arith.mulf %457, %817 : vector<1x16xf32>
    %819 = arith.addf %779, %818 : vector<1x16xf32>
    %c124 = arith.constant 124 : index
    %820 = memref.load %arg2[%c124] : memref<144xf32, #tpu.memory_space<smem>>
    %821 = vector.broadcast %820 : f32 to vector<8x16xf32>
    %822 = arith.mulf %446, %821 : vector<8x16xf32>
    %823 = arith.addf %783, %822 : vector<8x16xf32>
    %824 = vector.broadcast %820 : f32 to vector<1x16xf32>
    %825 = arith.mulf %455, %824 : vector<1x16xf32>
    %826 = arith.addf %786, %825 : vector<1x16xf32>
    %827 = vector.broadcast %820 : f32 to vector<1x16xf32>
    %828 = arith.mulf %457, %827 : vector<1x16xf32>
    %829 = arith.addf %789, %828 : vector<1x16xf32>
    %c15_i32_113 = arith.constant 15 : i32
    %830 = tpu.dynamic_rotate %446 by %c15_i32_113 dim 1 : vector<8x16xf32>, i32 -> vector<8x16xf32>
    %cst_114 = arith.constant 0.000000e+00 : f32
    %831 = vector.broadcast %cst_114 : f32 to vector<8x16xf32>
    %832 = arith.select %115, %830, %831 : vector<8x16xi1>, vector<8x16xf32>
    %c15_i32_115 = arith.constant 15 : i32
    %833 = tpu.dynamic_rotate %455 by %c15_i32_115 dim 1 : vector<1x16xf32>, i32 -> vector<1x16xf32>
    %cst_116 = arith.constant 0.000000e+00 : f32
    %834 = vector.broadcast %cst_116 : f32 to vector<1x16xf32>
    %835 = arith.select %121, %833, %834 : vector<1x16xi1>, vector<1x16xf32>
    %c15_i32_117 = arith.constant 15 : i32
    %836 = tpu.dynamic_rotate %457 by %c15_i32_117 dim 1 : vector<1x16xf32>, i32 -> vector<1x16xf32>
    %cst_118 = arith.constant 0.000000e+00 : f32
    %837 = vector.broadcast %cst_118 : f32 to vector<1x16xf32>
    %838 = arith.select %121, %836, %837 : vector<1x16xi1>, vector<1x16xf32>
    %c17 = arith.constant 17 : index
    %839 = memref.load %arg2[%c17] : memref<144xf32, #tpu.memory_space<smem>>
    %840 = vector.broadcast %839 : f32 to vector<8x16xf32>
    %841 = arith.mulf %832, %840 : vector<8x16xf32>
    %842 = arith.addf %793, %841 : vector<8x16xf32>
    %843 = vector.broadcast %839 : f32 to vector<1x16xf32>
    %844 = arith.mulf %835, %843 : vector<1x16xf32>
    %845 = arith.addf %796, %844 : vector<1x16xf32>
    %846 = vector.broadcast %839 : f32 to vector<1x16xf32>
    %847 = arith.mulf %838, %846 : vector<1x16xf32>
    %848 = arith.addf %799, %847 : vector<1x16xf32>
    %c53 = arith.constant 53 : index
    %849 = memref.load %arg2[%c53] : memref<144xf32, #tpu.memory_space<smem>>
    %850 = vector.broadcast %849 : f32 to vector<8x16xf32>
    %851 = arith.mulf %832, %850 : vector<8x16xf32>
    %852 = arith.addf %803, %851 : vector<8x16xf32>
    %853 = vector.broadcast %849 : f32 to vector<1x16xf32>
    %854 = arith.mulf %835, %853 : vector<1x16xf32>
    %855 = arith.addf %806, %854 : vector<1x16xf32>
    %856 = vector.broadcast %849 : f32 to vector<1x16xf32>
    %857 = arith.mulf %838, %856 : vector<1x16xf32>
    %858 = arith.addf %809, %857 : vector<1x16xf32>
    %c89 = arith.constant 89 : index
    %859 = memref.load %arg2[%c89] : memref<144xf32, #tpu.memory_space<smem>>
    %860 = vector.broadcast %859 : f32 to vector<8x16xf32>
    %861 = arith.mulf %832, %860 : vector<8x16xf32>
    %862 = arith.addf %813, %861 : vector<8x16xf32>
    %863 = vector.broadcast %859 : f32 to vector<1x16xf32>
    %864 = arith.mulf %835, %863 : vector<1x16xf32>
    %865 = arith.addf %816, %864 : vector<1x16xf32>
    %866 = vector.broadcast %859 : f32 to vector<1x16xf32>
    %867 = arith.mulf %838, %866 : vector<1x16xf32>
    %868 = arith.addf %819, %867 : vector<1x16xf32>
    %c125 = arith.constant 125 : index
    %869 = memref.load %arg2[%c125] : memref<144xf32, #tpu.memory_space<smem>>
    %870 = vector.broadcast %869 : f32 to vector<8x16xf32>
    %871 = arith.mulf %832, %870 : vector<8x16xf32>
    %872 = arith.addf %823, %871 : vector<8x16xf32>
    %873 = vector.broadcast %869 : f32 to vector<1x16xf32>
    %874 = arith.mulf %835, %873 : vector<1x16xf32>
    %875 = arith.addf %826, %874 : vector<1x16xf32>
    %876 = vector.broadcast %869 : f32 to vector<1x16xf32>
    %877 = arith.mulf %838, %876 : vector<1x16xf32>
    %878 = arith.addf %829, %877 : vector<1x16xf32>
    %c0_119 = arith.constant 0 : index
    %c2_120 = arith.constant 2 : index
    %c0_121 = arith.constant 0 : index
    %c0_122 = arith.constant 0 : index
    %879 = vector.load %arg7[%c0_119, %c2_120, %c0_121, %c0_122] : memref<1x4x8x32xf32, #tpu.memory_space<vmem>>, vector<1x1x8x32xf32>
    %880 = vector.shape_cast %879 : vector<1x1x8x32xf32> to vector<8x32xf32>
    %881 = vector.extract_strided_slice %880 {offsets = [0, 0], sizes = [8, 16], strides = [1, 1]} : vector<8x32xf32> to vector<8x16xf32>
    %882 = vector.extract_strided_slice %880 {offsets = [0, 16], sizes = [8, 16], strides = [1, 1]} : vector<8x32xf32> to vector<8x16xf32>
    %c0_123 = arith.constant 0 : index
    %c2_124 = arith.constant 2 : index
    %c0_125 = arith.constant 0 : index
    %c0_126 = arith.constant 0 : index
    %c0_127 = arith.constant 0 : index
    %883 = vector.load %arg5[%c0_123, %c2_124, %c0_125, %c0_126, %c0_127] : memref<1x4x1x2x16xf32, #tpu.memory_space<vmem>>, vector<1x1x1x2x16xf32>
    %884 = vector.shape_cast %883 : vector<1x1x1x2x16xf32> to vector<2x16xf32>
    %c0_128 = arith.constant 0 : index
    %c2_129 = arith.constant 2 : index
    %c0_130 = arith.constant 0 : index
    %c0_131 = arith.constant 0 : index
    %c0_132 = arith.constant 0 : index
    %885 = vector.load %arg6[%c0_128, %c2_129, %c0_130, %c0_131, %c0_132] : memref<1x4x1x2x16xf32, #tpu.memory_space<vmem>>, vector<1x1x1x2x16xf32>
    %886 = vector.shape_cast %885 : vector<1x1x1x2x16xf32> to vector<2x16xf32>
    %c0_133 = arith.constant 0 : index
    %c2_134 = arith.constant 2 : index
    %c0_135 = arith.constant 0 : index
    %c0_136 = arith.constant 0 : index
    %c0_137 = arith.constant 0 : index
    %887 = vector.load %arg8[%c0_133, %c2_134, %c0_135, %c0_136, %c0_137] : memref<1x4x1x2x16xf32, #tpu.memory_space<vmem>>, vector<1x1x1x2x16xf32>
    %888 = vector.shape_cast %887 : vector<1x1x1x2x16xf32> to vector<2x16xf32>
    %889 = vector.extract_strided_slice %884 {offsets = [1, 0], sizes = [1, 16], strides = [1, 1]} : vector<2x16xf32> to vector<1x16xf32>
    %890 = vector.extract_strided_slice %886 {offsets = [0, 0], sizes = [1, 16], strides = [1, 1]} : vector<2x16xf32> to vector<1x16xf32>
    %891 = vector.extract_strided_slice %886 {offsets = [1, 0], sizes = [1, 16], strides = [1, 1]} : vector<2x16xf32> to vector<1x16xf32>
    %892 = vector.extract_strided_slice %888 {offsets = [0, 0], sizes = [1, 16], strides = [1, 1]} : vector<2x16xf32> to vector<1x16xf32>
    %893 = vector.extract_strided_slice %888 {offsets = [1, 0], sizes = [1, 16], strides = [1, 1]} : vector<2x16xf32> to vector<1x16xf32>
    %894 = vector.broadcast %1 : f32 to vector<1x16xf32>
    %895 = arith.mulf %891, %894 : vector<1x16xf32>
    %c1_i32_138 = arith.constant 1 : i32
    %896 = tpu.dynamic_rotate %882 by %c1_i32_138 dim 0 : vector<8x16xf32>, i32 -> vector<8x16xf32>
    %897 = vector.shape_cast %895 : vector<1x16xf32> to vector<1x16xf32>
    %898 = vector.broadcast %897 : vector<1x16xf32> to vector<8x16xf32>
    %899 = arith.select %24, %898, %896 : vector<8x16xi1>, vector<8x16xf32>
    %900 = vector.extract_strided_slice %882 {offsets = [7, 0], sizes = [1, 16], strides = [1, 1]} : vector<8x16xf32> to vector<1x16xf32>
    %c1_i32_139 = arith.constant 1 : i32
    %901 = tpu.dynamic_rotate %899 by %c1_i32_139 dim 1 : vector<8x16xf32>, i32 -> vector<8x16xf32>
    %cst_140 = arith.constant 0.000000e+00 : f32
    %902 = vector.broadcast %cst_140 : f32 to vector<8x16xf32>
    %903 = arith.select %32, %901, %902 : vector<8x16xi1>, vector<8x16xf32>
    %c1_i32_141 = arith.constant 1 : i32
    %904 = tpu.dynamic_rotate %889 by %c1_i32_141 dim 1 : vector<1x16xf32>, i32 -> vector<1x16xf32>
    %cst_142 = arith.constant 0.000000e+00 : f32
    %905 = vector.broadcast %cst_142 : f32 to vector<1x16xf32>
    %906 = arith.select %38, %904, %905 : vector<1x16xi1>, vector<1x16xf32>
    %c1_i32_143 = arith.constant 1 : i32
    %907 = tpu.dynamic_rotate %900 by %c1_i32_143 dim 1 : vector<1x16xf32>, i32 -> vector<1x16xf32>
    %cst_144 = arith.constant 0.000000e+00 : f32
    %908 = vector.broadcast %cst_144 : f32 to vector<1x16xf32>
    %909 = arith.select %38, %907, %908 : vector<1x16xi1>, vector<1x16xf32>
    %c18 = arith.constant 18 : index
    %910 = memref.load %arg2[%c18] : memref<144xf32, #tpu.memory_space<smem>>
    %911 = vector.broadcast %910 : f32 to vector<8x16xf32>
    %912 = arith.mulf %903, %911 : vector<8x16xf32>
    %913 = arith.addf %842, %912 : vector<8x16xf32>
    %914 = vector.broadcast %910 : f32 to vector<1x16xf32>
    %915 = arith.mulf %906, %914 : vector<1x16xf32>
    %916 = arith.addf %845, %915 : vector<1x16xf32>
    %917 = vector.broadcast %910 : f32 to vector<1x16xf32>
    %918 = arith.mulf %909, %917 : vector<1x16xf32>
    %919 = arith.addf %848, %918 : vector<1x16xf32>
    %c54 = arith.constant 54 : index
    %920 = memref.load %arg2[%c54] : memref<144xf32, #tpu.memory_space<smem>>
    %921 = vector.broadcast %920 : f32 to vector<8x16xf32>
    %922 = arith.mulf %903, %921 : vector<8x16xf32>
    %923 = arith.addf %852, %922 : vector<8x16xf32>
    %924 = vector.broadcast %920 : f32 to vector<1x16xf32>
    %925 = arith.mulf %906, %924 : vector<1x16xf32>
    %926 = arith.addf %855, %925 : vector<1x16xf32>
    %927 = vector.broadcast %920 : f32 to vector<1x16xf32>
    %928 = arith.mulf %909, %927 : vector<1x16xf32>
    %929 = arith.addf %858, %928 : vector<1x16xf32>
    %c90 = arith.constant 90 : index
    %930 = memref.load %arg2[%c90] : memref<144xf32, #tpu.memory_space<smem>>
    %931 = vector.broadcast %930 : f32 to vector<8x16xf32>
    %932 = arith.mulf %903, %931 : vector<8x16xf32>
    %933 = arith.addf %862, %932 : vector<8x16xf32>
    %934 = vector.broadcast %930 : f32 to vector<1x16xf32>
    %935 = arith.mulf %906, %934 : vector<1x16xf32>
    %936 = arith.addf %865, %935 : vector<1x16xf32>
    %937 = vector.broadcast %930 : f32 to vector<1x16xf32>
    %938 = arith.mulf %909, %937 : vector<1x16xf32>
    %939 = arith.addf %868, %938 : vector<1x16xf32>
    %c126 = arith.constant 126 : index
    %940 = memref.load %arg2[%c126] : memref<144xf32, #tpu.memory_space<smem>>
    %941 = vector.broadcast %940 : f32 to vector<8x16xf32>
    %942 = arith.mulf %903, %941 : vector<8x16xf32>
    %943 = arith.addf %872, %942 : vector<8x16xf32>
    %944 = vector.broadcast %940 : f32 to vector<1x16xf32>
    %945 = arith.mulf %906, %944 : vector<1x16xf32>
    %946 = arith.addf %875, %945 : vector<1x16xf32>
    %947 = vector.broadcast %940 : f32 to vector<1x16xf32>
    %948 = arith.mulf %909, %947 : vector<1x16xf32>
    %949 = arith.addf %878, %948 : vector<1x16xf32>
    %c19 = arith.constant 19 : index
    %950 = memref.load %arg2[%c19] : memref<144xf32, #tpu.memory_space<smem>>
    %951 = vector.broadcast %950 : f32 to vector<8x16xf32>
    %952 = arith.mulf %899, %951 : vector<8x16xf32>
    %953 = arith.addf %913, %952 : vector<8x16xf32>
    %954 = vector.broadcast %950 : f32 to vector<1x16xf32>
    %955 = arith.mulf %889, %954 : vector<1x16xf32>
    %956 = arith.addf %916, %955 : vector<1x16xf32>
    %957 = vector.broadcast %950 : f32 to vector<1x16xf32>
    %958 = arith.mulf %900, %957 : vector<1x16xf32>
    %959 = arith.addf %919, %958 : vector<1x16xf32>
    %c55 = arith.constant 55 : index
    %960 = memref.load %arg2[%c55] : memref<144xf32, #tpu.memory_space<smem>>
    %961 = vector.broadcast %960 : f32 to vector<8x16xf32>
    %962 = arith.mulf %899, %961 : vector<8x16xf32>
    %963 = arith.addf %923, %962 : vector<8x16xf32>
    %964 = vector.broadcast %960 : f32 to vector<1x16xf32>
    %965 = arith.mulf %889, %964 : vector<1x16xf32>
    %966 = arith.addf %926, %965 : vector<1x16xf32>
    %967 = vector.broadcast %960 : f32 to vector<1x16xf32>
    %968 = arith.mulf %900, %967 : vector<1x16xf32>
    %969 = arith.addf %929, %968 : vector<1x16xf32>
    %c91 = arith.constant 91 : index
    %970 = memref.load %arg2[%c91] : memref<144xf32, #tpu.memory_space<smem>>
    %971 = vector.broadcast %970 : f32 to vector<8x16xf32>
    %972 = arith.mulf %899, %971 : vector<8x16xf32>
    %973 = arith.addf %933, %972 : vector<8x16xf32>
    %974 = vector.broadcast %970 : f32 to vector<1x16xf32>
    %975 = arith.mulf %889, %974 : vector<1x16xf32>
    %976 = arith.addf %936, %975 : vector<1x16xf32>
    %977 = vector.broadcast %970 : f32 to vector<1x16xf32>
    %978 = arith.mulf %900, %977 : vector<1x16xf32>
    %979 = arith.addf %939, %978 : vector<1x16xf32>
    %c127 = arith.constant 127 : index
    %980 = memref.load %arg2[%c127] : memref<144xf32, #tpu.memory_space<smem>>
    %981 = vector.broadcast %980 : f32 to vector<8x16xf32>
    %982 = arith.mulf %899, %981 : vector<8x16xf32>
    %983 = arith.addf %943, %982 : vector<8x16xf32>
    %984 = vector.broadcast %980 : f32 to vector<1x16xf32>
    %985 = arith.mulf %889, %984 : vector<1x16xf32>
    %986 = arith.addf %946, %985 : vector<1x16xf32>
    %987 = vector.broadcast %980 : f32 to vector<1x16xf32>
    %988 = arith.mulf %900, %987 : vector<1x16xf32>
    %989 = arith.addf %949, %988 : vector<1x16xf32>
    %c15_i32_145 = arith.constant 15 : i32
    %990 = tpu.dynamic_rotate %899 by %c15_i32_145 dim 1 : vector<8x16xf32>, i32 -> vector<8x16xf32>
    %cst_146 = arith.constant 0.000000e+00 : f32
    %991 = vector.broadcast %cst_146 : f32 to vector<8x16xf32>
    %992 = arith.select %115, %990, %991 : vector<8x16xi1>, vector<8x16xf32>
    %c15_i32_147 = arith.constant 15 : i32
    %993 = tpu.dynamic_rotate %889 by %c15_i32_147 dim 1 : vector<1x16xf32>, i32 -> vector<1x16xf32>
    %cst_148 = arith.constant 0.000000e+00 : f32
    %994 = vector.broadcast %cst_148 : f32 to vector<1x16xf32>
    %995 = arith.select %121, %993, %994 : vector<1x16xi1>, vector<1x16xf32>
    %c15_i32_149 = arith.constant 15 : i32
    %996 = tpu.dynamic_rotate %900 by %c15_i32_149 dim 1 : vector<1x16xf32>, i32 -> vector<1x16xf32>
    %cst_150 = arith.constant 0.000000e+00 : f32
    %997 = vector.broadcast %cst_150 : f32 to vector<1x16xf32>
    %998 = arith.select %121, %996, %997 : vector<1x16xi1>, vector<1x16xf32>
    %c20 = arith.constant 20 : index
    %999 = memref.load %arg2[%c20] : memref<144xf32, #tpu.memory_space<smem>>
    %1000 = vector.broadcast %999 : f32 to vector<8x16xf32>
    %1001 = arith.mulf %992, %1000 : vector<8x16xf32>
    %1002 = arith.addf %953, %1001 : vector<8x16xf32>
    %1003 = vector.broadcast %999 : f32 to vector<1x16xf32>
    %1004 = arith.mulf %995, %1003 : vector<1x16xf32>
    %1005 = arith.addf %956, %1004 : vector<1x16xf32>
    %1006 = vector.broadcast %999 : f32 to vector<1x16xf32>
    %1007 = arith.mulf %998, %1006 : vector<1x16xf32>
    %1008 = arith.addf %959, %1007 : vector<1x16xf32>
    %c56 = arith.constant 56 : index
    %1009 = memref.load %arg2[%c56] : memref<144xf32, #tpu.memory_space<smem>>
    %1010 = vector.broadcast %1009 : f32 to vector<8x16xf32>
    %1011 = arith.mulf %992, %1010 : vector<8x16xf32>
    %1012 = arith.addf %963, %1011 : vector<8x16xf32>
    %1013 = vector.broadcast %1009 : f32 to vector<1x16xf32>
    %1014 = arith.mulf %995, %1013 : vector<1x16xf32>
    %1015 = arith.addf %966, %1014 : vector<1x16xf32>
    %1016 = vector.broadcast %1009 : f32 to vector<1x16xf32>
    %1017 = arith.mulf %998, %1016 : vector<1x16xf32>
    %1018 = arith.addf %969, %1017 : vector<1x16xf32>
    %c92 = arith.constant 92 : index
    %1019 = memref.load %arg2[%c92] : memref<144xf32, #tpu.memory_space<smem>>
    %1020 = vector.broadcast %1019 : f32 to vector<8x16xf32>
    %1021 = arith.mulf %992, %1020 : vector<8x16xf32>
    %1022 = arith.addf %973, %1021 : vector<8x16xf32>
    %1023 = vector.broadcast %1019 : f32 to vector<1x16xf32>
    %1024 = arith.mulf %995, %1023 : vector<1x16xf32>
    %1025 = arith.addf %976, %1024 : vector<1x16xf32>
    %1026 = vector.broadcast %1019 : f32 to vector<1x16xf32>
    %1027 = arith.mulf %998, %1026 : vector<1x16xf32>
    %1028 = arith.addf %979, %1027 : vector<1x16xf32>
    %c128 = arith.constant 128 : index
    %1029 = memref.load %arg2[%c128] : memref<144xf32, #tpu.memory_space<smem>>
    %1030 = vector.broadcast %1029 : f32 to vector<8x16xf32>
    %1031 = arith.mulf %992, %1030 : vector<8x16xf32>
    %1032 = arith.addf %983, %1031 : vector<8x16xf32>
    %1033 = vector.broadcast %1029 : f32 to vector<1x16xf32>
    %1034 = arith.mulf %995, %1033 : vector<1x16xf32>
    %1035 = arith.addf %986, %1034 : vector<1x16xf32>
    %1036 = vector.broadcast %1029 : f32 to vector<1x16xf32>
    %1037 = arith.mulf %998, %1036 : vector<1x16xf32>
    %1038 = arith.addf %989, %1037 : vector<1x16xf32>
    %c1_i32_151 = arith.constant 1 : i32
    %1039 = tpu.dynamic_rotate %881 by %c1_i32_151 dim 1 : vector<8x16xf32>, i32 -> vector<8x16xf32>
    %cst_152 = arith.constant 0.000000e+00 : f32
    %1040 = vector.broadcast %cst_152 : f32 to vector<8x16xf32>
    %1041 = arith.select %32, %1039, %1040 : vector<8x16xi1>, vector<8x16xf32>
    %c1_i32_153 = arith.constant 1 : i32
    %1042 = tpu.dynamic_rotate %890 by %c1_i32_153 dim 1 : vector<1x16xf32>, i32 -> vector<1x16xf32>
    %cst_154 = arith.constant 0.000000e+00 : f32
    %1043 = vector.broadcast %cst_154 : f32 to vector<1x16xf32>
    %1044 = arith.select %38, %1042, %1043 : vector<1x16xi1>, vector<1x16xf32>
    %c1_i32_155 = arith.constant 1 : i32
    %1045 = tpu.dynamic_rotate %892 by %c1_i32_155 dim 1 : vector<1x16xf32>, i32 -> vector<1x16xf32>
    %cst_156 = arith.constant 0.000000e+00 : f32
    %1046 = vector.broadcast %cst_156 : f32 to vector<1x16xf32>
    %1047 = arith.select %38, %1045, %1046 : vector<1x16xi1>, vector<1x16xf32>
    %c21 = arith.constant 21 : index
    %1048 = memref.load %arg2[%c21] : memref<144xf32, #tpu.memory_space<smem>>
    %1049 = vector.broadcast %1048 : f32 to vector<8x16xf32>
    %1050 = arith.mulf %1041, %1049 : vector<8x16xf32>
    %1051 = arith.addf %1002, %1050 : vector<8x16xf32>
    %1052 = vector.broadcast %1048 : f32 to vector<1x16xf32>
    %1053 = arith.mulf %1044, %1052 : vector<1x16xf32>
    %1054 = arith.addf %1005, %1053 : vector<1x16xf32>
    %1055 = vector.broadcast %1048 : f32 to vector<1x16xf32>
    %1056 = arith.mulf %1047, %1055 : vector<1x16xf32>
    %1057 = arith.addf %1008, %1056 : vector<1x16xf32>
    %c57 = arith.constant 57 : index
    %1058 = memref.load %arg2[%c57] : memref<144xf32, #tpu.memory_space<smem>>
    %1059 = vector.broadcast %1058 : f32 to vector<8x16xf32>
    %1060 = arith.mulf %1041, %1059 : vector<8x16xf32>
    %1061 = arith.addf %1012, %1060 : vector<8x16xf32>
    %1062 = vector.broadcast %1058 : f32 to vector<1x16xf32>
    %1063 = arith.mulf %1044, %1062 : vector<1x16xf32>
    %1064 = arith.addf %1015, %1063 : vector<1x16xf32>
    %1065 = vector.broadcast %1058 : f32 to vector<1x16xf32>
    %1066 = arith.mulf %1047, %1065 : vector<1x16xf32>
    %1067 = arith.addf %1018, %1066 : vector<1x16xf32>
    %c93 = arith.constant 93 : index
    %1068 = memref.load %arg2[%c93] : memref<144xf32, #tpu.memory_space<smem>>
    %1069 = vector.broadcast %1068 : f32 to vector<8x16xf32>
    %1070 = arith.mulf %1041, %1069 : vector<8x16xf32>
    %1071 = arith.addf %1022, %1070 : vector<8x16xf32>
    %1072 = vector.broadcast %1068 : f32 to vector<1x16xf32>
    %1073 = arith.mulf %1044, %1072 : vector<1x16xf32>
    %1074 = arith.addf %1025, %1073 : vector<1x16xf32>
    %1075 = vector.broadcast %1068 : f32 to vector<1x16xf32>
    %1076 = arith.mulf %1047, %1075 : vector<1x16xf32>
    %1077 = arith.addf %1028, %1076 : vector<1x16xf32>
    %c129 = arith.constant 129 : index
    %1078 = memref.load %arg2[%c129] : memref<144xf32, #tpu.memory_space<smem>>
    %1079 = vector.broadcast %1078 : f32 to vector<8x16xf32>
    %1080 = arith.mulf %1041, %1079 : vector<8x16xf32>
    %1081 = arith.addf %1032, %1080 : vector<8x16xf32>
    %1082 = vector.broadcast %1078 : f32 to vector<1x16xf32>
    %1083 = arith.mulf %1044, %1082 : vector<1x16xf32>
    %1084 = arith.addf %1035, %1083 : vector<1x16xf32>
    %1085 = vector.broadcast %1078 : f32 to vector<1x16xf32>
    %1086 = arith.mulf %1047, %1085 : vector<1x16xf32>
    %1087 = arith.addf %1038, %1086 : vector<1x16xf32>
    %c22 = arith.constant 22 : index
    %1088 = memref.load %arg2[%c22] : memref<144xf32, #tpu.memory_space<smem>>
    %1089 = vector.broadcast %1088 : f32 to vector<8x16xf32>
    %1090 = arith.mulf %881, %1089 : vector<8x16xf32>
    %1091 = arith.addf %1051, %1090 : vector<8x16xf32>
    %1092 = vector.broadcast %1088 : f32 to vector<1x16xf32>
    %1093 = arith.mulf %890, %1092 : vector<1x16xf32>
    %1094 = arith.addf %1054, %1093 : vector<1x16xf32>
    %1095 = vector.broadcast %1088 : f32 to vector<1x16xf32>
    %1096 = arith.mulf %892, %1095 : vector<1x16xf32>
    %1097 = arith.addf %1057, %1096 : vector<1x16xf32>
    %c58 = arith.constant 58 : index
    %1098 = memref.load %arg2[%c58] : memref<144xf32, #tpu.memory_space<smem>>
    %1099 = vector.broadcast %1098 : f32 to vector<8x16xf32>
    %1100 = arith.mulf %881, %1099 : vector<8x16xf32>
    %1101 = arith.addf %1061, %1100 : vector<8x16xf32>
    %1102 = vector.broadcast %1098 : f32 to vector<1x16xf32>
    %1103 = arith.mulf %890, %1102 : vector<1x16xf32>
    %1104 = arith.addf %1064, %1103 : vector<1x16xf32>
    %1105 = vector.broadcast %1098 : f32 to vector<1x16xf32>
    %1106 = arith.mulf %892, %1105 : vector<1x16xf32>
    %1107 = arith.addf %1067, %1106 : vector<1x16xf32>
    %c94 = arith.constant 94 : index
    %1108 = memref.load %arg2[%c94] : memref<144xf32, #tpu.memory_space<smem>>
    %1109 = vector.broadcast %1108 : f32 to vector<8x16xf32>
    %1110 = arith.mulf %881, %1109 : vector<8x16xf32>
    %1111 = arith.addf %1071, %1110 : vector<8x16xf32>
    %1112 = vector.broadcast %1108 : f32 to vector<1x16xf32>
    %1113 = arith.mulf %890, %1112 : vector<1x16xf32>
    %1114 = arith.addf %1074, %1113 : vector<1x16xf32>
    %1115 = vector.broadcast %1108 : f32 to vector<1x16xf32>
    %1116 = arith.mulf %892, %1115 : vector<1x16xf32>
    %1117 = arith.addf %1077, %1116 : vector<1x16xf32>
    %c130 = arith.constant 130 : index
    %1118 = memref.load %arg2[%c130] : memref<144xf32, #tpu.memory_space<smem>>
    %1119 = vector.broadcast %1118 : f32 to vector<8x16xf32>
    %1120 = arith.mulf %881, %1119 : vector<8x16xf32>
    %1121 = arith.addf %1081, %1120 : vector<8x16xf32>
    %1122 = vector.broadcast %1118 : f32 to vector<1x16xf32>
    %1123 = arith.mulf %890, %1122 : vector<1x16xf32>
    %1124 = arith.addf %1084, %1123 : vector<1x16xf32>
    %1125 = vector.broadcast %1118 : f32 to vector<1x16xf32>
    %1126 = arith.mulf %892, %1125 : vector<1x16xf32>
    %1127 = arith.addf %1087, %1126 : vector<1x16xf32>
    %c15_i32_157 = arith.constant 15 : i32
    %1128 = tpu.dynamic_rotate %881 by %c15_i32_157 dim 1 : vector<8x16xf32>, i32 -> vector<8x16xf32>
    %cst_158 = arith.constant 0.000000e+00 : f32
    %1129 = vector.broadcast %cst_158 : f32 to vector<8x16xf32>
    %1130 = arith.select %115, %1128, %1129 : vector<8x16xi1>, vector<8x16xf32>
    %c15_i32_159 = arith.constant 15 : i32
    %1131 = tpu.dynamic_rotate %890 by %c15_i32_159 dim 1 : vector<1x16xf32>, i32 -> vector<1x16xf32>
    %cst_160 = arith.constant 0.000000e+00 : f32
    %1132 = vector.broadcast %cst_160 : f32 to vector<1x16xf32>
    %1133 = arith.select %121, %1131, %1132 : vector<1x16xi1>, vector<1x16xf32>
    %c15_i32_161 = arith.constant 15 : i32
    %1134 = tpu.dynamic_rotate %892 by %c15_i32_161 dim 1 : vector<1x16xf32>, i32 -> vector<1x16xf32>
    %cst_162 = arith.constant 0.000000e+00 : f32
    %1135 = vector.broadcast %cst_162 : f32 to vector<1x16xf32>
    %1136 = arith.select %121, %1134, %1135 : vector<1x16xi1>, vector<1x16xf32>
    %c23 = arith.constant 23 : index
    %1137 = memref.load %arg2[%c23] : memref<144xf32, #tpu.memory_space<smem>>
    %1138 = vector.broadcast %1137 : f32 to vector<8x16xf32>
    %1139 = arith.mulf %1130, %1138 : vector<8x16xf32>
    %1140 = arith.addf %1091, %1139 : vector<8x16xf32>
    %1141 = vector.broadcast %1137 : f32 to vector<1x16xf32>
    %1142 = arith.mulf %1133, %1141 : vector<1x16xf32>
    %1143 = arith.addf %1094, %1142 : vector<1x16xf32>
    %1144 = vector.broadcast %1137 : f32 to vector<1x16xf32>
    %1145 = arith.mulf %1136, %1144 : vector<1x16xf32>
    %1146 = arith.addf %1097, %1145 : vector<1x16xf32>
    %c59 = arith.constant 59 : index
    %1147 = memref.load %arg2[%c59] : memref<144xf32, #tpu.memory_space<smem>>
    %1148 = vector.broadcast %1147 : f32 to vector<8x16xf32>
    %1149 = arith.mulf %1130, %1148 : vector<8x16xf32>
    %1150 = arith.addf %1101, %1149 : vector<8x16xf32>
    %1151 = vector.broadcast %1147 : f32 to vector<1x16xf32>
    %1152 = arith.mulf %1133, %1151 : vector<1x16xf32>
    %1153 = arith.addf %1104, %1152 : vector<1x16xf32>
    %1154 = vector.broadcast %1147 : f32 to vector<1x16xf32>
    %1155 = arith.mulf %1136, %1154 : vector<1x16xf32>
    %1156 = arith.addf %1107, %1155 : vector<1x16xf32>
    %c95 = arith.constant 95 : index
    %1157 = memref.load %arg2[%c95] : memref<144xf32, #tpu.memory_space<smem>>
    %1158 = vector.broadcast %1157 : f32 to vector<8x16xf32>
    %1159 = arith.mulf %1130, %1158 : vector<8x16xf32>
    %1160 = arith.addf %1111, %1159 : vector<8x16xf32>
    %1161 = vector.broadcast %1157 : f32 to vector<1x16xf32>
    %1162 = arith.mulf %1133, %1161 : vector<1x16xf32>
    %1163 = arith.addf %1114, %1162 : vector<1x16xf32>
    %1164 = vector.broadcast %1157 : f32 to vector<1x16xf32>
    %1165 = arith.mulf %1136, %1164 : vector<1x16xf32>
    %1166 = arith.addf %1117, %1165 : vector<1x16xf32>
    %c131 = arith.constant 131 : index
    %1167 = memref.load %arg2[%c131] : memref<144xf32, #tpu.memory_space<smem>>
    %1168 = vector.broadcast %1167 : f32 to vector<8x16xf32>
    %1169 = arith.mulf %1130, %1168 : vector<8x16xf32>
    %1170 = arith.addf %1121, %1169 : vector<8x16xf32>
    %1171 = vector.broadcast %1167 : f32 to vector<1x16xf32>
    %1172 = arith.mulf %1133, %1171 : vector<1x16xf32>
    %1173 = arith.addf %1124, %1172 : vector<1x16xf32>
    %1174 = vector.broadcast %1167 : f32 to vector<1x16xf32>
    %1175 = arith.mulf %1136, %1174 : vector<1x16xf32>
    %1176 = arith.addf %1127, %1175 : vector<1x16xf32>
    %c1_i32_163 = arith.constant 1 : i32
    %1177 = tpu.dynamic_rotate %882 by %c1_i32_163 dim 1 : vector<8x16xf32>, i32 -> vector<8x16xf32>
    %cst_164 = arith.constant 0.000000e+00 : f32
    %1178 = vector.broadcast %cst_164 : f32 to vector<8x16xf32>
    %1179 = arith.select %32, %1177, %1178 : vector<8x16xi1>, vector<8x16xf32>
    %c1_i32_165 = arith.constant 1 : i32
    %1180 = tpu.dynamic_rotate %891 by %c1_i32_165 dim 1 : vector<1x16xf32>, i32 -> vector<1x16xf32>
    %cst_166 = arith.constant 0.000000e+00 : f32
    %1181 = vector.broadcast %cst_166 : f32 to vector<1x16xf32>
    %1182 = arith.select %38, %1180, %1181 : vector<1x16xi1>, vector<1x16xf32>
    %c1_i32_167 = arith.constant 1 : i32
    %1183 = tpu.dynamic_rotate %893 by %c1_i32_167 dim 1 : vector<1x16xf32>, i32 -> vector<1x16xf32>
    %cst_168 = arith.constant 0.000000e+00 : f32
    %1184 = vector.broadcast %cst_168 : f32 to vector<1x16xf32>
    %1185 = arith.select %38, %1183, %1184 : vector<1x16xi1>, vector<1x16xf32>
    %c24 = arith.constant 24 : index
    %1186 = memref.load %arg2[%c24] : memref<144xf32, #tpu.memory_space<smem>>
    %1187 = vector.broadcast %1186 : f32 to vector<8x16xf32>
    %1188 = arith.mulf %1179, %1187 : vector<8x16xf32>
    %1189 = arith.addf %1140, %1188 : vector<8x16xf32>
    %1190 = vector.broadcast %1186 : f32 to vector<1x16xf32>
    %1191 = arith.mulf %1182, %1190 : vector<1x16xf32>
    %1192 = arith.addf %1143, %1191 : vector<1x16xf32>
    %1193 = vector.broadcast %1186 : f32 to vector<1x16xf32>
    %1194 = arith.mulf %1185, %1193 : vector<1x16xf32>
    %1195 = arith.addf %1146, %1194 : vector<1x16xf32>
    %c60 = arith.constant 60 : index
    %1196 = memref.load %arg2[%c60] : memref<144xf32, #tpu.memory_space<smem>>
    %1197 = vector.broadcast %1196 : f32 to vector<8x16xf32>
    %1198 = arith.mulf %1179, %1197 : vector<8x16xf32>
    %1199 = arith.addf %1150, %1198 : vector<8x16xf32>
    %1200 = vector.broadcast %1196 : f32 to vector<1x16xf32>
    %1201 = arith.mulf %1182, %1200 : vector<1x16xf32>
    %1202 = arith.addf %1153, %1201 : vector<1x16xf32>
    %1203 = vector.broadcast %1196 : f32 to vector<1x16xf32>
    %1204 = arith.mulf %1185, %1203 : vector<1x16xf32>
    %1205 = arith.addf %1156, %1204 : vector<1x16xf32>
    %c96 = arith.constant 96 : index
    %1206 = memref.load %arg2[%c96] : memref<144xf32, #tpu.memory_space<smem>>
    %1207 = vector.broadcast %1206 : f32 to vector<8x16xf32>
    %1208 = arith.mulf %1179, %1207 : vector<8x16xf32>
    %1209 = arith.addf %1160, %1208 : vector<8x16xf32>
    %1210 = vector.broadcast %1206 : f32 to vector<1x16xf32>
    %1211 = arith.mulf %1182, %1210 : vector<1x16xf32>
    %1212 = arith.addf %1163, %1211 : vector<1x16xf32>
    %1213 = vector.broadcast %1206 : f32 to vector<1x16xf32>
    %1214 = arith.mulf %1185, %1213 : vector<1x16xf32>
    %1215 = arith.addf %1166, %1214 : vector<1x16xf32>
    %c132 = arith.constant 132 : index
    %1216 = memref.load %arg2[%c132] : memref<144xf32, #tpu.memory_space<smem>>
    %1217 = vector.broadcast %1216 : f32 to vector<8x16xf32>
    %1218 = arith.mulf %1179, %1217 : vector<8x16xf32>
    %1219 = arith.addf %1170, %1218 : vector<8x16xf32>
    %1220 = vector.broadcast %1216 : f32 to vector<1x16xf32>
    %1221 = arith.mulf %1182, %1220 : vector<1x16xf32>
    %1222 = arith.addf %1173, %1221 : vector<1x16xf32>
    %1223 = vector.broadcast %1216 : f32 to vector<1x16xf32>
    %1224 = arith.mulf %1185, %1223 : vector<1x16xf32>
    %1225 = arith.addf %1176, %1224 : vector<1x16xf32>
    %c25 = arith.constant 25 : index
    %1226 = memref.load %arg2[%c25] : memref<144xf32, #tpu.memory_space<smem>>
    %1227 = vector.broadcast %1226 : f32 to vector<8x16xf32>
    %1228 = arith.mulf %882, %1227 : vector<8x16xf32>
    %1229 = arith.addf %1189, %1228 : vector<8x16xf32>
    %1230 = vector.broadcast %1226 : f32 to vector<1x16xf32>
    %1231 = arith.mulf %891, %1230 : vector<1x16xf32>
    %1232 = arith.addf %1192, %1231 : vector<1x16xf32>
    %1233 = vector.broadcast %1226 : f32 to vector<1x16xf32>
    %1234 = arith.mulf %893, %1233 : vector<1x16xf32>
    %1235 = arith.addf %1195, %1234 : vector<1x16xf32>
    %c61 = arith.constant 61 : index
    %1236 = memref.load %arg2[%c61] : memref<144xf32, #tpu.memory_space<smem>>
    %1237 = vector.broadcast %1236 : f32 to vector<8x16xf32>
    %1238 = arith.mulf %882, %1237 : vector<8x16xf32>
    %1239 = arith.addf %1199, %1238 : vector<8x16xf32>
    %1240 = vector.broadcast %1236 : f32 to vector<1x16xf32>
    %1241 = arith.mulf %891, %1240 : vector<1x16xf32>
    %1242 = arith.addf %1202, %1241 : vector<1x16xf32>
    %1243 = vector.broadcast %1236 : f32 to vector<1x16xf32>
    %1244 = arith.mulf %893, %1243 : vector<1x16xf32>
    %1245 = arith.addf %1205, %1244 : vector<1x16xf32>
    %c97 = arith.constant 97 : index
    %1246 = memref.load %arg2[%c97] : memref<144xf32, #tpu.memory_space<smem>>
    %1247 = vector.broadcast %1246 : f32 to vector<8x16xf32>
    %1248 = arith.mulf %882, %1247 : vector<8x16xf32>
    %1249 = arith.addf %1209, %1248 : vector<8x16xf32>
    %1250 = vector.broadcast %1246 : f32 to vector<1x16xf32>
    %1251 = arith.mulf %891, %1250 : vector<1x16xf32>
    %1252 = arith.addf %1212, %1251 : vector<1x16xf32>
    %1253 = vector.broadcast %1246 : f32 to vector<1x16xf32>
    %1254 = arith.mulf %893, %1253 : vector<1x16xf32>
    %1255 = arith.addf %1215, %1254 : vector<1x16xf32>
    %c133 = arith.constant 133 : index
    %1256 = memref.load %arg2[%c133] : memref<144xf32, #tpu.memory_space<smem>>
    %1257 = vector.broadcast %1256 : f32 to vector<8x16xf32>
    %1258 = arith.mulf %882, %1257 : vector<8x16xf32>
    %1259 = arith.addf %1219, %1258 : vector<8x16xf32>
    %1260 = vector.broadcast %1256 : f32 to vector<1x16xf32>
    %1261 = arith.mulf %891, %1260 : vector<1x16xf32>
    %1262 = arith.addf %1222, %1261 : vector<1x16xf32>
    %1263 = vector.broadcast %1256 : f32 to vector<1x16xf32>
    %1264 = arith.mulf %893, %1263 : vector<1x16xf32>
    %1265 = arith.addf %1225, %1264 : vector<1x16xf32>
    %c15_i32_169 = arith.constant 15 : i32
    %1266 = tpu.dynamic_rotate %882 by %c15_i32_169 dim 1 : vector<8x16xf32>, i32 -> vector<8x16xf32>
    %cst_170 = arith.constant 0.000000e+00 : f32
    %1267 = vector.broadcast %cst_170 : f32 to vector<8x16xf32>
    %1268 = arith.select %115, %1266, %1267 : vector<8x16xi1>, vector<8x16xf32>
    %c15_i32_171 = arith.constant 15 : i32
    %1269 = tpu.dynamic_rotate %891 by %c15_i32_171 dim 1 : vector<1x16xf32>, i32 -> vector<1x16xf32>
    %cst_172 = arith.constant 0.000000e+00 : f32
    %1270 = vector.broadcast %cst_172 : f32 to vector<1x16xf32>
    %1271 = arith.select %121, %1269, %1270 : vector<1x16xi1>, vector<1x16xf32>
    %c15_i32_173 = arith.constant 15 : i32
    %1272 = tpu.dynamic_rotate %893 by %c15_i32_173 dim 1 : vector<1x16xf32>, i32 -> vector<1x16xf32>
    %cst_174 = arith.constant 0.000000e+00 : f32
    %1273 = vector.broadcast %cst_174 : f32 to vector<1x16xf32>
    %1274 = arith.select %121, %1272, %1273 : vector<1x16xi1>, vector<1x16xf32>
    %c26 = arith.constant 26 : index
    %1275 = memref.load %arg2[%c26] : memref<144xf32, #tpu.memory_space<smem>>
    %1276 = vector.broadcast %1275 : f32 to vector<8x16xf32>
    %1277 = arith.mulf %1268, %1276 : vector<8x16xf32>
    %1278 = arith.addf %1229, %1277 : vector<8x16xf32>
    %1279 = vector.broadcast %1275 : f32 to vector<1x16xf32>
    %1280 = arith.mulf %1271, %1279 : vector<1x16xf32>
    %1281 = arith.addf %1232, %1280 : vector<1x16xf32>
    %1282 = vector.broadcast %1275 : f32 to vector<1x16xf32>
    %1283 = arith.mulf %1274, %1282 : vector<1x16xf32>
    %1284 = arith.addf %1235, %1283 : vector<1x16xf32>
    %c62 = arith.constant 62 : index
    %1285 = memref.load %arg2[%c62] : memref<144xf32, #tpu.memory_space<smem>>
    %1286 = vector.broadcast %1285 : f32 to vector<8x16xf32>
    %1287 = arith.mulf %1268, %1286 : vector<8x16xf32>
    %1288 = arith.addf %1239, %1287 : vector<8x16xf32>
    %1289 = vector.broadcast %1285 : f32 to vector<1x16xf32>
    %1290 = arith.mulf %1271, %1289 : vector<1x16xf32>
    %1291 = arith.addf %1242, %1290 : vector<1x16xf32>
    %1292 = vector.broadcast %1285 : f32 to vector<1x16xf32>
    %1293 = arith.mulf %1274, %1292 : vector<1x16xf32>
    %1294 = arith.addf %1245, %1293 : vector<1x16xf32>
    %c98 = arith.constant 98 : index
    %1295 = memref.load %arg2[%c98] : memref<144xf32, #tpu.memory_space<smem>>
    %1296 = vector.broadcast %1295 : f32 to vector<8x16xf32>
    %1297 = arith.mulf %1268, %1296 : vector<8x16xf32>
    %1298 = arith.addf %1249, %1297 : vector<8x16xf32>
    %1299 = vector.broadcast %1295 : f32 to vector<1x16xf32>
    %1300 = arith.mulf %1271, %1299 : vector<1x16xf32>
    %1301 = arith.addf %1252, %1300 : vector<1x16xf32>
    %1302 = vector.broadcast %1295 : f32 to vector<1x16xf32>
    %1303 = arith.mulf %1274, %1302 : vector<1x16xf32>
    %1304 = arith.addf %1255, %1303 : vector<1x16xf32>
    %c134 = arith.constant 134 : index
    %1305 = memref.load %arg2[%c134] : memref<144xf32, #tpu.memory_space<smem>>
    %1306 = vector.broadcast %1305 : f32 to vector<8x16xf32>
    %1307 = arith.mulf %1268, %1306 : vector<8x16xf32>
    %1308 = arith.addf %1259, %1307 : vector<8x16xf32>
    %1309 = vector.broadcast %1305 : f32 to vector<1x16xf32>
    %1310 = arith.mulf %1271, %1309 : vector<1x16xf32>
    %1311 = arith.addf %1262, %1310 : vector<1x16xf32>
    %1312 = vector.broadcast %1305 : f32 to vector<1x16xf32>
    %1313 = arith.mulf %1274, %1312 : vector<1x16xf32>
    %1314 = arith.addf %1265, %1313 : vector<1x16xf32>
    %c0_175 = arith.constant 0 : index
    %c3_176 = arith.constant 3 : index
    %c0_177 = arith.constant 0 : index
    %c0_178 = arith.constant 0 : index
    %1315 = vector.load %arg7[%c0_175, %c3_176, %c0_177, %c0_178] : memref<1x4x8x32xf32, #tpu.memory_space<vmem>>, vector<1x1x8x32xf32>
    %1316 = vector.shape_cast %1315 : vector<1x1x8x32xf32> to vector<8x32xf32>
    %1317 = vector.extract_strided_slice %1316 {offsets = [0, 0], sizes = [8, 16], strides = [1, 1]} : vector<8x32xf32> to vector<8x16xf32>
    %1318 = vector.extract_strided_slice %1316 {offsets = [0, 16], sizes = [8, 16], strides = [1, 1]} : vector<8x32xf32> to vector<8x16xf32>
    %c0_179 = arith.constant 0 : index
    %c3_180 = arith.constant 3 : index
    %c0_181 = arith.constant 0 : index
    %c0_182 = arith.constant 0 : index
    %c0_183 = arith.constant 0 : index
    %1319 = vector.load %arg5[%c0_179, %c3_180, %c0_181, %c0_182, %c0_183] : memref<1x4x1x2x16xf32, #tpu.memory_space<vmem>>, vector<1x1x1x2x16xf32>
    %1320 = vector.shape_cast %1319 : vector<1x1x1x2x16xf32> to vector<2x16xf32>
    %c0_184 = arith.constant 0 : index
    %c3_185 = arith.constant 3 : index
    %c0_186 = arith.constant 0 : index
    %c0_187 = arith.constant 0 : index
    %c0_188 = arith.constant 0 : index
    %1321 = vector.load %arg6[%c0_184, %c3_185, %c0_186, %c0_187, %c0_188] : memref<1x4x1x2x16xf32, #tpu.memory_space<vmem>>, vector<1x1x1x2x16xf32>
    %1322 = vector.shape_cast %1321 : vector<1x1x1x2x16xf32> to vector<2x16xf32>
    %c0_189 = arith.constant 0 : index
    %c3_190 = arith.constant 3 : index
    %c0_191 = arith.constant 0 : index
    %c0_192 = arith.constant 0 : index
    %c0_193 = arith.constant 0 : index
    %1323 = vector.load %arg8[%c0_189, %c3_190, %c0_191, %c0_192, %c0_193] : memref<1x4x1x2x16xf32, #tpu.memory_space<vmem>>, vector<1x1x1x2x16xf32>
    %1324 = vector.shape_cast %1323 : vector<1x1x1x2x16xf32> to vector<2x16xf32>
    %1325 = vector.extract_strided_slice %1320 {offsets = [1, 0], sizes = [1, 16], strides = [1, 1]} : vector<2x16xf32> to vector<1x16xf32>
    %1326 = vector.extract_strided_slice %1322 {offsets = [0, 0], sizes = [1, 16], strides = [1, 1]} : vector<2x16xf32> to vector<1x16xf32>
    %1327 = vector.extract_strided_slice %1322 {offsets = [1, 0], sizes = [1, 16], strides = [1, 1]} : vector<2x16xf32> to vector<1x16xf32>
    %1328 = vector.extract_strided_slice %1324 {offsets = [0, 0], sizes = [1, 16], strides = [1, 1]} : vector<2x16xf32> to vector<1x16xf32>
    %1329 = vector.extract_strided_slice %1324 {offsets = [1, 0], sizes = [1, 16], strides = [1, 1]} : vector<2x16xf32> to vector<1x16xf32>
    %1330 = vector.broadcast %1 : f32 to vector<1x16xf32>
    %1331 = arith.mulf %1327, %1330 : vector<1x16xf32>
    %c1_i32_194 = arith.constant 1 : i32
    %1332 = tpu.dynamic_rotate %1318 by %c1_i32_194 dim 0 : vector<8x16xf32>, i32 -> vector<8x16xf32>
    %1333 = vector.shape_cast %1331 : vector<1x16xf32> to vector<1x16xf32>
    %1334 = vector.broadcast %1333 : vector<1x16xf32> to vector<8x16xf32>
    %1335 = arith.select %24, %1334, %1332 : vector<8x16xi1>, vector<8x16xf32>
    %1336 = vector.extract_strided_slice %1318 {offsets = [7, 0], sizes = [1, 16], strides = [1, 1]} : vector<8x16xf32> to vector<1x16xf32>
    %c1_i32_195 = arith.constant 1 : i32
    %1337 = tpu.dynamic_rotate %1335 by %c1_i32_195 dim 1 : vector<8x16xf32>, i32 -> vector<8x16xf32>
    %cst_196 = arith.constant 0.000000e+00 : f32
    %1338 = vector.broadcast %cst_196 : f32 to vector<8x16xf32>
    %1339 = arith.select %32, %1337, %1338 : vector<8x16xi1>, vector<8x16xf32>
    %c1_i32_197 = arith.constant 1 : i32
    %1340 = tpu.dynamic_rotate %1325 by %c1_i32_197 dim 1 : vector<1x16xf32>, i32 -> vector<1x16xf32>
    %cst_198 = arith.constant 0.000000e+00 : f32
    %1341 = vector.broadcast %cst_198 : f32 to vector<1x16xf32>
    %1342 = arith.select %38, %1340, %1341 : vector<1x16xi1>, vector<1x16xf32>
    %c1_i32_199 = arith.constant 1 : i32
    %1343 = tpu.dynamic_rotate %1336 by %c1_i32_199 dim 1 : vector<1x16xf32>, i32 -> vector<1x16xf32>
    %cst_200 = arith.constant 0.000000e+00 : f32
    %1344 = vector.broadcast %cst_200 : f32 to vector<1x16xf32>
    %1345 = arith.select %38, %1343, %1344 : vector<1x16xi1>, vector<1x16xf32>
    %c27 = arith.constant 27 : index
    %1346 = memref.load %arg2[%c27] : memref<144xf32, #tpu.memory_space<smem>>
    %1347 = vector.broadcast %1346 : f32 to vector<8x16xf32>
    %1348 = arith.mulf %1339, %1347 : vector<8x16xf32>
    %1349 = arith.addf %1278, %1348 : vector<8x16xf32>
    %1350 = vector.broadcast %1346 : f32 to vector<1x16xf32>
    %1351 = arith.mulf %1342, %1350 : vector<1x16xf32>
    %1352 = arith.addf %1281, %1351 : vector<1x16xf32>
    %1353 = vector.broadcast %1346 : f32 to vector<1x16xf32>
    %1354 = arith.mulf %1345, %1353 : vector<1x16xf32>
    %1355 = arith.addf %1284, %1354 : vector<1x16xf32>
    %c63 = arith.constant 63 : index
    %1356 = memref.load %arg2[%c63] : memref<144xf32, #tpu.memory_space<smem>>
    %1357 = vector.broadcast %1356 : f32 to vector<8x16xf32>
    %1358 = arith.mulf %1339, %1357 : vector<8x16xf32>
    %1359 = arith.addf %1288, %1358 : vector<8x16xf32>
    %1360 = vector.broadcast %1356 : f32 to vector<1x16xf32>
    %1361 = arith.mulf %1342, %1360 : vector<1x16xf32>
    %1362 = arith.addf %1291, %1361 : vector<1x16xf32>
    %1363 = vector.broadcast %1356 : f32 to vector<1x16xf32>
    %1364 = arith.mulf %1345, %1363 : vector<1x16xf32>
    %1365 = arith.addf %1294, %1364 : vector<1x16xf32>
    %c99 = arith.constant 99 : index
    %1366 = memref.load %arg2[%c99] : memref<144xf32, #tpu.memory_space<smem>>
    %1367 = vector.broadcast %1366 : f32 to vector<8x16xf32>
    %1368 = arith.mulf %1339, %1367 : vector<8x16xf32>
    %1369 = arith.addf %1298, %1368 : vector<8x16xf32>
    %1370 = vector.broadcast %1366 : f32 to vector<1x16xf32>
    %1371 = arith.mulf %1342, %1370 : vector<1x16xf32>
    %1372 = arith.addf %1301, %1371 : vector<1x16xf32>
    %1373 = vector.broadcast %1366 : f32 to vector<1x16xf32>
    %1374 = arith.mulf %1345, %1373 : vector<1x16xf32>
    %1375 = arith.addf %1304, %1374 : vector<1x16xf32>
    %c135 = arith.constant 135 : index
    %1376 = memref.load %arg2[%c135] : memref<144xf32, #tpu.memory_space<smem>>
    %1377 = vector.broadcast %1376 : f32 to vector<8x16xf32>
    %1378 = arith.mulf %1339, %1377 : vector<8x16xf32>
    %1379 = arith.addf %1308, %1378 : vector<8x16xf32>
    %1380 = vector.broadcast %1376 : f32 to vector<1x16xf32>
    %1381 = arith.mulf %1342, %1380 : vector<1x16xf32>
    %1382 = arith.addf %1311, %1381 : vector<1x16xf32>
    %1383 = vector.broadcast %1376 : f32 to vector<1x16xf32>
    %1384 = arith.mulf %1345, %1383 : vector<1x16xf32>
    %1385 = arith.addf %1314, %1384 : vector<1x16xf32>
    %c28 = arith.constant 28 : index
    %1386 = memref.load %arg2[%c28] : memref<144xf32, #tpu.memory_space<smem>>
    %1387 = vector.broadcast %1386 : f32 to vector<8x16xf32>
    %1388 = arith.mulf %1335, %1387 : vector<8x16xf32>
    %1389 = arith.addf %1349, %1388 : vector<8x16xf32>
    %1390 = vector.broadcast %1386 : f32 to vector<1x16xf32>
    %1391 = arith.mulf %1325, %1390 : vector<1x16xf32>
    %1392 = arith.addf %1352, %1391 : vector<1x16xf32>
    %1393 = vector.broadcast %1386 : f32 to vector<1x16xf32>
    %1394 = arith.mulf %1336, %1393 : vector<1x16xf32>
    %1395 = arith.addf %1355, %1394 : vector<1x16xf32>
    %c64 = arith.constant 64 : index
    %1396 = memref.load %arg2[%c64] : memref<144xf32, #tpu.memory_space<smem>>
    %1397 = vector.broadcast %1396 : f32 to vector<8x16xf32>
    %1398 = arith.mulf %1335, %1397 : vector<8x16xf32>
    %1399 = arith.addf %1359, %1398 : vector<8x16xf32>
    %1400 = vector.broadcast %1396 : f32 to vector<1x16xf32>
    %1401 = arith.mulf %1325, %1400 : vector<1x16xf32>
    %1402 = arith.addf %1362, %1401 : vector<1x16xf32>
    %1403 = vector.broadcast %1396 : f32 to vector<1x16xf32>
    %1404 = arith.mulf %1336, %1403 : vector<1x16xf32>
    %1405 = arith.addf %1365, %1404 : vector<1x16xf32>
    %c100 = arith.constant 100 : index
    %1406 = memref.load %arg2[%c100] : memref<144xf32, #tpu.memory_space<smem>>
    %1407 = vector.broadcast %1406 : f32 to vector<8x16xf32>
    %1408 = arith.mulf %1335, %1407 : vector<8x16xf32>
    %1409 = arith.addf %1369, %1408 : vector<8x16xf32>
    %1410 = vector.broadcast %1406 : f32 to vector<1x16xf32>
    %1411 = arith.mulf %1325, %1410 : vector<1x16xf32>
    %1412 = arith.addf %1372, %1411 : vector<1x16xf32>
    %1413 = vector.broadcast %1406 : f32 to vector<1x16xf32>
    %1414 = arith.mulf %1336, %1413 : vector<1x16xf32>
    %1415 = arith.addf %1375, %1414 : vector<1x16xf32>
    %c136 = arith.constant 136 : index
    %1416 = memref.load %arg2[%c136] : memref<144xf32, #tpu.memory_space<smem>>
    %1417 = vector.broadcast %1416 : f32 to vector<8x16xf32>
    %1418 = arith.mulf %1335, %1417 : vector<8x16xf32>
    %1419 = arith.addf %1379, %1418 : vector<8x16xf32>
    %1420 = vector.broadcast %1416 : f32 to vector<1x16xf32>
    %1421 = arith.mulf %1325, %1420 : vector<1x16xf32>
    %1422 = arith.addf %1382, %1421 : vector<1x16xf32>
    %1423 = vector.broadcast %1416 : f32 to vector<1x16xf32>
    %1424 = arith.mulf %1336, %1423 : vector<1x16xf32>
    %1425 = arith.addf %1385, %1424 : vector<1x16xf32>
    %c15_i32_201 = arith.constant 15 : i32
    %1426 = tpu.dynamic_rotate %1335 by %c15_i32_201 dim 1 : vector<8x16xf32>, i32 -> vector<8x16xf32>
    %cst_202 = arith.constant 0.000000e+00 : f32
    %1427 = vector.broadcast %cst_202 : f32 to vector<8x16xf32>
    %1428 = arith.select %115, %1426, %1427 : vector<8x16xi1>, vector<8x16xf32>
    %c15_i32_203 = arith.constant 15 : i32
    %1429 = tpu.dynamic_rotate %1325 by %c15_i32_203 dim 1 : vector<1x16xf32>, i32 -> vector<1x16xf32>
    %cst_204 = arith.constant 0.000000e+00 : f32
    %1430 = vector.broadcast %cst_204 : f32 to vector<1x16xf32>
    %1431 = arith.select %121, %1429, %1430 : vector<1x16xi1>, vector<1x16xf32>
    %c15_i32_205 = arith.constant 15 : i32
    %1432 = tpu.dynamic_rotate %1336 by %c15_i32_205 dim 1 : vector<1x16xf32>, i32 -> vector<1x16xf32>
    %cst_206 = arith.constant 0.000000e+00 : f32
    %1433 = vector.broadcast %cst_206 : f32 to vector<1x16xf32>
    %1434 = arith.select %121, %1432, %1433 : vector<1x16xi1>, vector<1x16xf32>
    %c29 = arith.constant 29 : index
    %1435 = memref.load %arg2[%c29] : memref<144xf32, #tpu.memory_space<smem>>
    %1436 = vector.broadcast %1435 : f32 to vector<8x16xf32>
    %1437 = arith.mulf %1428, %1436 : vector<8x16xf32>
    %1438 = arith.addf %1389, %1437 : vector<8x16xf32>
    %1439 = vector.broadcast %1435 : f32 to vector<1x16xf32>
    %1440 = arith.mulf %1431, %1439 : vector<1x16xf32>
    %1441 = arith.addf %1392, %1440 : vector<1x16xf32>
    %1442 = vector.broadcast %1435 : f32 to vector<1x16xf32>
    %1443 = arith.mulf %1434, %1442 : vector<1x16xf32>
    %1444 = arith.addf %1395, %1443 : vector<1x16xf32>
    %c65 = arith.constant 65 : index
    %1445 = memref.load %arg2[%c65] : memref<144xf32, #tpu.memory_space<smem>>
    %1446 = vector.broadcast %1445 : f32 to vector<8x16xf32>
    %1447 = arith.mulf %1428, %1446 : vector<8x16xf32>
    %1448 = arith.addf %1399, %1447 : vector<8x16xf32>
    %1449 = vector.broadcast %1445 : f32 to vector<1x16xf32>
    %1450 = arith.mulf %1431, %1449 : vector<1x16xf32>
    %1451 = arith.addf %1402, %1450 : vector<1x16xf32>
    %1452 = vector.broadcast %1445 : f32 to vector<1x16xf32>
    %1453 = arith.mulf %1434, %1452 : vector<1x16xf32>
    %1454 = arith.addf %1405, %1453 : vector<1x16xf32>
    %c101 = arith.constant 101 : index
    %1455 = memref.load %arg2[%c101] : memref<144xf32, #tpu.memory_space<smem>>
    %1456 = vector.broadcast %1455 : f32 to vector<8x16xf32>
    %1457 = arith.mulf %1428, %1456 : vector<8x16xf32>
    %1458 = arith.addf %1409, %1457 : vector<8x16xf32>
    %1459 = vector.broadcast %1455 : f32 to vector<1x16xf32>
    %1460 = arith.mulf %1431, %1459 : vector<1x16xf32>
    %1461 = arith.addf %1412, %1460 : vector<1x16xf32>
    %1462 = vector.broadcast %1455 : f32 to vector<1x16xf32>
    %1463 = arith.mulf %1434, %1462 : vector<1x16xf32>
    %1464 = arith.addf %1415, %1463 : vector<1x16xf32>
    %c137 = arith.constant 137 : index
    %1465 = memref.load %arg2[%c137] : memref<144xf32, #tpu.memory_space<smem>>
    %1466 = vector.broadcast %1465 : f32 to vector<8x16xf32>
    %1467 = arith.mulf %1428, %1466 : vector<8x16xf32>
    %1468 = arith.addf %1419, %1467 : vector<8x16xf32>
    %1469 = vector.broadcast %1465 : f32 to vector<1x16xf32>
    %1470 = arith.mulf %1431, %1469 : vector<1x16xf32>
    %1471 = arith.addf %1422, %1470 : vector<1x16xf32>
    %1472 = vector.broadcast %1465 : f32 to vector<1x16xf32>
    %1473 = arith.mulf %1434, %1472 : vector<1x16xf32>
    %1474 = arith.addf %1425, %1473 : vector<1x16xf32>
    %c1_i32_207 = arith.constant 1 : i32
    %1475 = tpu.dynamic_rotate %1317 by %c1_i32_207 dim 1 : vector<8x16xf32>, i32 -> vector<8x16xf32>
    %cst_208 = arith.constant 0.000000e+00 : f32
    %1476 = vector.broadcast %cst_208 : f32 to vector<8x16xf32>
    %1477 = arith.select %32, %1475, %1476 : vector<8x16xi1>, vector<8x16xf32>
    %c1_i32_209 = arith.constant 1 : i32
    %1478 = tpu.dynamic_rotate %1326 by %c1_i32_209 dim 1 : vector<1x16xf32>, i32 -> vector<1x16xf32>
    %cst_210 = arith.constant 0.000000e+00 : f32
    %1479 = vector.broadcast %cst_210 : f32 to vector<1x16xf32>
    %1480 = arith.select %38, %1478, %1479 : vector<1x16xi1>, vector<1x16xf32>
    %c1_i32_211 = arith.constant 1 : i32
    %1481 = tpu.dynamic_rotate %1328 by %c1_i32_211 dim 1 : vector<1x16xf32>, i32 -> vector<1x16xf32>
    %cst_212 = arith.constant 0.000000e+00 : f32
    %1482 = vector.broadcast %cst_212 : f32 to vector<1x16xf32>
    %1483 = arith.select %38, %1481, %1482 : vector<1x16xi1>, vector<1x16xf32>
    %c30 = arith.constant 30 : index
    %1484 = memref.load %arg2[%c30] : memref<144xf32, #tpu.memory_space<smem>>
    %1485 = vector.broadcast %1484 : f32 to vector<8x16xf32>
    %1486 = arith.mulf %1477, %1485 : vector<8x16xf32>
    %1487 = arith.addf %1438, %1486 : vector<8x16xf32>
    %1488 = vector.broadcast %1484 : f32 to vector<1x16xf32>
    %1489 = arith.mulf %1480, %1488 : vector<1x16xf32>
    %1490 = arith.addf %1441, %1489 : vector<1x16xf32>
    %1491 = vector.broadcast %1484 : f32 to vector<1x16xf32>
    %1492 = arith.mulf %1483, %1491 : vector<1x16xf32>
    %1493 = arith.addf %1444, %1492 : vector<1x16xf32>
    %c66 = arith.constant 66 : index
    %1494 = memref.load %arg2[%c66] : memref<144xf32, #tpu.memory_space<smem>>
    %1495 = vector.broadcast %1494 : f32 to vector<8x16xf32>
    %1496 = arith.mulf %1477, %1495 : vector<8x16xf32>
    %1497 = arith.addf %1448, %1496 : vector<8x16xf32>
    %1498 = vector.broadcast %1494 : f32 to vector<1x16xf32>
    %1499 = arith.mulf %1480, %1498 : vector<1x16xf32>
    %1500 = arith.addf %1451, %1499 : vector<1x16xf32>
    %1501 = vector.broadcast %1494 : f32 to vector<1x16xf32>
    %1502 = arith.mulf %1483, %1501 : vector<1x16xf32>
    %1503 = arith.addf %1454, %1502 : vector<1x16xf32>
    %c102 = arith.constant 102 : index
    %1504 = memref.load %arg2[%c102] : memref<144xf32, #tpu.memory_space<smem>>
    %1505 = vector.broadcast %1504 : f32 to vector<8x16xf32>
    %1506 = arith.mulf %1477, %1505 : vector<8x16xf32>
    %1507 = arith.addf %1458, %1506 : vector<8x16xf32>
    %1508 = vector.broadcast %1504 : f32 to vector<1x16xf32>
    %1509 = arith.mulf %1480, %1508 : vector<1x16xf32>
    %1510 = arith.addf %1461, %1509 : vector<1x16xf32>
    %1511 = vector.broadcast %1504 : f32 to vector<1x16xf32>
    %1512 = arith.mulf %1483, %1511 : vector<1x16xf32>
    %1513 = arith.addf %1464, %1512 : vector<1x16xf32>
    %c138 = arith.constant 138 : index
    %1514 = memref.load %arg2[%c138] : memref<144xf32, #tpu.memory_space<smem>>
    %1515 = vector.broadcast %1514 : f32 to vector<8x16xf32>
    %1516 = arith.mulf %1477, %1515 : vector<8x16xf32>
    %1517 = arith.addf %1468, %1516 : vector<8x16xf32>
    %1518 = vector.broadcast %1514 : f32 to vector<1x16xf32>
    %1519 = arith.mulf %1480, %1518 : vector<1x16xf32>
    %1520 = arith.addf %1471, %1519 : vector<1x16xf32>
    %1521 = vector.broadcast %1514 : f32 to vector<1x16xf32>
    %1522 = arith.mulf %1483, %1521 : vector<1x16xf32>
    %1523 = arith.addf %1474, %1522 : vector<1x16xf32>
    %c31 = arith.constant 31 : index
    %1524 = memref.load %arg2[%c31] : memref<144xf32, #tpu.memory_space<smem>>
    %1525 = vector.broadcast %1524 : f32 to vector<8x16xf32>
    %1526 = arith.mulf %1317, %1525 : vector<8x16xf32>
    %1527 = arith.addf %1487, %1526 : vector<8x16xf32>
    %1528 = vector.broadcast %1524 : f32 to vector<1x16xf32>
    %1529 = arith.mulf %1326, %1528 : vector<1x16xf32>
    %1530 = arith.addf %1490, %1529 : vector<1x16xf32>
    %1531 = vector.broadcast %1524 : f32 to vector<1x16xf32>
    %1532 = arith.mulf %1328, %1531 : vector<1x16xf32>
    %1533 = arith.addf %1493, %1532 : vector<1x16xf32>
    %c67 = arith.constant 67 : index
    %1534 = memref.load %arg2[%c67] : memref<144xf32, #tpu.memory_space<smem>>
    %1535 = vector.broadcast %1534 : f32 to vector<8x16xf32>
    %1536 = arith.mulf %1317, %1535 : vector<8x16xf32>
    %1537 = arith.addf %1497, %1536 : vector<8x16xf32>
    %1538 = vector.broadcast %1534 : f32 to vector<1x16xf32>
    %1539 = arith.mulf %1326, %1538 : vector<1x16xf32>
    %1540 = arith.addf %1500, %1539 : vector<1x16xf32>
    %1541 = vector.broadcast %1534 : f32 to vector<1x16xf32>
    %1542 = arith.mulf %1328, %1541 : vector<1x16xf32>
    %1543 = arith.addf %1503, %1542 : vector<1x16xf32>
    %c103 = arith.constant 103 : index
    %1544 = memref.load %arg2[%c103] : memref<144xf32, #tpu.memory_space<smem>>
    %1545 = vector.broadcast %1544 : f32 to vector<8x16xf32>
    %1546 = arith.mulf %1317, %1545 : vector<8x16xf32>
    %1547 = arith.addf %1507, %1546 : vector<8x16xf32>
    %1548 = vector.broadcast %1544 : f32 to vector<1x16xf32>
    %1549 = arith.mulf %1326, %1548 : vector<1x16xf32>
    %1550 = arith.addf %1510, %1549 : vector<1x16xf32>
    %1551 = vector.broadcast %1544 : f32 to vector<1x16xf32>
    %1552 = arith.mulf %1328, %1551 : vector<1x16xf32>
    %1553 = arith.addf %1513, %1552 : vector<1x16xf32>
    %c139 = arith.constant 139 : index
    %1554 = memref.load %arg2[%c139] : memref<144xf32, #tpu.memory_space<smem>>
    %1555 = vector.broadcast %1554 : f32 to vector<8x16xf32>
    %1556 = arith.mulf %1317, %1555 : vector<8x16xf32>
    %1557 = arith.addf %1517, %1556 : vector<8x16xf32>
    %1558 = vector.broadcast %1554 : f32 to vector<1x16xf32>
    %1559 = arith.mulf %1326, %1558 : vector<1x16xf32>
    %1560 = arith.addf %1520, %1559 : vector<1x16xf32>
    %1561 = vector.broadcast %1554 : f32 to vector<1x16xf32>
    %1562 = arith.mulf %1328, %1561 : vector<1x16xf32>
    %1563 = arith.addf %1523, %1562 : vector<1x16xf32>
    %c15_i32_213 = arith.constant 15 : i32
    %1564 = tpu.dynamic_rotate %1317 by %c15_i32_213 dim 1 : vector<8x16xf32>, i32 -> vector<8x16xf32>
    %cst_214 = arith.constant 0.000000e+00 : f32
    %1565 = vector.broadcast %cst_214 : f32 to vector<8x16xf32>
    %1566 = arith.select %115, %1564, %1565 : vector<8x16xi1>, vector<8x16xf32>
    %c15_i32_215 = arith.constant 15 : i32
    %1567 = tpu.dynamic_rotate %1326 by %c15_i32_215 dim 1 : vector<1x16xf32>, i32 -> vector<1x16xf32>
    %cst_216 = arith.constant 0.000000e+00 : f32
    %1568 = vector.broadcast %cst_216 : f32 to vector<1x16xf32>
    %1569 = arith.select %121, %1567, %1568 : vector<1x16xi1>, vector<1x16xf32>
    %c15_i32_217 = arith.constant 15 : i32
    %1570 = tpu.dynamic_rotate %1328 by %c15_i32_217 dim 1 : vector<1x16xf32>, i32 -> vector<1x16xf32>
    %cst_218 = arith.constant 0.000000e+00 : f32
    %1571 = vector.broadcast %cst_218 : f32 to vector<1x16xf32>
    %1572 = arith.select %121, %1570, %1571 : vector<1x16xi1>, vector<1x16xf32>
    %c32 = arith.constant 32 : index
    %1573 = memref.load %arg2[%c32] : memref<144xf32, #tpu.memory_space<smem>>
    %1574 = vector.broadcast %1573 : f32 to vector<8x16xf32>
    %1575 = arith.mulf %1566, %1574 : vector<8x16xf32>
    %1576 = arith.addf %1527, %1575 : vector<8x16xf32>
    %1577 = vector.broadcast %1573 : f32 to vector<1x16xf32>
    %1578 = arith.mulf %1569, %1577 : vector<1x16xf32>
    %1579 = arith.addf %1530, %1578 : vector<1x16xf32>
    %1580 = vector.broadcast %1573 : f32 to vector<1x16xf32>
    %1581 = arith.mulf %1572, %1580 : vector<1x16xf32>
    %1582 = arith.addf %1533, %1581 : vector<1x16xf32>
    %c68 = arith.constant 68 : index
    %1583 = memref.load %arg2[%c68] : memref<144xf32, #tpu.memory_space<smem>>
    %1584 = vector.broadcast %1583 : f32 to vector<8x16xf32>
    %1585 = arith.mulf %1566, %1584 : vector<8x16xf32>
    %1586 = arith.addf %1537, %1585 : vector<8x16xf32>
    %1587 = vector.broadcast %1583 : f32 to vector<1x16xf32>
    %1588 = arith.mulf %1569, %1587 : vector<1x16xf32>
    %1589 = arith.addf %1540, %1588 : vector<1x16xf32>
    %1590 = vector.broadcast %1583 : f32 to vector<1x16xf32>
    %1591 = arith.mulf %1572, %1590 : vector<1x16xf32>
    %1592 = arith.addf %1543, %1591 : vector<1x16xf32>
    %c104 = arith.constant 104 : index
    %1593 = memref.load %arg2[%c104] : memref<144xf32, #tpu.memory_space<smem>>
    %1594 = vector.broadcast %1593 : f32 to vector<8x16xf32>
    %1595 = arith.mulf %1566, %1594 : vector<8x16xf32>
    %1596 = arith.addf %1547, %1595 : vector<8x16xf32>
    %1597 = vector.broadcast %1593 : f32 to vector<1x16xf32>
    %1598 = arith.mulf %1569, %1597 : vector<1x16xf32>
    %1599 = arith.addf %1550, %1598 : vector<1x16xf32>
    %1600 = vector.broadcast %1593 : f32 to vector<1x16xf32>
    %1601 = arith.mulf %1572, %1600 : vector<1x16xf32>
    %1602 = arith.addf %1553, %1601 : vector<1x16xf32>
    %c140 = arith.constant 140 : index
    %1603 = memref.load %arg2[%c140] : memref<144xf32, #tpu.memory_space<smem>>
    %1604 = vector.broadcast %1603 : f32 to vector<8x16xf32>
    %1605 = arith.mulf %1566, %1604 : vector<8x16xf32>
    %1606 = arith.addf %1557, %1605 : vector<8x16xf32>
    %1607 = vector.broadcast %1603 : f32 to vector<1x16xf32>
    %1608 = arith.mulf %1569, %1607 : vector<1x16xf32>
    %1609 = arith.addf %1560, %1608 : vector<1x16xf32>
    %1610 = vector.broadcast %1603 : f32 to vector<1x16xf32>
    %1611 = arith.mulf %1572, %1610 : vector<1x16xf32>
    %1612 = arith.addf %1563, %1611 : vector<1x16xf32>
    %c1_i32_219 = arith.constant 1 : i32
    %1613 = tpu.dynamic_rotate %1318 by %c1_i32_219 dim 1 : vector<8x16xf32>, i32 -> vector<8x16xf32>
    %cst_220 = arith.constant 0.000000e+00 : f32
    %1614 = vector.broadcast %cst_220 : f32 to vector<8x16xf32>
    %1615 = arith.select %32, %1613, %1614 : vector<8x16xi1>, vector<8x16xf32>
    %c1_i32_221 = arith.constant 1 : i32
    %1616 = tpu.dynamic_rotate %1327 by %c1_i32_221 dim 1 : vector<1x16xf32>, i32 -> vector<1x16xf32>
    %cst_222 = arith.constant 0.000000e+00 : f32
    %1617 = vector.broadcast %cst_222 : f32 to vector<1x16xf32>
    %1618 = arith.select %38, %1616, %1617 : vector<1x16xi1>, vector<1x16xf32>
    %c1_i32_223 = arith.constant 1 : i32
    %1619 = tpu.dynamic_rotate %1329 by %c1_i32_223 dim 1 : vector<1x16xf32>, i32 -> vector<1x16xf32>
    %cst_224 = arith.constant 0.000000e+00 : f32
    %1620 = vector.broadcast %cst_224 : f32 to vector<1x16xf32>
    %1621 = arith.select %38, %1619, %1620 : vector<1x16xi1>, vector<1x16xf32>
    %c33 = arith.constant 33 : index
    %1622 = memref.load %arg2[%c33] : memref<144xf32, #tpu.memory_space<smem>>
    %1623 = vector.broadcast %1622 : f32 to vector<8x16xf32>
    %1624 = arith.mulf %1615, %1623 : vector<8x16xf32>
    %1625 = arith.addf %1576, %1624 : vector<8x16xf32>
    %1626 = vector.broadcast %1622 : f32 to vector<1x16xf32>
    %1627 = arith.mulf %1618, %1626 : vector<1x16xf32>
    %1628 = arith.addf %1579, %1627 : vector<1x16xf32>
    %1629 = vector.broadcast %1622 : f32 to vector<1x16xf32>
    %1630 = arith.mulf %1621, %1629 : vector<1x16xf32>
    %1631 = arith.addf %1582, %1630 : vector<1x16xf32>
    %c69 = arith.constant 69 : index
    %1632 = memref.load %arg2[%c69] : memref<144xf32, #tpu.memory_space<smem>>
    %1633 = vector.broadcast %1632 : f32 to vector<8x16xf32>
    %1634 = arith.mulf %1615, %1633 : vector<8x16xf32>
    %1635 = arith.addf %1586, %1634 : vector<8x16xf32>
    %1636 = vector.broadcast %1632 : f32 to vector<1x16xf32>
    %1637 = arith.mulf %1618, %1636 : vector<1x16xf32>
    %1638 = arith.addf %1589, %1637 : vector<1x16xf32>
    %1639 = vector.broadcast %1632 : f32 to vector<1x16xf32>
    %1640 = arith.mulf %1621, %1639 : vector<1x16xf32>
    %1641 = arith.addf %1592, %1640 : vector<1x16xf32>
    %c105 = arith.constant 105 : index
    %1642 = memref.load %arg2[%c105] : memref<144xf32, #tpu.memory_space<smem>>
    %1643 = vector.broadcast %1642 : f32 to vector<8x16xf32>
    %1644 = arith.mulf %1615, %1643 : vector<8x16xf32>
    %1645 = arith.addf %1596, %1644 : vector<8x16xf32>
    %1646 = vector.broadcast %1642 : f32 to vector<1x16xf32>
    %1647 = arith.mulf %1618, %1646 : vector<1x16xf32>
    %1648 = arith.addf %1599, %1647 : vector<1x16xf32>
    %1649 = vector.broadcast %1642 : f32 to vector<1x16xf32>
    %1650 = arith.mulf %1621, %1649 : vector<1x16xf32>
    %1651 = arith.addf %1602, %1650 : vector<1x16xf32>
    %c141 = arith.constant 141 : index
    %1652 = memref.load %arg2[%c141] : memref<144xf32, #tpu.memory_space<smem>>
    %1653 = vector.broadcast %1652 : f32 to vector<8x16xf32>
    %1654 = arith.mulf %1615, %1653 : vector<8x16xf32>
    %1655 = arith.addf %1606, %1654 : vector<8x16xf32>
    %1656 = vector.broadcast %1652 : f32 to vector<1x16xf32>
    %1657 = arith.mulf %1618, %1656 : vector<1x16xf32>
    %1658 = arith.addf %1609, %1657 : vector<1x16xf32>
    %1659 = vector.broadcast %1652 : f32 to vector<1x16xf32>
    %1660 = arith.mulf %1621, %1659 : vector<1x16xf32>
    %1661 = arith.addf %1612, %1660 : vector<1x16xf32>
    %c34 = arith.constant 34 : index
    %1662 = memref.load %arg2[%c34] : memref<144xf32, #tpu.memory_space<smem>>
    %1663 = vector.broadcast %1662 : f32 to vector<8x16xf32>
    %1664 = arith.mulf %1318, %1663 : vector<8x16xf32>
    %1665 = arith.addf %1625, %1664 : vector<8x16xf32>
    %1666 = vector.broadcast %1662 : f32 to vector<1x16xf32>
    %1667 = arith.mulf %1327, %1666 : vector<1x16xf32>
    %1668 = arith.addf %1628, %1667 : vector<1x16xf32>
    %1669 = vector.broadcast %1662 : f32 to vector<1x16xf32>
    %1670 = arith.mulf %1329, %1669 : vector<1x16xf32>
    %1671 = arith.addf %1631, %1670 : vector<1x16xf32>
    %c70 = arith.constant 70 : index
    %1672 = memref.load %arg2[%c70] : memref<144xf32, #tpu.memory_space<smem>>
    %1673 = vector.broadcast %1672 : f32 to vector<8x16xf32>
    %1674 = arith.mulf %1318, %1673 : vector<8x16xf32>
    %1675 = arith.addf %1635, %1674 : vector<8x16xf32>
    %1676 = vector.broadcast %1672 : f32 to vector<1x16xf32>
    %1677 = arith.mulf %1327, %1676 : vector<1x16xf32>
    %1678 = arith.addf %1638, %1677 : vector<1x16xf32>
    %1679 = vector.broadcast %1672 : f32 to vector<1x16xf32>
    %1680 = arith.mulf %1329, %1679 : vector<1x16xf32>
    %1681 = arith.addf %1641, %1680 : vector<1x16xf32>
    %c106 = arith.constant 106 : index
    %1682 = memref.load %arg2[%c106] : memref<144xf32, #tpu.memory_space<smem>>
    %1683 = vector.broadcast %1682 : f32 to vector<8x16xf32>
    %1684 = arith.mulf %1318, %1683 : vector<8x16xf32>
    %1685 = arith.addf %1645, %1684 : vector<8x16xf32>
    %1686 = vector.broadcast %1682 : f32 to vector<1x16xf32>
    %1687 = arith.mulf %1327, %1686 : vector<1x16xf32>
    %1688 = arith.addf %1648, %1687 : vector<1x16xf32>
    %1689 = vector.broadcast %1682 : f32 to vector<1x16xf32>
    %1690 = arith.mulf %1329, %1689 : vector<1x16xf32>
    %1691 = arith.addf %1651, %1690 : vector<1x16xf32>
    %c142 = arith.constant 142 : index
    %1692 = memref.load %arg2[%c142] : memref<144xf32, #tpu.memory_space<smem>>
    %1693 = vector.broadcast %1692 : f32 to vector<8x16xf32>
    %1694 = arith.mulf %1318, %1693 : vector<8x16xf32>
    %1695 = arith.addf %1655, %1694 : vector<8x16xf32>
    %1696 = vector.broadcast %1692 : f32 to vector<1x16xf32>
    %1697 = arith.mulf %1327, %1696 : vector<1x16xf32>
    %1698 = arith.addf %1658, %1697 : vector<1x16xf32>
    %1699 = vector.broadcast %1692 : f32 to vector<1x16xf32>
    %1700 = arith.mulf %1329, %1699 : vector<1x16xf32>
    %1701 = arith.addf %1661, %1700 : vector<1x16xf32>
    %c15_i32_225 = arith.constant 15 : i32
    %1702 = tpu.dynamic_rotate %1318 by %c15_i32_225 dim 1 : vector<8x16xf32>, i32 -> vector<8x16xf32>
    %cst_226 = arith.constant 0.000000e+00 : f32
    %1703 = vector.broadcast %cst_226 : f32 to vector<8x16xf32>
    %1704 = arith.select %115, %1702, %1703 : vector<8x16xi1>, vector<8x16xf32>
    %c15_i32_227 = arith.constant 15 : i32
    %1705 = tpu.dynamic_rotate %1327 by %c15_i32_227 dim 1 : vector<1x16xf32>, i32 -> vector<1x16xf32>
    %cst_228 = arith.constant 0.000000e+00 : f32
    %1706 = vector.broadcast %cst_228 : f32 to vector<1x16xf32>
    %1707 = arith.select %121, %1705, %1706 : vector<1x16xi1>, vector<1x16xf32>
    %c15_i32_229 = arith.constant 15 : i32
    %1708 = tpu.dynamic_rotate %1329 by %c15_i32_229 dim 1 : vector<1x16xf32>, i32 -> vector<1x16xf32>
    %cst_230 = arith.constant 0.000000e+00 : f32
    %1709 = vector.broadcast %cst_230 : f32 to vector<1x16xf32>
    %1710 = arith.select %121, %1708, %1709 : vector<1x16xi1>, vector<1x16xf32>
    %c35 = arith.constant 35 : index
    %1711 = memref.load %arg2[%c35] : memref<144xf32, #tpu.memory_space<smem>>
    %1712 = vector.broadcast %1711 : f32 to vector<8x16xf32>
    %1713 = arith.mulf %1704, %1712 : vector<8x16xf32>
    %1714 = arith.addf %1665, %1713 : vector<8x16xf32>
    %1715 = vector.broadcast %1711 : f32 to vector<1x16xf32>
    %1716 = arith.mulf %1707, %1715 : vector<1x16xf32>
    %1717 = arith.addf %1668, %1716 : vector<1x16xf32>
    %1718 = vector.broadcast %1711 : f32 to vector<1x16xf32>
    %1719 = arith.mulf %1710, %1718 : vector<1x16xf32>
    %1720 = arith.addf %1671, %1719 : vector<1x16xf32>
    %c71 = arith.constant 71 : index
    %1721 = memref.load %arg2[%c71] : memref<144xf32, #tpu.memory_space<smem>>
    %1722 = vector.broadcast %1721 : f32 to vector<8x16xf32>
    %1723 = arith.mulf %1704, %1722 : vector<8x16xf32>
    %1724 = arith.addf %1675, %1723 : vector<8x16xf32>
    %1725 = vector.broadcast %1721 : f32 to vector<1x16xf32>
    %1726 = arith.mulf %1707, %1725 : vector<1x16xf32>
    %1727 = arith.addf %1678, %1726 : vector<1x16xf32>
    %1728 = vector.broadcast %1721 : f32 to vector<1x16xf32>
    %1729 = arith.mulf %1710, %1728 : vector<1x16xf32>
    %1730 = arith.addf %1681, %1729 : vector<1x16xf32>
    %c107 = arith.constant 107 : index
    %1731 = memref.load %arg2[%c107] : memref<144xf32, #tpu.memory_space<smem>>
    %1732 = vector.broadcast %1731 : f32 to vector<8x16xf32>
    %1733 = arith.mulf %1704, %1732 : vector<8x16xf32>
    %1734 = arith.addf %1685, %1733 : vector<8x16xf32>
    %1735 = vector.broadcast %1731 : f32 to vector<1x16xf32>
    %1736 = arith.mulf %1707, %1735 : vector<1x16xf32>
    %1737 = arith.addf %1688, %1736 : vector<1x16xf32>
    %1738 = vector.broadcast %1731 : f32 to vector<1x16xf32>
    %1739 = arith.mulf %1710, %1738 : vector<1x16xf32>
    %1740 = arith.addf %1691, %1739 : vector<1x16xf32>
    %c143 = arith.constant 143 : index
    %1741 = memref.load %arg2[%c143] : memref<144xf32, #tpu.memory_space<smem>>
    %1742 = vector.broadcast %1741 : f32 to vector<8x16xf32>
    %1743 = arith.mulf %1704, %1742 : vector<8x16xf32>
    %1744 = arith.addf %1695, %1743 : vector<8x16xf32>
    %1745 = vector.broadcast %1741 : f32 to vector<1x16xf32>
    %1746 = arith.mulf %1707, %1745 : vector<1x16xf32>
    %1747 = arith.addf %1698, %1746 : vector<1x16xf32>
    %1748 = vector.broadcast %1741 : f32 to vector<1x16xf32>
    %1749 = arith.mulf %1710, %1748 : vector<1x16xf32>
    %1750 = arith.addf %1701, %1749 : vector<1x16xf32>
    %c0_231 = arith.constant 0 : index
    %1751 = memref.load %arg3[%c0_231] : memref<4xf32, #tpu.memory_space<smem>>
    %1752 = vector.broadcast %1751 : f32 to vector<8x16xf32>
    %1753 = arith.mulf %1714, %1752 : vector<8x16xf32>
    %1754 = arith.maximumf %1714, %1724 : vector<8x16xf32>
    %1755 = arith.addf %1714, %1724 : vector<8x16xf32>
    %c1_232 = arith.constant 1 : index
    %1756 = memref.load %arg3[%c1_232] : memref<4xf32, #tpu.memory_space<smem>>
    %1757 = vector.broadcast %1756 : f32 to vector<8x16xf32>
    %1758 = arith.mulf %1724, %1757 : vector<8x16xf32>
    %1759 = arith.addf %1753, %1758 : vector<8x16xf32>
    %1760 = arith.maximumf %1754, %1734 : vector<8x16xf32>
    %1761 = arith.addf %1755, %1734 : vector<8x16xf32>
    %c2_233 = arith.constant 2 : index
    %1762 = memref.load %arg3[%c2_233] : memref<4xf32, #tpu.memory_space<smem>>
    %1763 = vector.broadcast %1762 : f32 to vector<8x16xf32>
    %1764 = arith.mulf %1734, %1763 : vector<8x16xf32>
    %1765 = arith.addf %1759, %1764 : vector<8x16xf32>
    %1766 = arith.maximumf %1760, %1744 : vector<8x16xf32>
    %1767 = arith.addf %1761, %1744 : vector<8x16xf32>
    %c3_234 = arith.constant 3 : index
    %1768 = memref.load %arg3[%c3_234] : memref<4xf32, #tpu.memory_space<smem>>
    %1769 = vector.broadcast %1768 : f32 to vector<8x16xf32>
    %1770 = arith.mulf %1744, %1769 : vector<8x16xf32>
    %1771 = arith.addf %1765, %1770 : vector<8x16xf32>
    %cst_235 = arith.constant 2.500000e-01 : f32
    %1772 = vector.broadcast %cst_235 : f32 to vector<8x16xf32>
    %1773 = arith.mulf %1767, %1772 : vector<8x16xf32>
    %c0_236 = arith.constant 0 : index
    %1774 = memref.load %arg3[%c0_236] : memref<4xf32, #tpu.memory_space<smem>>
    %1775 = vector.broadcast %1774 : f32 to vector<1x16xf32>
    %1776 = arith.mulf %1717, %1775 : vector<1x16xf32>
    %1777 = arith.maximumf %1717, %1727 : vector<1x16xf32>
    %1778 = arith.addf %1717, %1727 : vector<1x16xf32>
    %c1_237 = arith.constant 1 : index
    %1779 = memref.load %arg3[%c1_237] : memref<4xf32, #tpu.memory_space<smem>>
    %1780 = vector.broadcast %1779 : f32 to vector<1x16xf32>
    %1781 = arith.mulf %1727, %1780 : vector<1x16xf32>
    %1782 = arith.addf %1776, %1781 : vector<1x16xf32>
    %1783 = arith.maximumf %1777, %1737 : vector<1x16xf32>
    %1784 = arith.addf %1778, %1737 : vector<1x16xf32>
    %c2_238 = arith.constant 2 : index
    %1785 = memref.load %arg3[%c2_238] : memref<4xf32, #tpu.memory_space<smem>>
    %1786 = vector.broadcast %1785 : f32 to vector<1x16xf32>
    %1787 = arith.mulf %1737, %1786 : vector<1x16xf32>
    %1788 = arith.addf %1782, %1787 : vector<1x16xf32>
    %1789 = arith.maximumf %1783, %1747 : vector<1x16xf32>
    %1790 = arith.addf %1784, %1747 : vector<1x16xf32>
    %c3_239 = arith.constant 3 : index
    %1791 = memref.load %arg3[%c3_239] : memref<4xf32, #tpu.memory_space<smem>>
    %1792 = vector.broadcast %1791 : f32 to vector<1x16xf32>
    %1793 = arith.mulf %1747, %1792 : vector<1x16xf32>
    %1794 = arith.addf %1788, %1793 : vector<1x16xf32>
    %cst_240 = arith.constant 2.500000e-01 : f32
    %1795 = vector.broadcast %cst_240 : f32 to vector<1x16xf32>
    %1796 = arith.mulf %1790, %1795 : vector<1x16xf32>
    %1797 = vector.broadcast %1 : f32 to vector<1x16xf32>
    %1798 = arith.mulf %1789, %1797 : vector<1x16xf32>
    %1799 = vector.broadcast %1 : f32 to vector<1x16xf32>
    %1800 = arith.mulf %1796, %1799 : vector<1x16xf32>
    %1801 = vector.broadcast %1 : f32 to vector<1x16xf32>
    %1802 = arith.mulf %1794, %1801 : vector<1x16xf32>
    %c0_241 = arith.constant 0 : index
    %1803 = memref.load %arg3[%c0_241] : memref<4xf32, #tpu.memory_space<smem>>
    %1804 = vector.broadcast %1803 : f32 to vector<1x16xf32>
    %1805 = arith.mulf %1720, %1804 : vector<1x16xf32>
    %1806 = arith.maximumf %1720, %1730 : vector<1x16xf32>
    %1807 = arith.addf %1720, %1730 : vector<1x16xf32>
    %c1_242 = arith.constant 1 : index
    %1808 = memref.load %arg3[%c1_242] : memref<4xf32, #tpu.memory_space<smem>>
    %1809 = vector.broadcast %1808 : f32 to vector<1x16xf32>
    %1810 = arith.mulf %1730, %1809 : vector<1x16xf32>
    %1811 = arith.addf %1805, %1810 : vector<1x16xf32>
    %1812 = arith.maximumf %1806, %1740 : vector<1x16xf32>
    %1813 = arith.addf %1807, %1740 : vector<1x16xf32>
    %c2_243 = arith.constant 2 : index
    %1814 = memref.load %arg3[%c2_243] : memref<4xf32, #tpu.memory_space<smem>>
    %1815 = vector.broadcast %1814 : f32 to vector<1x16xf32>
    %1816 = arith.mulf %1740, %1815 : vector<1x16xf32>
    %1817 = arith.addf %1811, %1816 : vector<1x16xf32>
    %1818 = arith.maximumf %1812, %1750 : vector<1x16xf32>
    %1819 = arith.addf %1813, %1750 : vector<1x16xf32>
    %c3_244 = arith.constant 3 : index
    %1820 = memref.load %arg3[%c3_244] : memref<4xf32, #tpu.memory_space<smem>>
    %1821 = vector.broadcast %1820 : f32 to vector<1x16xf32>
    %1822 = arith.mulf %1750, %1821 : vector<1x16xf32>
    %1823 = arith.addf %1817, %1822 : vector<1x16xf32>
    %cst_245 = arith.constant 2.500000e-01 : f32
    %1824 = vector.broadcast %cst_245 : f32 to vector<1x16xf32>
    %1825 = arith.mulf %1819, %1824 : vector<1x16xf32>
    %1826 = vector.broadcast %3 : f32 to vector<1x16xf32>
    %1827 = arith.mulf %1818, %1826 : vector<1x16xf32>
    %1828 = vector.broadcast %3 : f32 to vector<1x16xf32>
    %1829 = arith.mulf %1825, %1828 : vector<1x16xf32>
    %1830 = vector.broadcast %3 : f32 to vector<1x16xf32>
    %1831 = arith.mulf %1823, %1830 : vector<1x16xf32>
    %c1_i32_246 = arith.constant 1 : i32
    %1832 = tpu.dynamic_rotate %1766 by %c1_i32_246 dim 0 : vector<8x16xf32>, i32 -> vector<8x16xf32>
    %1833 = vector.shape_cast %1798 : vector<1x16xf32> to vector<1x16xf32>
    %1834 = vector.broadcast %1833 : vector<1x16xf32> to vector<8x16xf32>
    %1835 = arith.select %24, %1834, %1832 : vector<8x16xi1>, vector<8x16xf32>
    %c7_i32 = arith.constant 7 : i32
    %1836 = tpu.dynamic_rotate %1766 by %c7_i32 dim 0 : vector<8x16xf32>, i32 -> vector<8x16xf32>
    %1837 = tpu.iota {dimensions = array<i32: 0>} : vector<8x16xi32>
    %c7_i32_247 = arith.constant 7 : i32
    %1838 = vector.broadcast %c7_i32_247 : i32 to vector<8x16xi32>
    %1839 = arith.cmpi eq, %1837, %1838 : vector<8x16xi32>
    %1840 = vector.shape_cast %1827 : vector<1x16xf32> to vector<1x16xf32>
    %1841 = vector.broadcast %1840 : vector<1x16xf32> to vector<8x16xf32>
    %1842 = arith.select %1839, %1841, %1836 : vector<8x16xi1>, vector<8x16xf32>
    %c2_i32 = arith.constant 2 : i32
    %1843 = tpu.dynamic_rotate %1835 by %c2_i32 dim 1 : vector<8x16xf32>, i32 -> vector<8x16xf32>
    %1844 = tpu.iota {dimensions = array<i32: 1>} : vector<8x16xi32>
    %c2_i32_248 = arith.constant 2 : i32
    %1845 = vector.broadcast %c2_i32_248 : i32 to vector<8x16xi32>
    %1846 = arith.cmpi sge, %1844, %1845 : vector<8x16xi32>
    %cst_249 = arith.constant 0.000000e+00 : f32
    %1847 = vector.broadcast %cst_249 : f32 to vector<8x16xf32>
    %1848 = arith.select %1846, %1843, %1847 : vector<8x16xi1>, vector<8x16xf32>
    %c0_250 = arith.constant 0 : index
    %1849 = memref.load %arg4[%c0_250] : memref<27xf32, #tpu.memory_space<smem>>
    %1850 = vector.broadcast %1849 : f32 to vector<8x16xf32>
    %1851 = arith.mulf %1848, %1850 : vector<8x16xf32>
    %c1_251 = arith.constant 1 : index
    %1852 = memref.load %arg4[%c1_251] : memref<27xf32, #tpu.memory_space<smem>>
    %1853 = vector.broadcast %1852 : f32 to vector<8x16xf32>
    %1854 = arith.mulf %1835, %1853 : vector<8x16xf32>
    %1855 = arith.addf %1851, %1854 : vector<8x16xf32>
    %c14_i32 = arith.constant 14 : i32
    %1856 = tpu.dynamic_rotate %1835 by %c14_i32 dim 1 : vector<8x16xf32>, i32 -> vector<8x16xf32>
    %1857 = tpu.iota {dimensions = array<i32: 1>} : vector<8x16xi32>
    %c14_i32_252 = arith.constant 14 : i32
    %1858 = vector.broadcast %c14_i32_252 : i32 to vector<8x16xi32>
    %1859 = arith.cmpi slt, %1857, %1858 : vector<8x16xi32>
    %cst_253 = arith.constant 0.000000e+00 : f32
    %1860 = vector.broadcast %cst_253 : f32 to vector<8x16xf32>
    %1861 = arith.select %1859, %1856, %1860 : vector<8x16xi1>, vector<8x16xf32>
    %c2_254 = arith.constant 2 : index
    %1862 = memref.load %arg4[%c2_254] : memref<27xf32, #tpu.memory_space<smem>>
    %1863 = vector.broadcast %1862 : f32 to vector<8x16xf32>
    %1864 = arith.mulf %1861, %1863 : vector<8x16xf32>
    %1865 = arith.addf %1855, %1864 : vector<8x16xf32>
    %c2_i32_255 = arith.constant 2 : i32
    %1866 = tpu.dynamic_rotate %1766 by %c2_i32_255 dim 1 : vector<8x16xf32>, i32 -> vector<8x16xf32>
    %cst_256 = arith.constant 0.000000e+00 : f32
    %1867 = vector.broadcast %cst_256 : f32 to vector<8x16xf32>
    %1868 = arith.select %1846, %1866, %1867 : vector<8x16xi1>, vector<8x16xf32>
    %c3_257 = arith.constant 3 : index
    %1869 = memref.load %arg4[%c3_257] : memref<27xf32, #tpu.memory_space<smem>>
    %1870 = vector.broadcast %1869 : f32 to vector<8x16xf32>
    %1871 = arith.mulf %1868, %1870 : vector<8x16xf32>
    %1872 = arith.addf %1865, %1871 : vector<8x16xf32>
    %c4_258 = arith.constant 4 : index
    %1873 = memref.load %arg4[%c4_258] : memref<27xf32, #tpu.memory_space<smem>>
    %1874 = vector.broadcast %1873 : f32 to vector<8x16xf32>
    %1875 = arith.mulf %1766, %1874 : vector<8x16xf32>
    %1876 = arith.addf %1872, %1875 : vector<8x16xf32>
    %c14_i32_259 = arith.constant 14 : i32
    %1877 = tpu.dynamic_rotate %1766 by %c14_i32_259 dim 1 : vector<8x16xf32>, i32 -> vector<8x16xf32>
    %cst_260 = arith.constant 0.000000e+00 : f32
    %1878 = vector.broadcast %cst_260 : f32 to vector<8x16xf32>
    %1879 = arith.select %1859, %1877, %1878 : vector<8x16xi1>, vector<8x16xf32>
    %c5_261 = arith.constant 5 : index
    %1880 = memref.load %arg4[%c5_261] : memref<27xf32, #tpu.memory_space<smem>>
    %1881 = vector.broadcast %1880 : f32 to vector<8x16xf32>
    %1882 = arith.mulf %1879, %1881 : vector<8x16xf32>
    %1883 = arith.addf %1876, %1882 : vector<8x16xf32>
    %c2_i32_262 = arith.constant 2 : i32
    %1884 = tpu.dynamic_rotate %1842 by %c2_i32_262 dim 1 : vector<8x16xf32>, i32 -> vector<8x16xf32>
    %cst_263 = arith.constant 0.000000e+00 : f32
    %1885 = vector.broadcast %cst_263 : f32 to vector<8x16xf32>
    %1886 = arith.select %1846, %1884, %1885 : vector<8x16xi1>, vector<8x16xf32>
    %c6_264 = arith.constant 6 : index
    %1887 = memref.load %arg4[%c6_264] : memref<27xf32, #tpu.memory_space<smem>>
    %1888 = vector.broadcast %1887 : f32 to vector<8x16xf32>
    %1889 = arith.mulf %1886, %1888 : vector<8x16xf32>
    %1890 = arith.addf %1883, %1889 : vector<8x16xf32>
    %c7_265 = arith.constant 7 : index
    %1891 = memref.load %arg4[%c7_265] : memref<27xf32, #tpu.memory_space<smem>>
    %1892 = vector.broadcast %1891 : f32 to vector<8x16xf32>
    %1893 = arith.mulf %1842, %1892 : vector<8x16xf32>
    %1894 = arith.addf %1890, %1893 : vector<8x16xf32>
    %c14_i32_266 = arith.constant 14 : i32
    %1895 = tpu.dynamic_rotate %1842 by %c14_i32_266 dim 1 : vector<8x16xf32>, i32 -> vector<8x16xf32>
    %cst_267 = arith.constant 0.000000e+00 : f32
    %1896 = vector.broadcast %cst_267 : f32 to vector<8x16xf32>
    %1897 = arith.select %1859, %1895, %1896 : vector<8x16xi1>, vector<8x16xf32>
    %c8_268 = arith.constant 8 : index
    %1898 = memref.load %arg4[%c8_268] : memref<27xf32, #tpu.memory_space<smem>>
    %1899 = vector.broadcast %1898 : f32 to vector<8x16xf32>
    %1900 = arith.mulf %1897, %1899 : vector<8x16xf32>
    %1901 = arith.addf %1894, %1900 : vector<8x16xf32>
    %c1_i32_269 = arith.constant 1 : i32
    %1902 = tpu.dynamic_rotate %1773 by %c1_i32_269 dim 0 : vector<8x16xf32>, i32 -> vector<8x16xf32>
    %1903 = vector.shape_cast %1800 : vector<1x16xf32> to vector<1x16xf32>
    %1904 = vector.broadcast %1903 : vector<1x16xf32> to vector<8x16xf32>
    %1905 = arith.select %24, %1904, %1902 : vector<8x16xi1>, vector<8x16xf32>
    %c7_i32_270 = arith.constant 7 : i32
    %1906 = tpu.dynamic_rotate %1773 by %c7_i32_270 dim 0 : vector<8x16xf32>, i32 -> vector<8x16xf32>
    %1907 = vector.shape_cast %1829 : vector<1x16xf32> to vector<1x16xf32>
    %1908 = vector.broadcast %1907 : vector<1x16xf32> to vector<8x16xf32>
    %1909 = arith.select %1839, %1908, %1906 : vector<8x16xi1>, vector<8x16xf32>
    %c2_i32_271 = arith.constant 2 : i32
    %1910 = tpu.dynamic_rotate %1905 by %c2_i32_271 dim 1 : vector<8x16xf32>, i32 -> vector<8x16xf32>
    %cst_272 = arith.constant 0.000000e+00 : f32
    %1911 = vector.broadcast %cst_272 : f32 to vector<8x16xf32>
    %1912 = arith.select %1846, %1910, %1911 : vector<8x16xi1>, vector<8x16xf32>
    %c9_273 = arith.constant 9 : index
    %1913 = memref.load %arg4[%c9_273] : memref<27xf32, #tpu.memory_space<smem>>
    %1914 = vector.broadcast %1913 : f32 to vector<8x16xf32>
    %1915 = arith.mulf %1912, %1914 : vector<8x16xf32>
    %1916 = arith.addf %1901, %1915 : vector<8x16xf32>
    %c10_274 = arith.constant 10 : index
    %1917 = memref.load %arg4[%c10_274] : memref<27xf32, #tpu.memory_space<smem>>
    %1918 = vector.broadcast %1917 : f32 to vector<8x16xf32>
    %1919 = arith.mulf %1905, %1918 : vector<8x16xf32>
    %1920 = arith.addf %1916, %1919 : vector<8x16xf32>
    %c14_i32_275 = arith.constant 14 : i32
    %1921 = tpu.dynamic_rotate %1905 by %c14_i32_275 dim 1 : vector<8x16xf32>, i32 -> vector<8x16xf32>
    %cst_276 = arith.constant 0.000000e+00 : f32
    %1922 = vector.broadcast %cst_276 : f32 to vector<8x16xf32>
    %1923 = arith.select %1859, %1921, %1922 : vector<8x16xi1>, vector<8x16xf32>
    %c11_277 = arith.constant 11 : index
    %1924 = memref.load %arg4[%c11_277] : memref<27xf32, #tpu.memory_space<smem>>
    %1925 = vector.broadcast %1924 : f32 to vector<8x16xf32>
    %1926 = arith.mulf %1923, %1925 : vector<8x16xf32>
    %1927 = arith.addf %1920, %1926 : vector<8x16xf32>
    %c2_i32_278 = arith.constant 2 : i32
    %1928 = tpu.dynamic_rotate %1773 by %c2_i32_278 dim 1 : vector<8x16xf32>, i32 -> vector<8x16xf32>
    %cst_279 = arith.constant 0.000000e+00 : f32
    %1929 = vector.broadcast %cst_279 : f32 to vector<8x16xf32>
    %1930 = arith.select %1846, %1928, %1929 : vector<8x16xi1>, vector<8x16xf32>
    %c12_280 = arith.constant 12 : index
    %1931 = memref.load %arg4[%c12_280] : memref<27xf32, #tpu.memory_space<smem>>
    %1932 = vector.broadcast %1931 : f32 to vector<8x16xf32>
    %1933 = arith.mulf %1930, %1932 : vector<8x16xf32>
    %1934 = arith.addf %1927, %1933 : vector<8x16xf32>
    %c13_281 = arith.constant 13 : index
    %1935 = memref.load %arg4[%c13_281] : memref<27xf32, #tpu.memory_space<smem>>
    %1936 = vector.broadcast %1935 : f32 to vector<8x16xf32>
    %1937 = arith.mulf %1773, %1936 : vector<8x16xf32>
    %1938 = arith.addf %1934, %1937 : vector<8x16xf32>
    %c14_i32_282 = arith.constant 14 : i32
    %1939 = tpu.dynamic_rotate %1773 by %c14_i32_282 dim 1 : vector<8x16xf32>, i32 -> vector<8x16xf32>
    %cst_283 = arith.constant 0.000000e+00 : f32
    %1940 = vector.broadcast %cst_283 : f32 to vector<8x16xf32>
    %1941 = arith.select %1859, %1939, %1940 : vector<8x16xi1>, vector<8x16xf32>
    %c14_284 = arith.constant 14 : index
    %1942 = memref.load %arg4[%c14_284] : memref<27xf32, #tpu.memory_space<smem>>
    %1943 = vector.broadcast %1942 : f32 to vector<8x16xf32>
    %1944 = arith.mulf %1941, %1943 : vector<8x16xf32>
    %1945 = arith.addf %1938, %1944 : vector<8x16xf32>
    %c2_i32_285 = arith.constant 2 : i32
    %1946 = tpu.dynamic_rotate %1909 by %c2_i32_285 dim 1 : vector<8x16xf32>, i32 -> vector<8x16xf32>
    %cst_286 = arith.constant 0.000000e+00 : f32
    %1947 = vector.broadcast %cst_286 : f32 to vector<8x16xf32>
    %1948 = arith.select %1846, %1946, %1947 : vector<8x16xi1>, vector<8x16xf32>
    %c15_287 = arith.constant 15 : index
    %1949 = memref.load %arg4[%c15_287] : memref<27xf32, #tpu.memory_space<smem>>
    %1950 = vector.broadcast %1949 : f32 to vector<8x16xf32>
    %1951 = arith.mulf %1948, %1950 : vector<8x16xf32>
    %1952 = arith.addf %1945, %1951 : vector<8x16xf32>
    %c16_288 = arith.constant 16 : index
    %1953 = memref.load %arg4[%c16_288] : memref<27xf32, #tpu.memory_space<smem>>
    %1954 = vector.broadcast %1953 : f32 to vector<8x16xf32>
    %1955 = arith.mulf %1909, %1954 : vector<8x16xf32>
    %1956 = arith.addf %1952, %1955 : vector<8x16xf32>
    %c14_i32_289 = arith.constant 14 : i32
    %1957 = tpu.dynamic_rotate %1909 by %c14_i32_289 dim 1 : vector<8x16xf32>, i32 -> vector<8x16xf32>
    %cst_290 = arith.constant 0.000000e+00 : f32
    %1958 = vector.broadcast %cst_290 : f32 to vector<8x16xf32>
    %1959 = arith.select %1859, %1957, %1958 : vector<8x16xi1>, vector<8x16xf32>
    %c17_291 = arith.constant 17 : index
    %1960 = memref.load %arg4[%c17_291] : memref<27xf32, #tpu.memory_space<smem>>
    %1961 = vector.broadcast %1960 : f32 to vector<8x16xf32>
    %1962 = arith.mulf %1959, %1961 : vector<8x16xf32>
    %1963 = arith.addf %1956, %1962 : vector<8x16xf32>
    %c1_i32_292 = arith.constant 1 : i32
    %1964 = tpu.dynamic_rotate %1771 by %c1_i32_292 dim 0 : vector<8x16xf32>, i32 -> vector<8x16xf32>
    %1965 = vector.shape_cast %1802 : vector<1x16xf32> to vector<1x16xf32>
    %1966 = vector.broadcast %1965 : vector<1x16xf32> to vector<8x16xf32>
    %1967 = arith.select %24, %1966, %1964 : vector<8x16xi1>, vector<8x16xf32>
    %c7_i32_293 = arith.constant 7 : i32
    %1968 = tpu.dynamic_rotate %1771 by %c7_i32_293 dim 0 : vector<8x16xf32>, i32 -> vector<8x16xf32>
    %1969 = vector.shape_cast %1831 : vector<1x16xf32> to vector<1x16xf32>
    %1970 = vector.broadcast %1969 : vector<1x16xf32> to vector<8x16xf32>
    %1971 = arith.select %1839, %1970, %1968 : vector<8x16xi1>, vector<8x16xf32>
    %c2_i32_294 = arith.constant 2 : i32
    %1972 = tpu.dynamic_rotate %1967 by %c2_i32_294 dim 1 : vector<8x16xf32>, i32 -> vector<8x16xf32>
    %cst_295 = arith.constant 0.000000e+00 : f32
    %1973 = vector.broadcast %cst_295 : f32 to vector<8x16xf32>
    %1974 = arith.select %1846, %1972, %1973 : vector<8x16xi1>, vector<8x16xf32>
    %c18_296 = arith.constant 18 : index
    %1975 = memref.load %arg4[%c18_296] : memref<27xf32, #tpu.memory_space<smem>>
    %1976 = vector.broadcast %1975 : f32 to vector<8x16xf32>
    %1977 = arith.mulf %1974, %1976 : vector<8x16xf32>
    %1978 = arith.addf %1963, %1977 : vector<8x16xf32>
    %c19_297 = arith.constant 19 : index
    %1979 = memref.load %arg4[%c19_297] : memref<27xf32, #tpu.memory_space<smem>>
    %1980 = vector.broadcast %1979 : f32 to vector<8x16xf32>
    %1981 = arith.mulf %1967, %1980 : vector<8x16xf32>
    %1982 = arith.addf %1978, %1981 : vector<8x16xf32>
    %c14_i32_298 = arith.constant 14 : i32
    %1983 = tpu.dynamic_rotate %1967 by %c14_i32_298 dim 1 : vector<8x16xf32>, i32 -> vector<8x16xf32>
    %cst_299 = arith.constant 0.000000e+00 : f32
    %1984 = vector.broadcast %cst_299 : f32 to vector<8x16xf32>
    %1985 = arith.select %1859, %1983, %1984 : vector<8x16xi1>, vector<8x16xf32>
    %c20_300 = arith.constant 20 : index
    %1986 = memref.load %arg4[%c20_300] : memref<27xf32, #tpu.memory_space<smem>>
    %1987 = vector.broadcast %1986 : f32 to vector<8x16xf32>
    %1988 = arith.mulf %1985, %1987 : vector<8x16xf32>
    %1989 = arith.addf %1982, %1988 : vector<8x16xf32>
    %c2_i32_301 = arith.constant 2 : i32
    %1990 = tpu.dynamic_rotate %1771 by %c2_i32_301 dim 1 : vector<8x16xf32>, i32 -> vector<8x16xf32>
    %cst_302 = arith.constant 0.000000e+00 : f32
    %1991 = vector.broadcast %cst_302 : f32 to vector<8x16xf32>
    %1992 = arith.select %1846, %1990, %1991 : vector<8x16xi1>, vector<8x16xf32>
    %c21_303 = arith.constant 21 : index
    %1993 = memref.load %arg4[%c21_303] : memref<27xf32, #tpu.memory_space<smem>>
    %1994 = vector.broadcast %1993 : f32 to vector<8x16xf32>
    %1995 = arith.mulf %1992, %1994 : vector<8x16xf32>
    %1996 = arith.addf %1989, %1995 : vector<8x16xf32>
    %c22_304 = arith.constant 22 : index
    %1997 = memref.load %arg4[%c22_304] : memref<27xf32, #tpu.memory_space<smem>>
    %1998 = vector.broadcast %1997 : f32 to vector<8x16xf32>
    %1999 = arith.mulf %1771, %1998 : vector<8x16xf32>
    %2000 = arith.addf %1996, %1999 : vector<8x16xf32>
    %c14_i32_305 = arith.constant 14 : i32
    %2001 = tpu.dynamic_rotate %1771 by %c14_i32_305 dim 1 : vector<8x16xf32>, i32 -> vector<8x16xf32>
    %cst_306 = arith.constant 0.000000e+00 : f32
    %2002 = vector.broadcast %cst_306 : f32 to vector<8x16xf32>
    %2003 = arith.select %1859, %2001, %2002 : vector<8x16xi1>, vector<8x16xf32>
    %c23_307 = arith.constant 23 : index
    %2004 = memref.load %arg4[%c23_307] : memref<27xf32, #tpu.memory_space<smem>>
    %2005 = vector.broadcast %2004 : f32 to vector<8x16xf32>
    %2006 = arith.mulf %2003, %2005 : vector<8x16xf32>
    %2007 = arith.addf %2000, %2006 : vector<8x16xf32>
    %c2_i32_308 = arith.constant 2 : i32
    %2008 = tpu.dynamic_rotate %1971 by %c2_i32_308 dim 1 : vector<8x16xf32>, i32 -> vector<8x16xf32>
    %cst_309 = arith.constant 0.000000e+00 : f32
    %2009 = vector.broadcast %cst_309 : f32 to vector<8x16xf32>
    %2010 = arith.select %1846, %2008, %2009 : vector<8x16xi1>, vector<8x16xf32>
    %c24_310 = arith.constant 24 : index
    %2011 = memref.load %arg4[%c24_310] : memref<27xf32, #tpu.memory_space<smem>>
    %2012 = vector.broadcast %2011 : f32 to vector<8x16xf32>
    %2013 = arith.mulf %2010, %2012 : vector<8x16xf32>
    %2014 = arith.addf %2007, %2013 : vector<8x16xf32>
    %c25_311 = arith.constant 25 : index
    %2015 = memref.load %arg4[%c25_311] : memref<27xf32, #tpu.memory_space<smem>>
    %2016 = vector.broadcast %2015 : f32 to vector<8x16xf32>
    %2017 = arith.mulf %1971, %2016 : vector<8x16xf32>
    %2018 = arith.addf %2014, %2017 : vector<8x16xf32>
    %c14_i32_312 = arith.constant 14 : i32
    %2019 = tpu.dynamic_rotate %1971 by %c14_i32_312 dim 1 : vector<8x16xf32>, i32 -> vector<8x16xf32>
    %cst_313 = arith.constant 0.000000e+00 : f32
    %2020 = vector.broadcast %cst_313 : f32 to vector<8x16xf32>
    %2021 = arith.select %1859, %2019, %2020 : vector<8x16xi1>, vector<8x16xf32>
    %c26_314 = arith.constant 26 : index
    %2022 = memref.load %arg4[%c26_314] : memref<27xf32, #tpu.memory_space<smem>>
    %2023 = vector.broadcast %2022 : f32 to vector<8x16xf32>
    %2024 = arith.mulf %2021, %2023 : vector<8x16xf32>
    %2025 = arith.addf %2018, %2024 : vector<8x16xf32>
    %2026 = tpu.iota {dimensions = array<i32: 0>} : vector<16x8xi32>
    %2027 = tpu.iota {dimensions = array<i32: 1>} : vector<16x8xi32>
    %c2_i32_315 = arith.constant 2 : i32
    %2028 = vector.broadcast %c2_i32_315 : i32 to vector<16x8xi32>
    %2029 = arith.muli %2028, %2027 : vector<16x8xi32>
    %2030 = arith.cmpi eq, %2026, %2029 : vector<16x8xi32>
    %2031 = arith.extui %2030 : vector<16x8xi1> to vector<16x8xi32>
    %2032 = arith.sitofp %2031 : vector<16x8xi32> to vector<16x8xf32>
    %cst_316 = arith.constant dense<0.000000e+00> : vector<8x8xf32>
    %2033 = tpu.matmul %2025, %2032, %cst_316 {dimension_numbers = #tpu.dot_dimension_numbers<[1], [0], [0], [1], [0, 0, 1, 1], [], []>} : vector<8x16xf32>, vector<16x8xf32>, vector<8x8xf32> -> vector<8x8xf32>
    %2034 = arith.negf %2033 : vector<8x8xf32>
    %2035 = math.exp %2034 : vector<8x8xf32>
    %cst_317 = arith.constant 1.000000e+00 : f32
    %2036 = vector.broadcast %cst_317 : f32 to vector<8x8xf32>
    %2037 = arith.addf %2036, %2035 : vector<8x8xf32>
    %2038 = arith.divf %2036, %2037 : vector<8x8xf32>
    %c0_318 = arith.constant 0 : index
    %c0_319 = arith.constant 0 : index
    %c0_320 = arith.constant 0 : index
    %c0_321 = arith.constant 0 : index
    %2039 = vector.load %arg9[%c0_318, %c0_319, %c0_320, %c0_321] : memref<1x4x8x8xf32, #tpu.memory_space<vmem>>, vector<1x4x8x8xf32>
    %2040 = vector.shape_cast %2039 : vector<1x4x8x8xf32> to vector<4x8x8xf32>
    %cst_322 = arith.constant 1.000000e+00 : f32
    %2041 = vector.broadcast %cst_322 : f32 to vector<8x8xf32>
    %2042 = arith.addf %2038, %2041 : vector<8x8xf32>
    %2043 = vector.shape_cast %2042 : vector<8x8xf32> to vector<1x8x8xf32>
    %2044 = vector.broadcast %2043 : vector<1x8x8xf32> to vector<4x8x8xf32>
    %2045 = arith.mulf %2040, %2044 : vector<4x8x8xf32>
    %c0_323 = arith.constant 0 : index
    %c0_324 = arith.constant 0 : index
    %c0_325 = arith.constant 0 : index
    %c0_326 = arith.constant 0 : index
    %2046 = vector.load %arg10[%c0_323, %c0_324, %c0_325, %c0_326] : memref<1x4x8x8xf32, #tpu.memory_space<vmem>>, vector<1x4x8x8xf32>
    %2047 = vector.shape_cast %2046 : vector<1x4x8x8xf32> to vector<4x8x8xf32>
    %2048 = vector.shape_cast %2045 : vector<4x8x8xf32> to vector<1x4x8x8xf32>
    tpu.vector_store %arg10[%c0_323, %c0_324, %c0_325, %c0_326], %2048 {strides = array<i32>} : memref<1x4x8x8xf32, #tpu.memory_space<vmem>>, vector<1x4x8x8xf32>,
    return
  }
  func.func @transform_0(%arg0: i32, %arg1: i32) -> i32 {
    %c0_i32 = arith.constant 0 : i32
    %c0_i32_0 = arith.constant 0 : i32
    return %c0_i32 : i32
  }
  func.func @transform_1(%arg0: i32, %arg1: i32) -> i32 {
    %c0_i32 = arith.constant 0 : i32
    %c0_i32_0 = arith.constant 0 : i32
    return %c0_i32 : i32
  }
  func.func @transform_2(%arg0: i32, %arg1: i32) -> i32 {
    %c0_i32 = arith.constant 0 : i32
    %c0_i32_0 = arith.constant 0 : i32
    return %c0_i32 : i32
  }
  func.func @transform_3(%arg0: i32, %arg1: i32) -> (i32, i32, i32, i32, i32) {
    %c8_i32 = arith.constant 8 : i32
    %0 = arith.muli %arg1, %c8_i32 : i32
    %c2_i32 = arith.constant 2 : i32
    %1 = arith.subi %0, %c2_i32 : i32
    %c0_i32 = arith.constant 0 : i32
    %2 = arith.maxsi %1, %c0_i32 : i32
    %c0_i32_0 = arith.constant 0 : i32
    %c0_i32_1 = arith.constant 0 : i32
    %c0_i32_2 = arith.constant 0 : i32
    %c0_i32_3 = arith.constant 0 : i32
    return %arg0, %c0_i32_0, %2, %c0_i32_1, %c0_i32_2 : i32, i32, i32, i32, i32
  }
  func.func @transform_4(%arg0: i32, %arg1: i32) -> (i32, i32, i32, i32, i32) {
    %c8_i32 = arith.constant 8 : i32
    %0 = arith.muli %arg1, %c8_i32 : i32
    %c1_i32 = arith.constant 1 : i32
    %1 = arith.subi %0, %c1_i32 : i32
    %c0_i32 = arith.constant 0 : i32
    %2 = arith.maxsi %1, %c0_i32 : i32
    %c0_i32_0 = arith.constant 0 : i32
    %c0_i32_1 = arith.constant 0 : i32
    %c0_i32_2 = arith.constant 0 : i32
    %c0_i32_3 = arith.constant 0 : i32
    return %arg0, %c0_i32_0, %2, %c0_i32_1, %c0_i32_2 : i32, i32, i32, i32, i32
  }
  func.func @transform_5(%arg0: i32, %arg1: i32) -> (i32, i32, i32, i32) {
    %c0_i32 = arith.constant 0 : i32
    %c0_i32_0 = arith.constant 0 : i32
    %c0_i32_1 = arith.constant 0 : i32
    return %arg0, %c0_i32, %arg1, %c0_i32_0 : i32, i32, i32, i32
  }
  func.func @transform_6(%arg0: i32, %arg1: i32) -> (i32, i32, i32, i32, i32) {
    %c8_i32 = arith.constant 8 : i32
    %0 = arith.muli %arg1, %c8_i32 : i32
    %c8_i32_0 = arith.constant 8 : i32
    %1 = arith.addi %0, %c8_i32_0 : i32
    %c7_i32 = arith.constant 7 : i32
    %2 = arith.minsi %1, %c7_i32 : i32
    %c0_i32 = arith.constant 0 : i32
    %c0_i32_1 = arith.constant 0 : i32
    %c0_i32_2 = arith.constant 0 : i32
    %c0_i32_3 = arith.constant 0 : i32
    return %arg0, %c0_i32, %2, %c0_i32_1, %c0_i32_2 : i32, i32, i32, i32, i32
  }
  func.func @transform_7(%arg0: i32, %arg1: i32) -> (i32, i32, i32, i32) {
    %c0_i32 = arith.constant 0 : i32
    %c0_i32_0 = arith.constant 0 : i32
    %c0_i32_1 = arith.constant 0 : i32
    return %arg0, %c0_i32, %arg1, %c0_i32_0 : i32, i32, i32, i32
  }
  func.func @transform_8(%arg0: i32, %arg1: i32) -> (i32, i32, i32, i32) {
    %c0_i32 = arith.constant 0 : i32
    %c0_i32_0 = arith.constant 0 : i32
    %c0_i32_1 = arith.constant 0 : i32
    return %arg0, %c0_i32, %arg1, %c0_i32_0 : i32, i32, i32, i32
  }
}

</mosaic_0001>

<llo_original>
// kernel: _cla_forward.1
$region0: #{_cla_forward.1}
  #allocation0 [shape = 'u32[]', space=smem, size = 0x4, offset = 0x4, fixed_abs, tag = 'smem constant byte address 0x4 - core index']
  #allocation1 [shape = 'u32[144,128]{1,0:T(1,128)}', space=vmem, size = 0x12000, scoped, tag = 'internal scratch']
  %s0 = inlined_call_operand.vmem [shape: f32[144], index: 0, kind: input, shape index: {}]
  %s1 = inlined_call_operand.vmem [shape: f32[4], index: 1, kind: input, shape index: {}]
  %s2 = inlined_call_operand.vmem [shape: f32[27], index: 2, kind: input, shape index: {}]
  %s3 = inlined_call_operand.vmem [shape: f32[2,4,8,2,16], index: 3, kind: input, shape index: {}, may-alias: {3,4,6}]
  %s4 = inlined_call_operand.vmem [shape: f32[2,4,8,2,16], index: 4, kind: input, shape index: {}, may-alias: {3,4,6}]
  %s5 = inlined_call_operand.vmem [shape: f32[2,4,8,32], index: 5, kind: input, shape index: {}]
  %s6 = inlined_call_operand.vmem [shape: f32[2,4,8,2,16], index: 6, kind: input, shape index: {}, may-alias: {3,4,6}]
  %s7 = inlined_call_operand.vmem [shape: f32[2,4,8,8], index: 7, kind: input, shape index: {}]
  %s8 = inlined_call_operand.hbm [shape: f32[2,4,8,8], index: 8, kind: output, shape index: {}]
  %s9 = sld [smem:[#allocation0]]
  $region200: #{_cla_forward.1} parent=0
    _
  %s11 = ssub.s32 1, %s9
  %s12 = scalar_select 0, %s11, %s9
  $region1: #{_cla_forward.1} parent=0
    #allocation2 [shape = 'u8[1024]{0}', space=smem, size = 0x400, scoped, tag = 'input window, operand 0, single buffered']
    #allocation3 [shape = 's32[2]{0}', space=sflag, size = 0x8, scoped, tag = 'scoped memory for _cla_forward.1']
    #allocation4 [shape = 's32[2]{0}', space=sflag, size = 0x8, scoped, tag = 'scoped memory for _cla_forward.1']
    #allocation5 [shape = 'u8[512]{0}', space=smem, size = 0x200, scoped, tag = 'input window, operand 1, single buffered']
    #allocation6 [shape = 's32[1]{0}', space=sflag, size = 0x4, scoped, tag = 'scoped memory for _cla_forward.1']
    #allocation7 [shape = 'u8[512]{0}', space=smem, size = 0x200, scoped, tag = 'input window, operand 2, single buffered']
    #allocation8 [shape = 'u8[8192]{0}', space=vmem, size = 0x2000, scoped, tag = 'input window, operand 3']
    #allocation9 [shape = 'u8[8192]{0}', space=vmem, size = 0x2000, scoped, tag = 'input window, operand 4']
    #allocation10 [shape = 'u8[8192]{0}', space=vmem, size = 0x2000, scoped, tag = 'input window, operand 6']
    #allocation11 [shape = 'u8[32768]{0}', space=vmem, size = 0x8000, scoped, tag = 'output window, operand 0']
    %13 = vsyncpa [#allocation4], 0
    %14 = vsyncpa [#allocation6], 0
    %15 = vsyncpa [#allocation3], 0
    %s16 = scalar_lea.sflag [#allocation3], 1
    %17 = vsyncpa %s16, 0
    loop: start=0, step=1, limit=4
    $region2: #{_cla_forward.1} parent=1 // loop_pre_header
      _
    $region3: #{_cla_forward.1} parent=1 // loop_header
      %s19 = sphi 0, %s23
      %p20 = scmp.ge.s32.totalorder %s19, 4
      %s26 = sphi 0, %s38
      %s27 = sphi 0, %s34
      %s28 = sphi 0, %s26
      %s29 = sphi 0, %s27
      %s30 = sphi 0, %s28
      %s31 = sphi 0, %s29
      %s39 = sphi 0, %s39
      %s41 = sphi 0, %s39
      %s42 = sphi 0, %s41
      %s56 = sphi 0, %s42
      %s60 = sphi 0, %s60
      %s62 = sphi 0, %s60
      %s63 = sphi 0, %s62
      %s77 = sphi 0, %s63
      %s81 = sphi 0, %s81
      %s83 = sphi 0, %s81
      %s84 = sphi 0, %s83
      %s98 = sphi 0, %s84
      %s114 = sphi 0, %s116
      %s117 = sphi 0, %s114
      %s118 = sphi 0, %s117
      %s134 = sphi 0, %s118
      %s150 = sphi 0, %s152
      %s153 = sphi 0, %s150
      %s154 = sphi 0, %s153
      %s170 = sphi 0, %s154
      %s178 = sphi 0, %s180
      %s181 = sphi 0, %s178
      %s182 = sphi 0, %s181
      %s198 = sphi 0, %s182
      %s214 = sphi 0, %s216
      %s217 = sphi 0, %s214
      %s218 = sphi 0, %s217
      %s234 = sphi 0, %s218
      %s242 = sphi 0, %s244
      %s245 = sphi 0, %s242
      %s246 = sphi 0, %s245
      %s262 = sphi 0, %s246
      %s270 = sphi 0, %s272
      %s273 = sphi 0, %s270
      %s274 = sphi 0, %s273
      %s290 = sphi 0, %s274
    $region4: #{_cla_forward.1} parent=1 // loop_header_branch
      %22 = sbr.rel (%p20) target = $region8
    $region5: #{_cla_forward.1} parent=1 // loop_body
      %s24 = ssub.s32 %s19, 1
      %s25 = ssub.s32 %s19, 2
      %s32 = sadd.s32 1, %s27
      %p33 = scmp.ge.s32.totalorder %s32, 1
      %s34 = scalar_select %p33, 0, %s32
      %s35 = sadd.s32 1, %s26
      %s36 = scalar_select %p33, %s35, %s26
      %p37 = scmp.ge.s32.totalorder %s36, 2
      %s38 = scalar_select %p37, 0, %s36
      %s40 = sadd.s32 %s39, 1
      %p43 = scmp.eq.s32.totalorder %s19, 1
      %p44 = scmp.ne.s32.totalorder %s39, %s41
      %p45 = scmp.eq.s32.totalorder %s19, 0
      %p46 = por %p44, %p45
      %p47 = scmp.ne.s32.totalorder %s39, %s41
      %p48 = scmp.eq.s32.totalorder %s24, 1
      %p49 = por %p47, %p48
      %p50 = scmp.ne.s32.totalorder %s41, %s42
      %p51 = scmp.eq.s32.totalorder %s24, 0
      %p52 = por %p50, %p51
      %p53 = scmp.ne.s32.totalorder %s41, %s42
      %p54 = scmp.eq.s32.totalorder %s25, 1
      %p55 = por %p53, %p54
      %p57 = scmp.ne.s32.totalorder %s42, %s56
      %p58 = scmp.eq.s32.totalorder %s25, 0
      %p59 = por %p57, %p58
      %s61 = sadd.s32 %s60, 1
      %p64 = scmp.eq.s32.totalorder %s19, 1
      %p65 = scmp.ne.s32.totalorder %s60, %s62
      %p66 = scmp.eq.s32.totalorder %s19, 0
      %p67 = por %p65, %p66
      %p68 = scmp.ne.s32.totalorder %s60, %s62
      %p69 = scmp.eq.s32.totalorder %s24, 1
      %p70 = por %p68, %p69
      %p71 = scmp.ne.s32.totalorder %s62, %s63
      %p72 = scmp.eq.s32.totalorder %s24, 0
      %p73 = por %p71, %p72
      %p74 = scmp.ne.s32.totalorder %s62, %s63
      %p75 = scmp.eq.s32.totalorder %s25, 1
      %p76 = por %p74, %p75
      %p78 = scmp.ne.s32.totalorder %s63, %s77
      %p79 = scmp.eq.s32.totalorder %s25, 0
      %p80 = por %p78, %p79
      %s82 = sadd.s32 %s81, 1
      %p85 = scmp.eq.s32.totalorder %s19, 1
      %p86 = scmp.ne.s32.totalorder %s81, %s83
      %p87 = scmp.eq.s32.totalorder %s19, 0
      %p88 = por %p86, %p87
      %p89 = scmp.ne.s32.totalorder %s81, %s83
      %p90 = scmp.eq.s32.totalorder %s24, 1
      %p91 = por %p89, %p90
      %p92 = scmp.ne.s32.totalorder %s83, %s84
      %p93 = scmp.eq.s32.totalorder %s24, 0
      %p94 = por %p92, %p93
      %p95 = scmp.ne.s32.totalorder %s83, %s84
      %p96 = scmp.eq.s32.totalorder %s25, 1
      %p97 = por %p95, %p96
      %p99 = scmp.ne.s32.totalorder %s84, %s98
      %p100 = scmp.eq.s32.totalorder %s25, 0
      %p101 = por %p99, %p100
      %s102 = smul.u32 %s27, 8
      %s103 = ssub.s32 %s102, 2
      %p104 = scmp.gt.s32.totalorder %s103, 0
      %s105 = scalar_select %p104, %s103, 0
      %s106 = smul.u32 %s34, 8
      %s107 = ssub.s32 %s106, 2
      %p108 = scmp.gt.s32.totalorder %s107, 0
      %s109 = scalar_select %p108, %s107, 0
      %s110 = ssub.s32 %s26, %s38
      %s111 = ssub.s32 %s105, %s109
      %s112 = sor.u32 %s110, %s111
      %p113 = scmp.eq.s32.totalorder %s112, 0
      %s115 = sadd.s32 %s114, 1
      %s116 = scalar_select %p113, %s114, %s115
      %p119 = pneg %p113
      %p120 = scmp.eq.s32.totalorder %s19, 1
      %p121 = por %p119, %p120
      %p122 = scmp.ne.s32.totalorder %s114, %s117
      %p123 = scmp.eq.s32.totalorder %s19, 0
      %p124 = por %p122, %p123
      %p125 = scmp.ne.s32.totalorder %s114, %s117
      %p126 = scmp.eq.s32.totalorder %s24, 1
      %p127 = por %p125, %p126
      %p128 = scmp.ne.s32.totalorder %s117, %s118
      %p129 = scmp.eq.s32.totalorder %s24, 0
      %p130 = por %p128, %p129
      %p131 = scmp.ne.s32.totalorder %s117, %s118
      %p132 = scmp.eq.s32.totalorder %s25, 1
      %p133 = por %p131, %p132
      %p135 = scmp.ne.s32.totalorder %s118, %s134
      %p136 = scmp.eq.s32.totalorder %s25, 0
      %p137 = por %p135, %p136
      %s138 = smul.u32 %s27, 8
      %s139 = ssub.s32 %s138, 1
      %p140 = scmp.gt.s32.totalorder %s139, 0
      %s141 = scalar_select %p140, %s139, 0
      %s142 = smul.u32 %s34, 8
      %s143 = ssub.s32 %s142, 1
      %p144 = scmp.gt.s32.totalorder %s143, 0
      %s145 = scalar_select %p144, %s143, 0
      %s146 = ssub.s32 %s26, %s38
      %s147 = ssub.s32 %s141, %s145
      %s148 = sor.u32 %s146, %s147
      %p149 = scmp.eq.s32.totalorder %s148, 0
      %s151 = sadd.s32 %s150, 1
      %s152 = scalar_select %p149, %s150, %s151
      %p155 = pneg %p149
      %p156 = scmp.eq.s32.totalorder %s19, 1
      %p157 = por %p155, %p156
      %p158 = scmp.ne.s32.totalorder %s150, %s153
      %p159 = scmp.eq.s32.totalorder %s19, 0
      %p160 = por %p158, %p159
      %p161 = scmp.ne.s32.totalorder %s150, %s153
      %p162 = scmp.eq.s32.totalorder %s24, 1
      %p163 = por %p161, %p162
      %p164 = scmp.ne.s32.totalorder %s153, %s154
      %p165 = scmp.eq.s32.totalorder %s24, 0
      %p166 = por %p164, %p165
      %p167 = scmp.ne.s32.totalorder %s153, %s154
      %p168 = scmp.eq.s32.totalorder %s25, 1
      %p169 = por %p167, %p168
      %p171 = scmp.ne.s32.totalorder %s154, %s170
      %p172 = scmp.eq.s32.totalorder %s25, 0
      %p173 = por %p171, %p172
      %s174 = ssub.s32 %s26, %s38
      %s175 = ssub.s32 %s27, %s34
      %s176 = sor.u32 %s174, %s175
      %p177 = scmp.eq.s32.totalorder %s176, 0
      %s179 = sadd.s32 %s178, 1
      %s180 = scalar_select %p177, %s178, %s179
      %p183 = pneg %p177
      %p184 = scmp.eq.s32.totalorder %s19, 1
      %p185 = por %p183, %p184
      %p186 = scmp.ne.s32.totalorder %s178, %s181
      %p187 = scmp.eq.s32.totalorder %s19, 0
      %p188 = por %p186, %p187
      %p189 = scmp.ne.s32.totalorder %s178, %s181
      %p190 = scmp.eq.s32.totalorder %s24, 1
      %p191 = por %p189, %p190
      %p192 = scmp.ne.s32.totalorder %s181, %s182
      %p193 = scmp.eq.s32.totalorder %s24, 0
      %p194 = por %p192, %p193
      %p195 = scmp.ne.s32.totalorder %s181, %s182
      %p196 = scmp.eq.s32.totalorder %s25, 1
      %p197 = por %p195, %p196
      %p199 = scmp.ne.s32.totalorder %s182, %s198
      %p200 = scmp.eq.s32.totalorder %s25, 0
      %p201 = por %p199, %p200
      %s202 = smul.u32 %s27, 8
      %s203 = sadd.s32 %s202, 8
      %p204 = scmp.lt.s32.totalorder %s203, 7
      %s205 = scalar_select %p204, %s203, 7
      %s206 = smul.u32 %s34, 8
      %s207 = sadd.s32 %s206, 8
      %p208 = scmp.lt.s32.totalorder %s207, 7
      %s209 = scalar_select %p208, %s207, 7
      %s210 = ssub.s32 %s26, %s38
      %s211 = ssub.s32 %s205, %s209
      %s212 = sor.u32 %s210, %s211
      %p213 = scmp.eq.s32.totalorder %s212, 0
      %s215 = sadd.s32 %s214, 1
      %s216 = scalar_select %p213, %s214, %s215
      %p219 = pneg %p213
      %p220 = scmp.eq.s32.totalorder %s19, 1
      %p221 = por %p219, %p220
      %p222 = scmp.ne.s32.totalorder %s214, %s217
      %p223 = scmp.eq.s32.totalorder %s19, 0
      %p224 = por %p222, %p223
      %p225 = scmp.ne.s32.totalorder %s214, %s217
      %p226 = scmp.eq.s32.totalorder %s24, 1
      %p227 = por %p225, %p226
      %p228 = scmp.ne.s32.totalorder %s217, %s218
      %p229 = scmp.eq.s32.totalorder %s24, 0
      %p230 = por %p228, %p229
      %p231 = scmp.ne.s32.totalorder %s217, %s218
      %p232 = scmp.eq.s32.totalorder %s25, 1
      %p233 = por %p231, %p232
      %p235 = scmp.ne.s32.totalorder %s218, %s234
      %p236 = scmp.eq.s32.totalorder %s25, 0
      %p237 = por %p235, %p236
      %s238 = ssub.s32 %s26, %s38
      %s239 = ssub.s32 %s27, %s34
      %s240 = sor.u32 %s238, %s239
      %p241 = scmp.eq.s32.totalorder %s240, 0
      %s243 = sadd.s32 %s242, 1
      %s244 = scalar_select %p241, %s242, %s243
      %p247 = pneg %p241
      %p248 = scmp.eq.s32.totalorder %s19, 1
      %p249 = por %p247, %p248
      %p250 = scmp.ne.s32.totalorder %s242, %s245
      %p251 = scmp.eq.s32.totalorder %s19, 0
      %p252 = por %p250, %p251
      %p253 = scmp.ne.s32.totalorder %s242, %s245
      %p254 = scmp.eq.s32.totalorder %s24, 1
      %p255 = por %p253, %p254
      %p256 = scmp.ne.s32.totalorder %s245, %s246
      %p257 = scmp.eq.s32.totalorder %s24, 0
      %p258 = por %p256, %p257
      %p259 = scmp.ne.s32.totalorder %s245, %s246
      %p260 = scmp.eq.s32.totalorder %s25, 1
      %p261 = por %p259, %p260
      %p263 = scmp.ne.s32.totalorder %s246, %s262
      %p264 = scmp.eq.s32.totalorder %s25, 0
      %p265 = por %p263, %p264
      %s266 = ssub.s32 %s26, %s38
      %s267 = ssub.s32 %s27, %s34
      %s268 = sor.u32 %s266, %s267
      %p269 = scmp.eq.s32.totalorder %s268, 0
      %s271 = sadd.s32 %s270, 1
      %s272 = scalar_select %p269, %s270, %s271
      %p275 = pneg %p269
      %p276 = scmp.eq.s32.totalorder %s19, 1
      %p277 = por %p275, %p276
      %p278 = scmp.ne.s32.totalorder %s270, %s273
      %p279 = scmp.eq.s32.totalorder %s19, 0
      %p280 = por %p278, %p279
      %p281 = scmp.ne.s32.totalorder %s270, %s273
      %p282 = scmp.eq.s32.totalorder %s24, 1
      %p283 = por %p281, %p282
      %p284 = scmp.ne.s32.totalorder %s273, %s274
      %p285 = scmp.eq.s32.totalorder %s24, 0
      %p286 = por %p284, %p285
      %p287 = scmp.ne.s32.totalorder %s273, %s274
      %p288 = scmp.eq.s32.totalorder %s25, 1
      %p289 = por %p287, %p288
      %p291 = scmp.ne.s32.totalorder %s274, %s290
      %p292 = scmp.eq.s32.totalorder %s25, 0
      %p293 = por %p291, %p292
      %p294 = scmp.le.s32.totalorder 1, %s19
      %p295 = scmp.lt.s32.totalorder %s19, 3
      %p296 = pnand %p294, %p295
      %p297 = pneg %p296
      // Predicated region
      $region9: #{_cla_forward.1} parent=5 // pred_check
        _
      $region10: #{_cla_forward.1} parent=5 // pred_check_branch
        %299 = sbr.rel (%p296) target = $region12
      $region11: #{_cla_forward.1} parent=5 // pred_region
        %s300 = ssub.s32 %s19, 1
        // Predicated region
        $region13: #{_cla_forward.1} parent=11 // pred_check
          %p301 = pneg %p52
        $region14: #{_cla_forward.1} parent=11 // pred_check_branch
          %303 = sbr.rel (%p301) target = $region16
        $region15: #{_cla_forward.1} parent=11 // pred_region
          %s305 = ssub.s32 32, 32
          %306 = vsyncadd [#allocation4], %s305
          %s308 = sshll.u32 %s0, 4
          %s309 = int_to_ptr.vmem [resolvable:$true] %s308
          %311 = dma.vmem_to_smem %s309, 32, [#allocation2], [#allocation4]
        $region16: #{_cla_forward.1} parent=11 // pred_fallthru
          _
        // Predicated region
        $region17: #{_cla_forward.1} parent=11 // pred_check
          %p312 = pneg %p73
        $region18: #{_cla_forward.1} parent=11 // pred_check_branch
          %314 = sbr.rel (%p312) target = $region20
        $region19: #{_cla_forward.1} parent=11 // pred_region
          %s316 = ssub.s32 16, 16
          %317 = vsyncadd [#allocation6], %s316
          %s319 = sshll.u32 %s1, 4
          %s320 = int_to_ptr.vmem [resolvable:$true] %s319
          %322 = dma.vmem_to_smem %s320, 16, [#allocation5], [#allocation6]
        $region20: #{_cla_forward.1} parent=11 // pred_fallthru
          _
        // Predicated region
        $region21: #{_cla_forward.1} parent=11 // pred_check
          %p323 = pneg %p94
        $region22: #{_cla_forward.1} parent=11 // pred_check_branch
          %325 = sbr.rel (%p323) target = $region24
        $region23: #{_cla_forward.1} parent=11 // pred_region
          %s327 = ssub.s32 16, 16
          %328 = vsyncadd [#allocation6], %s327
          %s330 = sshll.u32 %s2, 4
          %s331 = int_to_ptr.vmem [resolvable:$true] %s330
          %333 = dma.vmem_to_smem %s331, 16, [#allocation7], [#allocation6]
        $region24: #{_cla_forward.1} parent=11 // pred_fallthru
          _
      $region12: #{_cla_forward.1} parent=5 // pred_fallthru
        _
      %p334 = scmp.lt.s32.totalorder %s19, 2
      // Predicated region
      $region25: #{_cla_forward.1} parent=5 // pred_check
        %p335 = pneg %p334
      $region26: #{_cla_forward.1} parent=5 // pred_check_branch
        %337 = sbr.rel (%p335) target = $region28
      $region27: #{_cla_forward.1} parent=5 // pred_region
        // Predicated region
        $region29: #{_cla_forward.1} parent=27 // pred_check
          %p338 = pneg %p124
        $region30: #{_cla_forward.1} parent=27 // pred_check_branch
          %340 = sbr.rel (%p338) target = $region32
        $region31: #{_cla_forward.1} parent=27 // pred_region
          %s341 = sand.u32 %s114, 1
          %s342 = sand.u32 %s114, 1
          %s343 = smul.addr %s342, 8
          %s344 = scalar_lea.vmem [#allocation8], %s343
          %s345 = smul.u32 %s27, 8
          %s346 = ssub.s32 %s345, 2
          %p347 = scmp.gt.s32.totalorder %s346, 0
          %s348 = scalar_select %p347, %s346, 0
          %s349 = smul.addr %s26, 32
          %s350 = sadd.s32 %s348, %s349
          %s351 = smul.addr %s350, 2
          %s352 = scalar_lea.vmem %s3, %s351
          // Predicated region
          $region33: #{_cla_forward.1} parent=31 // pred_check
            _
          $region34: #{_cla_forward.1} parent=31 // pred_check_branch
            %354 = sbr.rel (0) target = $region36
          $region35: #{_cla_forward.1} parent=31 // pred_region
            // Predicated region
            $region37: #{_cla_forward.1} parent=35 // pred_check
              _
            $region38: #{_cla_forward.1} parent=35 // pred_check_branch
              %356 = sbr.rel target = $region40
            $region39: #{_cla_forward.1} parent=35 // pred_region
              // Predicated region
              $region52: #{_cla_forward.1} parent=39 // pred_check
                _
              $region53: #{_cla_forward.1} parent=39 // pred_check_branch
                %378 = sbr.rel (0) target = $region55
              $region54: #{_cla_forward.1} parent=39 // pred_region
                loop: start=0, step=1, limit=1
                $region56: #{_cla_forward.1} parent=54 // loop_pre_header
                  _
                $region57: #{_cla_forward.1} parent=54 // loop_header
                  %s380 = sphi 0, %s384
                  %p381 = scmp.ge.s32.totalorder %s380, 1
                  %s385 = sphi %s352, %s352
                  %s386 = sphi %s344, %s344
                $region58: #{_cla_forward.1} parent=54 // loop_header_branch
                  %383 = sbr.rel (%p381) target = $region62
                $region59: #{_cla_forward.1} parent=54 // loop_body
                  _
                $region60: #{_cla_forward.1} parent=54 // loop_footer
                  %s384 = sadd.s32 1, %s380
                $region61: #{_cla_forward.1} parent=54 // loop_footer_branch
                  %379 = sbr.rel target = $region57
                $region62: #{_cla_forward.1} parent=54 // loop_exit
                  _
                %s388 = ssub.s32 4, 1
                loop: start=0, step=1, limit=1
                $region63: #{_cla_forward.1} parent=54 // loop_pre_header
                  _
                $region64: #{_cla_forward.1} parent=54 // loop_header
                  %s390 = sphi 0, %s394
                  %p391 = scmp.ge.s32.totalorder %s390, 1
                  %s395 = sphi %s352, %s352
                  %s396 = sphi %s344, %s344
                $region65: #{_cla_forward.1} parent=54 // loop_header_branch
                  %393 = sbr.rel (%p391) target = $region69
                $region66: #{_cla_forward.1} parent=54 // loop_body
                  %v397 = vld [vmem:[%s395] sm:%s388]
                  %398 = vst [vmem:[%s396] sm:%s388] %v397
                  %v399 = vld [vmem:[%s395 + $0x10] sm:%s388]
                  %400 = vst [vmem:[%s396 + $0x2] sm:%s388] %v399
                  %v401 = vld [vmem:[%s395 + $0x20] sm:%s388]
                  %402 = vst [vmem:[%s396 + $0x4] sm:%s388] %v401
                  %v403 = vld [vmem:[%s395 + $0x30] sm:%s388]
                  %404 = vst [vmem:[%s396 + $0x6] sm:%s388] %v403
                $region67: #{_cla_forward.1} parent=54 // loop_footer
                  %s394 = sadd.s32 1, %s390
                $region68: #{_cla_forward.1} parent=54 // loop_footer_branch
                  %389 = sbr.rel target = $region64
                $region69: #{_cla_forward.1} parent=54 // loop_exit
                  _
              $region55: #{_cla_forward.1} parent=39 // pred_fallthru
                _
            $region40: #{_cla_forward.1} parent=35 // pred_fallthru
              _
            // Predicated region
            $region41: #{_cla_forward.1} parent=35 // pred_check
              _
            $region42: #{_cla_forward.1} parent=35 // pred_check_branch
              %358 = sbr.rel (0) target = $region44
            $region43: #{_cla_forward.1} parent=35 // pred_region
              %s360 = ssub.s32 4, 1
              loop: start=0, step=1, limit=1
              $region45: #{_cla_forward.1} parent=43 // loop_pre_header
                _
              $region46: #{_cla_forward.1} parent=43 // loop_header
                %s362 = sphi 0, %s366
                %p363 = scmp.ge.s32.totalorder %s362, 1
                %s367 = sphi %s352, %s352
                %s368 = sphi %s344, %s344
              $region47: #{_cla_forward.1} parent=43 // loop_header_branch
                %365 = sbr.rel (%p363) target = $region51
              $region48: #{_cla_forward.1} parent=43 // loop_body
                %v369 = vld [vmem:[%s367] sm:%s360]
                %370 = vst [vmem:[%s368] sm:%s360] %v369
                %v371 = vld [vmem:[%s367 + $0x10] sm:%s360]
                %372 = vst [vmem:[%s368 + $0x2] sm:%s360] %v371
                %v373 = vld [vmem:[%s367 + $0x20] sm:%s360]
                %374 = vst [vmem:[%s368 + $0x4] sm:%s360] %v373
                %v375 = vld [vmem:[%s367 + $0x30] sm:%s360]
                %376 = vst [vmem:[%s368 + $0x6] sm:%s360] %v375
              $region49: #{_cla_forward.1} parent=43 // loop_footer
                %s366 = sadd.s32 1, %s362
              $region50: #{_cla_forward.1} parent=43 // loop_footer_branch
                %361 = sbr.rel target = $region46
              $region51: #{_cla_forward.1} parent=43 // loop_exit
                _
            $region44: #{_cla_forward.1} parent=35 // pred_fallthru
              _
          $region36: #{_cla_forward.1} parent=31 // pred_fallthru
            _
          %405 = vnop
        $region32: #{_cla_forward.1} parent=27 // pred_fallthru
          _
        // Predicated region
        $region70: #{_cla_forward.1} parent=27 // pred_check
          %p406 = pneg %p160
        $region71: #{_cla_forward.1} parent=27 // pred_check_branch
          %408 = sbr.rel (%p406) target = $region73
        $region72: #{_cla_forward.1} parent=27 // pred_region
          %s409 = sand.u32 %s150, 1
          %s410 = sand.u32 %s150, 1
          %s411 = smul.addr %s410, 8
          %s412 = scalar_lea.vmem [#allocation9], %s411
          %s413 = smul.u32 %s27, 8
          %s414 = ssub.s32 %s413, 1
          %p415 = scmp.gt.s32.totalorder %s414, 0
          %s416 = scalar_select %p415, %s414, 0
          %s417 = smul.addr %s26, 32
          %s418 = sadd.s32 %s416, %s417
          %s419 = smul.addr %s418, 2
          %s420 = scalar_lea.vmem %s4, %s419
          // Predicated region
          $region74: #{_cla_forward.1} parent=72 // pred_check
            _
          $region75: #{_cla_forward.1} parent=72 // pred_check_branch
            %422 = sbr.rel (0) target = $region77
          $region76: #{_cla_forward.1} parent=72 // pred_region
            // Predicated region
            $region78: #{_cla_forward.1} parent=76 // pred_check
              _
            $region79: #{_cla_forward.1} parent=76 // pred_check_branch
              %424 = sbr.rel target = $region81
            $region80: #{_cla_forward.1} parent=76 // pred_region
              // Predicated region
              $region93: #{_cla_forward.1} parent=80 // pred_check
                _
              $region94: #{_cla_forward.1} parent=80 // pred_check_branch
                %446 = sbr.rel (0) target = $region96
              $region95: #{_cla_forward.1} parent=80 // pred_region
                loop: start=0, step=1, limit=1
                $region97: #{_cla_forward.1} parent=95 // loop_pre_header
                  _
                $region98: #{_cla_forward.1} parent=95 // loop_header
                  %s448 = sphi 0, %s452
                  %p449 = scmp.ge.s32.totalorder %s448, 1
                  %s453 = sphi %s420, %s420
                  %s454 = sphi %s412, %s412
                $region99: #{_cla_forward.1} parent=95 // loop_header_branch
                  %451 = sbr.rel (%p449) target = $region103
                $region100: #{_cla_forward.1} parent=95 // loop_body
                  _
                $region101: #{_cla_forward.1} parent=95 // loop_footer
                  %s452 = sadd.s32 1, %s448
                $region102: #{_cla_forward.1} parent=95 // loop_footer_branch
                  %447 = sbr.rel target = $region98
                $region103: #{_cla_forward.1} parent=95 // loop_exit
                  _
                %s456 = ssub.s32 4, 1
                loop: start=0, step=1, limit=1
                $region104: #{_cla_forward.1} parent=95 // loop_pre_header
                  _
                $region105: #{_cla_forward.1} parent=95 // loop_header
                  %s458 = sphi 0, %s462
                  %p459 = scmp.ge.s32.totalorder %s458, 1
                  %s463 = sphi %s420, %s420
                  %s464 = sphi %s412, %s412
                $region106: #{_cla_forward.1} parent=95 // loop_header_branch
                  %461 = sbr.rel (%p459) target = $region110
                $region107: #{_cla_forward.1} parent=95 // loop_body
                  %v465 = vld [vmem:[%s463] sm:%s456]
                  %466 = vst [vmem:[%s464] sm:%s456] %v465
                  %v467 = vld [vmem:[%s463 + $0x10] sm:%s456]
                  %468 = vst [vmem:[%s464 + $0x2] sm:%s456] %v467
                  %v469 = vld [vmem:[%s463 + $0x20] sm:%s456]
                  %470 = vst [vmem:[%s464 + $0x4] sm:%s456] %v469
                  %v471 = vld [vmem:[%s463 + $0x30] sm:%s456]
                  %472 = vst [vmem:[%s464 + $0x6] sm:%s456] %v471
                $region108: #{_cla_forward.1} parent=95 // loop_footer
                  %s462 = sadd.s32 1, %s458
                $region109: #{_cla_forward.1} parent=95 // loop_footer_branch
                  %457 = sbr.rel target = $region105
                $region110: #{_cla_forward.1} parent=95 // loop_exit
                  _
              $region96: #{_cla_forward.1} parent=80 // pred_fallthru
                _
            $region81: #{_cla_forward.1} parent=76 // pred_fallthru
              _
            // Predicated region
            $region82: #{_cla_forward.1} parent=76 // pred_check
              _
            $region83: #{_cla_forward.1} parent=76 // pred_check_branch
              %426 = sbr.rel (0) target = $region85
            $region84: #{_cla_forward.1} parent=76 // pred_region
              %s428 = ssub.s32 4, 1
              loop: start=0, step=1, limit=1
              $region86: #{_cla_forward.1} parent=84 // loop_pre_header
                _
              $region87: #{_cla_forward.1} parent=84 // loop_header
                %s430 = sphi 0, %s434
                %p431 = scmp.ge.s32.totalorder %s430, 1
                %s435 = sphi %s420, %s420
                %s436 = sphi %s412, %s412
              $region88: #{_cla_forward.1} parent=84 // loop_header_branch
                %433 = sbr.rel (%p431) target = $region92
              $region89: #{_cla_forward.1} parent=84 // loop_body
                %v437 = vld [vmem:[%s435] sm:%s428]
                %438 = vst [vmem:[%s436] sm:%s428] %v437
                %v439 = vld [vmem:[%s435 + $0x10] sm:%s428]
                %440 = vst [vmem:[%s436 + $0x2] sm:%s428] %v439
                %v441 = vld [vmem:[%s435 + $0x20] sm:%s428]
                %442 = vst [vmem:[%s436 + $0x4] sm:%s428] %v441
                %v443 = vld [vmem:[%s435 + $0x30] sm:%s428]
                %444 = vst [vmem:[%s436 + $0x6] sm:%s428] %v443
              $region90: #{_cla_forward.1} parent=84 // loop_footer
                %s434 = sadd.s32 1, %s430
              $region91: #{_cla_forward.1} parent=84 // loop_footer_branch
                %429 = sbr.rel target = $region87
              $region92: #{_cla_forward.1} parent=84 // loop_exit
                _
            $region85: #{_cla_forward.1} parent=76 // pred_fallthru
              _
          $region77: #{_cla_forward.1} parent=72 // pred_fallthru
            _
          %473 = vnop
        $region73: #{_cla_forward.1} parent=27 // pred_fallthru
          _
        // Predicated region
        $region111: #{_cla_forward.1} parent=27 // pred_check
          %p474 = pneg %p188
        $region112: #{_cla_forward.1} parent=27 // pred_check_branch
          %476 = sbr.rel (%p474) target = $region114
        $region113: #{_cla_forward.1} parent=27 // pred_region
          %p477 = scmp.lt.s32.totalorder %s26, 1
          %s478 = scalar_select %p477, %s26, 1
          %p479 = scmp.lt.s32.totalorder %s27, 0
          %s480 = scalar_select %p479, %s27, 0
          %s481 = smul.addr %s478, 4
          %s482 = sadd.s32 %s480, %s481
          %s483 = smul.addr %s482, 8
          %s484 = scalar_lea.vmem %s5, %s483
        $region114: #{_cla_forward.1} parent=27 // pred_fallthru
          _
        // Predicated region
        $region115: #{_cla_forward.1} parent=27 // pred_check
          %p485 = pneg %p224
        $region116: #{_cla_forward.1} parent=27 // pred_check_branch
          %487 = sbr.rel (%p485) target = $region118
        $region117: #{_cla_forward.1} parent=27 // pred_region
          %s488 = sand.u32 %s214, 1
          %s489 = sand.u32 %s214, 1
          %s490 = smul.addr %s489, 8
          %s491 = scalar_lea.vmem [#allocation10], %s490
          %s492 = smul.u32 %s27, 8
          %s493 = sadd.s32 %s492, 8
          %p494 = scmp.lt.s32.totalorder %s493, 7
          %s495 = scalar_select %p494, %s493, 7
          %s496 = smul.addr %s26, 32
          %s497 = sadd.s32 %s495, %s496
          %s498 = smul.addr %s497, 2
          %s499 = scalar_lea.vmem %s6, %s498
          // Predicated region
          $region119: #{_cla_forward.1} parent=117 // pred_check
            _
          $region120: #{_cla_forward.1} parent=117 // pred_check_branch
            %501 = sbr.rel (0) target = $region122
          $region121: #{_cla_forward.1} parent=117 // pred_region
            // Predicated region
            $region123: #{_cla_forward.1} parent=121 // pred_check
              _
            $region124: #{_cla_forward.1} parent=121 // pred_check_branch
              %503 = sbr.rel target = $region126
            $region125: #{_cla_forward.1} parent=121 // pred_region
              // Predicated region
              $region138: #{_cla_forward.1} parent=125 // pred_check
                _
              $region139: #{_cla_forward.1} parent=125 // pred_check_branch
                %525 = sbr.rel (0) target = $region141
              $region140: #{_cla_forward.1} parent=125 // pred_region
                loop: start=0, step=1, limit=1
                $region142: #{_cla_forward.1} parent=140 // loop_pre_header
                  _
                $region143: #{_cla_forward.1} parent=140 // loop_header
                  %s527 = sphi 0, %s531
                  %p528 = scmp.ge.s32.totalorder %s527, 1
                  %s532 = sphi %s499, %s499
                  %s533 = sphi %s491, %s491
                $region144: #{_cla_forward.1} parent=140 // loop_header_branch
                  %530 = sbr.rel (%p528) target = $region148
                $region145: #{_cla_forward.1} parent=140 // loop_body
                  _
                $region146: #{_cla_forward.1} parent=140 // loop_footer
                  %s531 = sadd.s32 1, %s527
                $region147: #{_cla_forward.1} parent=140 // loop_footer_branch
                  %526 = sbr.rel target = $region143
                $region148: #{_cla_forward.1} parent=140 // loop_exit
                  _
                %s535 = ssub.s32 4, 1
                loop: start=0, step=1, limit=1
                $region149: #{_cla_forward.1} parent=140 // loop_pre_header
                  _
                $region150: #{_cla_forward.1} parent=140 // loop_header
                  %s537 = sphi 0, %s541
                  %p538 = scmp.ge.s32.totalorder %s537, 1
                  %s542 = sphi %s499, %s499
                  %s543 = sphi %s491, %s491
                $region151: #{_cla_forward.1} parent=140 // loop_header_branch
                  %540 = sbr.rel (%p538) target = $region155
                $region152: #{_cla_forward.1} parent=140 // loop_body
                  %v544 = vld [vmem:[%s542] sm:%s535]
                  %545 = vst [vmem:[%s543] sm:%s535] %v544
                  %v546 = vld [vmem:[%s542 + $0x10] sm:%s535]
                  %547 = vst [vmem:[%s543 + $0x2] sm:%s535] %v546
                  %v548 = vld [vmem:[%s542 + $0x20] sm:%s535]
                  %549 = vst [vmem:[%s543 + $0x4] sm:%s535] %v548
                  %v550 = vld [vmem:[%s542 + $0x30] sm:%s535]
                  %551 = vst [vmem:[%s543 + $0x6] sm:%s535] %v550
                $region153: #{_cla_forward.1} parent=140 // loop_footer
                  %s541 = sadd.s32 1, %s537
                $region154: #{_cla_forward.1} parent=140 // loop_footer_branch
                  %536 = sbr.rel target = $region150
                $region155: #{_cla_forward.1} parent=140 // loop_exit
                  _
              $region141: #{_cla_forward.1} parent=125 // pred_fallthru
                _
            $region126: #{_cla_forward.1} parent=121 // pred_fallthru
              _
            // Predicated region
            $region127: #{_cla_forward.1} parent=121 // pred_check
              _
            $region128: #{_cla_forward.1} parent=121 // pred_check_branch
              %505 = sbr.rel (0) target = $region130
            $region129: #{_cla_forward.1} parent=121 // pred_region
              %s507 = ssub.s32 4, 1
              loop: start=0, step=1, limit=1
              $region131: #{_cla_forward.1} parent=129 // loop_pre_header
                _
              $region132: #{_cla_forward.1} parent=129 // loop_header
                %s509 = sphi 0, %s513
                %p510 = scmp.ge.s32.totalorder %s509, 1
                %s514 = sphi %s499, %s499
                %s515 = sphi %s491, %s491
              $region133: #{_cla_forward.1} parent=129 // loop_header_branch
                %512 = sbr.rel (%p510) target = $region137
              $region134: #{_cla_forward.1} parent=129 // loop_body
                %v516 = vld [vmem:[%s514] sm:%s507]
                %517 = vst [vmem:[%s515] sm:%s507] %v516
                %v518 = vld [vmem:[%s514 + $0x10] sm:%s507]
                %519 = vst [vmem:[%s515 + $0x2] sm:%s507] %v518
                %v520 = vld [vmem:[%s514 + $0x20] sm:%s507]
                %521 = vst [vmem:[%s515 + $0x4] sm:%s507] %v520
                %v522 = vld [vmem:[%s514 + $0x30] sm:%s507]
                %523 = vst [vmem:[%s515 + $0x6] sm:%s507] %v522
              $region135: #{_cla_forward.1} parent=129 // loop_footer
                %s513 = sadd.s32 1, %s509
              $region136: #{_cla_forward.1} parent=129 // loop_footer_branch
                %508 = sbr.rel target = $region132
              $region137: #{_cla_forward.1} parent=129 // loop_exit
                _
            $region130: #{_cla_forward.1} parent=121 // pred_fallthru
              _
          $region122: #{_cla_forward.1} parent=117 // pred_fallthru
            _
          %552 = vnop
        $region118: #{_cla_forward.1} parent=27 // pred_fallthru
          _
        // Predicated region
        $region156: #{_cla_forward.1} parent=27 // pred_check
          %p553 = pneg %p252
        $region157: #{_cla_forward.1} parent=27 // pred_check_branch
          %555 = sbr.rel (%p553) target = $region159
        $region158: #{_cla_forward.1} parent=27 // pred_region
          %p556 = scmp.lt.s32.totalorder %s26, 1
          %s557 = scalar_select %p556, %s26, 1
          %p558 = scmp.lt.s32.totalorder %s27, 0
          %s559 = scalar_select %p558, %s27, 0
          %s560 = smul.addr %s557, 4
          %s561 = sadd.s32 %s559, %s560
          %s562 = smul.addr %s561, 8
          %s563 = scalar_lea.vmem %s7, %s562
        $region159: #{_cla_forward.1} parent=27 // pred_fallthru
          _
      $region28: #{_cla_forward.1} parent=5 // pred_fallthru
        _
      %p564 = scmp.le.s32.totalorder 1, %s19
      %p565 = scmp.lt.s32.totalorder %s19, 3
      %p566 = pnand %p564, %p565
      %p567 = pneg %p566
      // Predicated region
      $region160: #{_cla_forward.1} parent=5 // pred_check
        _
      $region161: #{_cla_forward.1} parent=5 // pred_check_branch
        %569 = sbr.rel (%p566) target = $region163
      $region162: #{_cla_forward.1} parent=5 // pred_region
        %s570 = ssub.s32 %s19, 1
        // Predicated region
        $region164: #{_cla_forward.1} parent=162 // pred_check
          %p571 = pneg %p52
        $region165: #{_cla_forward.1} parent=162 // pred_check_branch
          %573 = sbr.rel (%p571) target = $region167
        $region166: #{_cla_forward.1} parent=162 // pred_region
          %574 = dma.done [#allocation4], 32
        $region167: #{_cla_forward.1} parent=162 // pred_fallthru
          _
        // Predicated region
        $region168: #{_cla_forward.1} parent=162 // pred_check
          %p575 = pneg %p73
        $region169: #{_cla_forward.1} parent=162 // pred_check_branch
          %577 = sbr.rel (%p575) target = $region171
        $region170: #{_cla_forward.1} parent=162 // pred_region
          %578 = dma.done [#allocation6], 16
        $region171: #{_cla_forward.1} parent=162 // pred_fallthru
          _
        // Predicated region
        $region172: #{_cla_forward.1} parent=162 // pred_check
          %p579 = pneg %p94
        $region173: #{_cla_forward.1} parent=162 // pred_check_branch
          %581 = sbr.rel (%p579) target = $region175
        $region174: #{_cla_forward.1} parent=162 // pred_region
          %582 = dma.done [#allocation6], 16
        $region175: #{_cla_forward.1} parent=162 // pred_fallthru
          _
        %s583 = sand.u32 %s117, 1
        %s584 = sand.u32 %s117, 1
        %s585 = smul.addr %s584, 8
        %s586 = scalar_lea.vmem [#allocation8], %s585
        // Predicated region
        $region176: #{_cla_forward.1} parent=162 // pred_check
          %p587 = pneg %p130
        $region177: #{_cla_forward.1} parent=162 // pred_check_branch
          %589 = sbr.rel (%p587) target = $region179
        $region178: #{_cla_forward.1} parent=162 // pred_region
          _
        $region179: #{_cla_forward.1} parent=162 // pred_fallthru
          _
        %s590 = sand.u32 %s153, 1
        %s591 = sand.u32 %s153, 1
        %s592 = smul.addr %s591, 8
        %s593 = scalar_lea.vmem [#allocation9], %s592
        // Predicated region
        $region180: #{_cla_forward.1} parent=162 // pred_check
          %p594 = pneg %p166
        $region181: #{_cla_forward.1} parent=162 // pred_check_branch
          %596 = sbr.rel (%p594) target = $region183
        $region182: #{_cla_forward.1} parent=162 // pred_region
          _
        $region183: #{_cla_forward.1} parent=162 // pred_fallthru
          _
        %s597 = sand.u32 %s217, 1
        %s598 = sand.u32 %s217, 1
        %s599 = smul.addr %s598, 8
        %s600 = scalar_lea.vmem [#allocation10], %s599
        // Predicated region
        $region184: #{_cla_forward.1} parent=162 // pred_check
          %p601 = pneg %p230
        $region185: #{_cla_forward.1} parent=162 // pred_check_branch
          %603 = sbr.rel (%p601) target = $region187
        $region186: #{_cla_forward.1} parent=162 // pred_region
          _
        $region187: #{_cla_forward.1} parent=162 // pred_fallthru
          _
        %604 = sfence
        %p605 = pneg %p52
        %p606 = pneg %p49
        %p607 = pneg %p73
        %p608 = pneg %p70
        %p609 = pneg %p94
        %p610 = pneg %p91
        %s611 = sand.u32 %s117, 1
        %s612 = sand.u32 %s117, 1
        %s613 = smul.addr %s612, 8
        %s614 = scalar_lea.vmem [#allocation8], %s613
        %p615 = pneg %p130
        %p616 = pneg %p127
        %s617 = sand.u32 %s153, 1
        %s618 = sand.u32 %s153, 1
        %s619 = smul.addr %s618, 8
        %s620 = scalar_lea.vmem [#allocation9], %s619
        %p621 = pneg %p166
        %p622 = pneg %p163
        %p623 = scmp.lt.s32.totalorder %s28, 1
        %s624 = scalar_select %p623, %s28, 1
        %p625 = scmp.lt.s32.totalorder %s29, 0
        %s626 = scalar_select %p625, %s29, 0
        %s627 = smul.addr %s624, 4
        %s628 = sadd.s32 %s626, %s627
        %s629 = smul.addr %s628, 8
        %s630 = scalar_lea.vmem %s5, %s629
        %p631 = pneg %p194
        %p632 = pneg %p191
        %s633 = sand.u32 %s217, 1
        %s634 = sand.u32 %s217, 1
        %s635 = smul.addr %s634, 8
        %s636 = scalar_lea.vmem [#allocation10], %s635
        %p637 = pneg %p230
        %p638 = pneg %p227
        %p639 = scmp.lt.s32.totalorder %s28, 1
        %s640 = scalar_select %p639, %s28, 1
        %p641 = scmp.lt.s32.totalorder %s29, 0
        %s642 = scalar_select %p641, %s29, 0
        %s643 = smul.addr %s640, 4
        %s644 = sadd.s32 %s642, %s643
        %s645 = smul.addr %s644, 8
        %s646 = scalar_lea.vmem %s7, %s645
        %p647 = pneg %p258
        %p648 = pneg %p255
        %p649 = pneg %p286
        %p650 = pneg %p283
        %s651 = sand.u32 %s273, 1
        %s652 = scalar_lea.sflag [#allocation3], %s651
        %s653 = sand.u32 %s273, 1
        %s654 = smul.addr %s653, 32
        %s655 = scalar_lea.vmem [#allocation11], %s654
        %s656 = smul.u32 %s29, 8
        %s657 = ssub.s32 %s656, 2
        %p658 = scmp.gt.s32.totalorder %s657, 0
        %s659 = scalar_select %p658, %s657, 0
        %s660 = smul.u32 %s29, 8
        %s661 = ssub.s32 %s660, 1
        %p662 = scmp.gt.s32.totalorder %s661, 0
        %s663 = scalar_select %p662, %s661, 0
        %p664 = scmp.lt.s32.totalorder %s28, 1
        %s665 = scalar_select %p664, %s28, 1
        %p666 = scmp.lt.s32.totalorder %s29, 0
        %s667 = scalar_select %p666, %s29, 0
        %s668 = smul.addr %s665, 4
        %s669 = sadd.s32 %s667, %s668
        %s670 = smul.addr %s669, 8
        %s671 = scalar_lea.vmem %s5, %s670
        %s672 = smul.u32 %s29, 8
        %s673 = sadd.s32 %s672, 8
        %p674 = scmp.lt.s32.totalorder %s673, 7
        %s675 = scalar_select %p674, %s673, 7
        %p676 = scmp.lt.s32.totalorder %s28, 1
        %s677 = scalar_select %p676, %s28, 1
        %p678 = scmp.lt.s32.totalorder %s29, 0
        %s679 = scalar_select %p678, %s29, 0
        %s680 = smul.addr %s677, 4
        %s681 = sadd.s32 %s679, %s680
        %s682 = smul.addr %s681, 8
        %s683 = scalar_lea.vmem %s7, %s682
        %p684 = scmp.eq.s32.totalorder %s29, 0
        %s685 = scalar_select %p684, 0.0, 1.0
        %v686 = vld [vmem:[%s671] sm:$0xff]
        %v687 = vld [vmem:[%s586] sm:$0x3]
        %v688 = vld [vmem:[%s593] sm:$0x3]
        %v689 = vld [vmem:[%s600] sm:$0x3]
        %v690 = vstv %s685
        %v691 = vmul.f32 %v688, %v690
        %693 = vrot.lane.b32.xlu0 %v686, 112
        %v694 = vpop.permute.xlu0 %693
        %v696 = vrot.slane %v694, 7
        %v697 = vlaneseq
        %v698 = vshrl.u32 %v697, 7
        %vm699 = vcmp.eq.s32.totalorder %v698, 0
        %v700 = vlaneseq
        %v701 = vshrl.u32 %v700, 7
        %v702 = vsub.s32 1, %v701
        %v703 = vrot.slane %v691, %v702
        %v704 = vsel %vm699, %v703, %v696
        %vm705 = vcmask 1047680
        %706 = vrot.lane.b32.xlu0 %v704, 16
        %v707 = vpop.permute.xlu0 %706
        %v708 = vsel %vm705, %v707, %v704
        %709 = vrot.lane.b32.xlu0 %v708, 16
        %v710 = vpop.permute.xlu0 %709
        %v711 = vsel %vm705, %v710, %v704
        %v712 = vlaneseq
        %v713 = vand.u32 %v712, 127
        %vm714 = vcmp.ge.s32.totalorder %v713, 1
        %716 = vrot.lane.b32.xlu0 %v711, 113
        %v717 = vpop.permute.xlu0 %716
        %v719 = vsel %vm714, %v717, 0.0
        %v721 = vrot.slane %v687, 1
        %723 = vrot.lane.b32.xlu0 %v721, 16
        %v724 = vpop.permute.xlu0 %723
        %v725 = vsel %vm705, %v724, %v721
        %726 = vrot.lane.b32.xlu0 %v725, 16
        %v727 = vpop.permute.xlu0 %726
        %v728 = vsel %vm705, %v727, %v721
        %730 = vrot.lane.b32.xlu0 %v728, 113
        %v731 = vpop.permute.xlu0 %730
        %v733 = vsel %vm714, %v731, 0.0
        %v734 = vrot.slane %v686, 7
        %735 = vrot.lane.b32.xlu0 %v734, 112
        %v736 = vpop.permute.xlu0 %735
        %738 = vrot.lane.b32.xlu0 %v736, 16
        %v739 = vpop.permute.xlu0 %738
        %v740 = vsel %vm705, %v739, %v736
        %741 = vrot.lane.b32.xlu0 %v740, 16
        %v742 = vpop.permute.xlu0 %741
        %v743 = vsel %vm705, %v742, %v736
        %745 = vrot.lane.b32.xlu0 %v743, 113
        %v746 = vpop.permute.xlu0 %745
        %v748 = vsel %vm714, %v746, 0.0
        %s749 = sld [smem:[#allocation2]]
        %v750 = vstv %s749
        %v751 = vmul.f32 %v719, %v750
        %v752 = vmul.f32 %v733, %v750
        %v753 = vmul.f32 %v748, %v750
        %s754 = sld [smem:[#allocation2 + $0x24]]
        %v755 = vstv %s754
        %v756 = vmul.f32 %v719, %v755
        %v757 = vmul.f32 %v733, %v755
        %v758 = vmul.f32 %v748, %v755
        %s759 = sld [smem:[#allocation2 + $0x48]]
        %v760 = vstv %s759
        %v761 = vmul.f32 %v719, %v760
        %v762 = vmul.f32 %v733, %v760
        %v763 = vmul.f32 %v748, %v760
        %s764 = sld [smem:[#allocation2 + $0x6c]]
        %v765 = vstv %s764
        %v766 = vmul.f32 %v719, %v765
        %v767 = vmul.f32 %v733, %v765
        %v768 = vmul.f32 %v748, %v765
        %s769 = sld [smem:[#allocation2 + $0x1]]
        %v770 = vstv %s769
        %v771 = vmul.f32 %v704, %v770
        %v772 = vadd.f32 %v751, %v771
        %v773 = vmul.f32 %v687, %v770
        %v775 = vrot.slane %v773, 1
        %v777 = vadd.f32 %v752, %v775
        %v778 = vmul.f32 %v686, %v770
        %v780 = vrot.slane %v778, 7
        %781 = vrot.lane.b32.xlu0 %v780, 112
        %v782 = vpop.permute.xlu0 %781
        %v784 = vadd.f32 %v753, %v782
        %s785 = sld [smem:[#allocation2 + $0x25]]
        %v786 = vstv %s785
        %v787 = vmul.f32 %v704, %v786
        %v788 = vadd.f32 %v756, %v787
        %v789 = vmul.f32 %v687, %v786
        %v791 = vrot.slane %v789, 1
        %v793 = vadd.f32 %v757, %v791
        %v794 = vmul.f32 %v686, %v786
        %v796 = vrot.slane %v794, 7
        %797 = vrot.lane.b32.xlu0 %v796, 112
        %v798 = vpop.permute.xlu0 %797
        %v800 = vadd.f32 %v758, %v798
        %s801 = sld [smem:[#allocation2 + $0x49]]
        %v802 = vstv %s801
        %v803 = vmul.f32 %v704, %v802
        %v804 = vadd.f32 %v761, %v803
        %v805 = vmul.f32 %v687, %v802
        %v807 = vrot.slane %v805, 1
        %v809 = vadd.f32 %v762, %v807
        %v810 = vmul.f32 %v686, %v802
        %v812 = vrot.slane %v810, 7
        %813 = vrot.lane.b32.xlu0 %v812, 112
        %v814 = vpop.permute.xlu0 %813
        %v816 = vadd.f32 %v763, %v814
        %s817 = sld [smem:[#allocation2 + $0x6d]]
        %v818 = vstv %s817
        %v819 = vmul.f32 %v704, %v818
        %v820 = vadd.f32 %v766, %v819
        %v821 = vmul.f32 %v687, %v818
        %v823 = vrot.slane %v821, 1
        %v825 = vadd.f32 %v767, %v823
        %v826 = vmul.f32 %v686, %v818
        %v828 = vrot.slane %v826, 7
        %829 = vrot.lane.b32.xlu0 %v828, 112
        %v830 = vpop.permute.xlu0 %829
        %v832 = vadd.f32 %v768, %v830
        %vm833 = vcmp.lt.s32.totalorder %v713, 15
        %834 = vrot.lane.b32.xlu0 %v711, 127
        %v835 = vpop.permute.xlu0 %834
        %v837 = vsel %vm833, %v835, 0.0
        %838 = vrot.lane.b32.xlu0 %v728, 127
        %v839 = vpop.permute.xlu0 %838
        %v841 = vsel %vm833, %v839, 0.0
        %842 = vrot.lane.b32.xlu0 %v743, 127
        %v843 = vpop.permute.xlu0 %842
        %v845 = vsel %vm833, %v843, 0.0
        %s846 = sld [smem:[#allocation2 + $0x2]]
        %v847 = vstv %s846
        %v848 = vmul.f32 %v837, %v847
        %v849 = vadd.f32 %v772, %v848
        %v850 = vmul.f32 %v841, %v847
        %v851 = vadd.f32 %v777, %v850
        %v852 = vmul.f32 %v845, %v847
        %v853 = vadd.f32 %v784, %v852
        %s854 = sld [smem:[#allocation2 + $0x26]]
        %v855 = vstv %s854
        %v856 = vmul.f32 %v837, %v855
        %v857 = vadd.f32 %v788, %v856
        %v858 = vmul.f32 %v841, %v855
        %v859 = vadd.f32 %v793, %v858
        %v860 = vmul.f32 %v845, %v855
        %v861 = vadd.f32 %v800, %v860
        %s862 = sld [smem:[#allocation2 + $0x4a]]
        %v863 = vstv %s862
        %v864 = vmul.f32 %v837, %v863
        %v865 = vadd.f32 %v804, %v864
        %v866 = vmul.f32 %v841, %v863
        %v867 = vadd.f32 %v809, %v866
        %v868 = vmul.f32 %v845, %v863
        %v869 = vadd.f32 %v816, %v868
        %s870 = sld [smem:[#allocation2 + $0x6e]]
        %v871 = vstv %s870
        %v872 = vmul.f32 %v837, %v871
        %v873 = vadd.f32 %v820, %v872
        %v874 = vmul.f32 %v841, %v871
        %v875 = vadd.f32 %v825, %v874
        %v876 = vmul.f32 %v845, %v871
        %v877 = vadd.f32 %v832, %v876
        %878 = vrot.lane.b32.xlu0 %v686, 16
        %v879 = vpop.permute.xlu0 %878
        %v880 = vsel %vm705, %v879, %v686
        %881 = vrot.lane.b32.xlu0 %v880, 16
        %v882 = vpop.permute.xlu0 %881
        %v883 = vsel %vm705, %v882, %v686
        %885 = vrot.lane.b32.xlu0 %v883, 113
        %v886 = vpop.permute.xlu0 %885
        %v888 = vsel %vm714, %v886, 0.0
        %889 = vrot.lane.b32.xlu0 %v688, 16
        %v890 = vpop.permute.xlu0 %889
        %v891 = vsel %vm705, %v890, %v688
        %892 = vrot.lane.b32.xlu0 %v891, 16
        %v893 = vpop.permute.xlu0 %892
        %v894 = vsel %vm705, %v893, %v688
        %896 = vrot.lane.b32.xlu0 %v894, 113
        %v897 = vpop.permute.xlu0 %896
        %v899 = vsel %vm714, %v897, 0.0
        %900 = vrot.lane.b32.xlu0 %v689, 16
        %v901 = vpop.permute.xlu0 %900
        %v902 = vsel %vm705, %v901, %v689
        %903 = vrot.lane.b32.xlu0 %v902, 16
        %v904 = vpop.permute.xlu0 %903
        %v905 = vsel %vm705, %v904, %v689
        %907 = vrot.lane.b32.xlu0 %v905, 113
        %v908 = vpop.permute.xlu0 %907
        %v910 = vsel %vm714, %v908, 0.0
        %s911 = sld [smem:[#allocation2 + $0x3]]
        %v912 = vstv %s911
        %v913 = vmul.f32 %v888, %v912
        %v914 = vadd.f32 %v849, %v913
        %v915 = vmul.f32 %v899, %v912
        %v916 = vadd.f32 %v851, %v915
        %v917 = vmul.f32 %v910, %v912
        %v918 = vadd.f32 %v853, %v917
        %s919 = sld [smem:[#allocation2 + $0x27]]
        %v920 = vstv %s919
        %v921 = vmul.f32 %v888, %v920
        %v922 = vadd.f32 %v857, %v921
        %v923 = vmul.f32 %v899, %v920
        %v924 = vadd.f32 %v859, %v923
        %v925 = vmul.f32 %v910, %v920
        %v926 = vadd.f32 %v861, %v925
        %s927 = sld [smem:[#allocation2 + $0x4b]]
        %v928 = vstv %s927
        %v929 = vmul.f32 %v888, %v928
        %v930 = vadd.f32 %v865, %v929
        %v931 = vmul.f32 %v899, %v928
        %v932 = vadd.f32 %v867, %v931
        %v933 = vmul.f32 %v910, %v928
        %v934 = vadd.f32 %v869, %v933
        %s935 = sld [smem:[#allocation2 + $0x6f]]
        %v936 = vstv %s935
        %v937 = vmul.f32 %v888, %v936
        %v938 = vadd.f32 %v873, %v937
        %v939 = vmul.f32 %v899, %v936
        %v940 = vadd.f32 %v875, %v939
        %v941 = vmul.f32 %v910, %v936
        %v942 = vadd.f32 %v877, %v941
        %s943 = sld [smem:[#allocation2 + $0x4]]
        %v944 = vstv %s943
        %v945 = vmul.f32 %v686, %v944
        %v946 = vadd.f32 %v914, %v945
        %v947 = vmul.f32 %v688, %v944
        %v948 = vadd.f32 %v916, %v947
        %v949 = vmul.f32 %v689, %v944
        %v950 = vadd.f32 %v918, %v949
        %s951 = sld [smem:[#allocation2 + $0x28]]
        %v952 = vstv %s951
        %v953 = vmul.f32 %v686, %v952
        %v954 = vadd.f32 %v922, %v953
        %v955 = vmul.f32 %v688, %v952
        %v956 = vadd.f32 %v924, %v955
        %v957 = vmul.f32 %v689, %v952
        %v958 = vadd.f32 %v926, %v957
        %s959 = sld [smem:[#allocation2 + $0x4c]]
        %v960 = vstv %s959
        %v961 = vmul.f32 %v686, %v960
        %v962 = vadd.f32 %v930, %v961
        %v963 = vmul.f32 %v688, %v960
        %v964 = vadd.f32 %v932, %v963
        %v965 = vmul.f32 %v689, %v960
        %v966 = vadd.f32 %v934, %v965
        %s967 = sld [smem:[#allocation2 + $0x70]]
        %v968 = vstv %s967
        %v969 = vmul.f32 %v686, %v968
        %v970 = vadd.f32 %v938, %v969
        %v971 = vmul.f32 %v688, %v968
        %v972 = vadd.f32 %v940, %v971
        %v973 = vmul.f32 %v689, %v968
        %v974 = vadd.f32 %v942, %v973
        %975 = vrot.lane.b32.xlu0 %v883, 127
        %v976 = vpop.permute.xlu0 %975
        %v978 = vsel %vm833, %v976, 0.0
        %979 = vrot.lane.b32.xlu0 %v894, 127
        %v980 = vpop.permute.xlu0 %979
        %v982 = vsel %vm833, %v980, 0.0
        %983 = vrot.lane.b32.xlu0 %v905, 127
        %v984 = vpop.permute.xlu0 %983
        %v986 = vsel %vm833, %v984, 0.0
        %s987 = sld [smem:[#allocation2 + $0x5]]
        %v988 = vstv %s987
        %v989 = vmul.f32 %v978, %v988
        %v990 = vadd.f32 %v946, %v989
        %v991 = vmul.f32 %v982, %v988
        %v992 = vadd.f32 %v948, %v991
        %v993 = vmul.f32 %v986, %v988
        %v994 = vadd.f32 %v950, %v993
        %s995 = sld [smem:[#allocation2 + $0x29]]
        %v996 = vstv %s995
        %v997 = vmul.f32 %v978, %v996
        %v998 = vadd.f32 %v954, %v997
        %v999 = vmul.f32 %v982, %v996
        %v1000 = vadd.f32 %v956, %v999
        %v1001 = vmul.f32 %v986, %v996
        %v1002 = vadd.f32 %v958, %v1001
        %s1003 = sld [smem:[#allocation2 + $0x4d]]
        %v1004 = vstv %s1003
        %v1005 = vmul.f32 %v978, %v1004
        %v1006 = vadd.f32 %v962, %v1005
        %v1007 = vmul.f32 %v982, %v1004
        %v1008 = vadd.f32 %v964, %v1007
        %v1009 = vmul.f32 %v986, %v1004
        %v1010 = vadd.f32 %v966, %v1009
        %s1011 = sld [smem:[#allocation2 + $0x71]]
        %v1012 = vstv %s1011
        %v1013 = vmul.f32 %v978, %v1012
        %v1014 = vadd.f32 %v970, %v1013
        %v1015 = vmul.f32 %v982, %v1012
        %v1016 = vadd.f32 %v972, %v1015
        %v1017 = vmul.f32 %v986, %v1012
        %v1018 = vadd.f32 %v974, %v1017
        %1019 = vrot.lane.b32.xlu0 %v694, 16
        %v1020 = vpop.permute.xlu0 %1019
        %v1021 = vsel %vm705, %v1020, %v694
        %1022 = vrot.lane.b32.xlu0 %v1021, 16
        %v1023 = vpop.permute.xlu0 %1022
        %v1024 = vsel %vm705, %v1023, %v694
        %1026 = vrot.lane.b32.xlu0 %v1024, 113
        %v1027 = vpop.permute.xlu0 %1026
        %v1029 = vsel %vm714, %v1027, 0.0
        %v1031 = vrot.slane %v688, 1
        %1033 = vrot.lane.b32.xlu0 %v1031, 16
        %v1034 = vpop.permute.xlu0 %1033
        %v1035 = vsel %vm705, %v1034, %v1031
        %1036 = vrot.lane.b32.xlu0 %v1035, 16
        %v1037 = vpop.permute.xlu0 %1036
        %v1038 = vsel %vm705, %v1037, %v1031
        %1040 = vrot.lane.b32.xlu0 %v1038, 113
        %v1041 = vpop.permute.xlu0 %1040
        %v1043 = vsel %vm714, %v1041, 0.0
        %v1045 = vrot.slane %v689, 1
        %1047 = vrot.lane.b32.xlu0 %v1045, 16
        %v1048 = vpop.permute.xlu0 %1047
        %v1049 = vsel %vm705, %v1048, %v1045
        %1050 = vrot.lane.b32.xlu0 %v1049, 16
        %v1051 = vpop.permute.xlu0 %1050
        %v1052 = vsel %vm705, %v1051, %v1045
        %1054 = vrot.lane.b32.xlu0 %v1052, 113
        %v1055 = vpop.permute.xlu0 %1054
        %v1057 = vsel %vm714, %v1055, 0.0
        %s1058 = sld [smem:[#allocation2 + $0x6]]
        %v1059 = vstv %s1058
        %v1060 = vmul.f32 %v1029, %v1059
        %v1061 = vadd.f32 %v990, %v1060
        %v1062 = vmul.f32 %v1043, %v1059
        %v1063 = vadd.f32 %v992, %v1062
        %v1064 = vmul.f32 %v1057, %v1059
        %v1065 = vadd.f32 %v994, %v1064
        %s1066 = sld [smem:[#allocation2 + $0x2a]]
        %v1067 = vstv %s1066
        %v1068 = vmul.f32 %v1029, %v1067
        %v1069 = vadd.f32 %v998, %v1068
        %v1070 = vmul.f32 %v1043, %v1067
        %v1071 = vadd.f32 %v1000, %v1070
        %v1072 = vmul.f32 %v1057, %v1067
        %v1073 = vadd.f32 %v1002, %v1072
        %s1074 = sld [smem:[#allocation2 + $0x4e]]
        %v1075 = vstv %s1074
        %v1076 = vmul.f32 %v1029, %v1075
        %v1077 = vadd.f32 %v1006, %v1076
        %v1078 = vmul.f32 %v1043, %v1075
        %v1079 = vadd.f32 %v1008, %v1078
        %v1080 = vmul.f32 %v1057, %v1075
        %v1081 = vadd.f32 %v1010, %v1080
        %s1082 = sld [smem:[#allocation2 + $0x72]]
        %v1083 = vstv %s1082
        %v1084 = vmul.f32 %v1029, %v1083
        %v1085 = vadd.f32 %v1014, %v1084
        %v1086 = vmul.f32 %v1043, %v1083
        %v1087 = vadd.f32 %v1016, %v1086
        %v1088 = vmul.f32 %v1057, %v1083
        %v1089 = vadd.f32 %v1018, %v1088
        %s1090 = sld [smem:[#allocation2 + $0x7]]
        %v1091 = vstv %s1090
        %v1092 = vmul.f32 %v686, %v1091
        %1094 = vrot.lane.b32.xlu0 %v1092, 112
        %v1095 = vpop.permute.xlu0 %1094
        %v1097 = vadd.f32 %v1061, %v1095
        %v1098 = vmul.f32 %v688, %v1091
        %v1100 = vrot.slane %v1098, 1
        %v1102 = vadd.f32 %v1063, %v1100
        %v1103 = vmul.f32 %v689, %v1091
        %v1105 = vrot.slane %v1103, 1
        %v1107 = vadd.f32 %v1065, %v1105
        %s1108 = sld [smem:[#allocation2 + $0x2b]]
        %v1109 = vstv %s1108
        %v1110 = vmul.f32 %v686, %v1109
        %1112 = vrot.lane.b32.xlu0 %v1110, 112
        %v1113 = vpop.permute.xlu0 %1112
        %v1115 = vadd.f32 %v1069, %v1113
        %v1116 = vmul.f32 %v688, %v1109
        %v1118 = vrot.slane %v1116, 1
        %v1120 = vadd.f32 %v1071, %v1118
        %v1121 = vmul.f32 %v689, %v1109
        %v1123 = vrot.slane %v1121, 1
        %v1125 = vadd.f32 %v1073, %v1123
        %s1126 = sld [smem:[#allocation2 + $0x4f]]
        %v1127 = vstv %s1126
        %v1128 = vmul.f32 %v686, %v1127
        %1130 = vrot.lane.b32.xlu0 %v1128, 112
        %v1131 = vpop.permute.xlu0 %1130
        %v1133 = vadd.f32 %v1077, %v1131
        %v1134 = vmul.f32 %v688, %v1127
        %v1136 = vrot.slane %v1134, 1
        %v1138 = vadd.f32 %v1079, %v1136
        %v1139 = vmul.f32 %v689, %v1127
        %v1141 = vrot.slane %v1139, 1
        %v1143 = vadd.f32 %v1081, %v1141
        %s1144 = sld [smem:[#allocation2 + $0x73]]
        %v1145 = vstv %s1144
        %v1146 = vmul.f32 %v686, %v1145
        %1148 = vrot.lane.b32.xlu0 %v1146, 112
        %v1149 = vpop.permute.xlu0 %1148
        %v1151 = vadd.f32 %v1085, %v1149
        %v1152 = vmul.f32 %v688, %v1145
        %v1154 = vrot.slane %v1152, 1
        %v1156 = vadd.f32 %v1087, %v1154
        %v1157 = vmul.f32 %v689, %v1145
        %v1159 = vrot.slane %v1157, 1
        %v1161 = vadd.f32 %v1089, %v1159
        %1162 = vrot.lane.b32.xlu0 %v1024, 127
        %v1163 = vpop.permute.xlu0 %1162
        %v1165 = vsel %vm833, %v1163, 0.0
        %1166 = vrot.lane.b32.xlu0 %v1038, 127
        %v1167 = vpop.permute.xlu0 %1166
        %v1169 = vsel %vm833, %v1167, 0.0
        %1170 = vrot.lane.b32.xlu0 %v1052, 127
        %v1171 = vpop.permute.xlu0 %1170
        %v1173 = vsel %vm833, %v1171, 0.0
        %s1174 = sld [smem:[#allocation2 + $0x8]]
        %v1175 = vstv %s1174
        %v1176 = vmul.f32 %v1165, %v1175
        %v1177 = vadd.f32 %v1097, %v1176
        %v1178 = vmul.f32 %v1169, %v1175
        %v1179 = vadd.f32 %v1102, %v1178
        %v1180 = vmul.f32 %v1173, %v1175
        %v1181 = vadd.f32 %v1107, %v1180
        %s1182 = sld [smem:[#allocation2 + $0x2c]]
        %v1183 = vstv %s1182
        %v1184 = vmul.f32 %v1165, %v1183
        %v1185 = vadd.f32 %v1115, %v1184
        %v1186 = vmul.f32 %v1169, %v1183
        %v1187 = vadd.f32 %v1120, %v1186
        %v1188 = vmul.f32 %v1173, %v1183
        %v1189 = vadd.f32 %v1125, %v1188
        %s1190 = sld [smem:[#allocation2 + $0x50]]
        %v1191 = vstv %s1190
        %v1192 = vmul.f32 %v1165, %v1191
        %v1193 = vadd.f32 %v1133, %v1192
        %v1194 = vmul.f32 %v1169, %v1191
        %v1195 = vadd.f32 %v1138, %v1194
        %v1196 = vmul.f32 %v1173, %v1191
        %v1197 = vadd.f32 %v1143, %v1196
        %s1198 = sld [smem:[#allocation2 + $0x74]]
        %v1199 = vstv %s1198
        %v1200 = vmul.f32 %v1165, %v1199
        %v1201 = vadd.f32 %v1151, %v1200
        %v1202 = vmul.f32 %v1169, %v1199
        %v1203 = vadd.f32 %v1156, %v1202
        %v1204 = vmul.f32 %v1173, %v1199
        %v1205 = vadd.f32 %v1161, %v1204
        %s1206 = scalar_lea.vmem %s671, 8
        %v1207 = vld [vmem:[%s1206] sm:$0xff]
        %s1208 = scalar_lea.vmem %s586, 2 [#allocation8]
        %v1209 = vld [vmem:[%s1208] sm:$0x3]
        %s1210 = scalar_lea.vmem %s593, 2 [#allocation9]
        %v1211 = vld [vmem:[%s1210] sm:$0x3]
        %s1212 = scalar_lea.vmem %s600, 2 [#allocation10]
        %v1213 = vld [vmem:[%s1212] sm:$0x3]
        %v1214 = vmul.f32 %v1211, %v690
        %1216 = vrot.lane.b32.xlu0 %v1207, 112
        %v1217 = vpop.permute.xlu0 %1216
        %v1219 = vrot.slane %v1217, 7
        %v1220 = vlaneseq
        %v1221 = vshrl.u32 %v1220, 7
        %v1222 = vsub.s32 1, %v1221
        %v1223 = vrot.slane %v1214, %v1222
        %v1224 = vsel %vm699, %v1223, %v1219
        %1225 = vrot.lane.b32.xlu0 %v1224, 16
        %v1226 = vpop.permute.xlu0 %1225
        %v1227 = vsel %vm705, %v1226, %v1224
        %1228 = vrot.lane.b32.xlu0 %v1227, 16
        %v1229 = vpop.permute.xlu0 %1228
        %v1230 = vsel %vm705, %v1229, %v1224
        %1232 = vrot.lane.b32.xlu0 %v1230, 113
        %v1233 = vpop.permute.xlu0 %1232
        %v1235 = vsel %vm714, %v1233, 0.0
        %v1237 = vrot.slane %v1209, 1
        %1239 = vrot.lane.b32.xlu0 %v1237, 16
        %v1240 = vpop.permute.xlu0 %1239
        %v1241 = vsel %vm705, %v1240, %v1237
        %1242 = vrot.lane.b32.xlu0 %v1241, 16
        %v1243 = vpop.permute.xlu0 %1242
        %v1244 = vsel %vm705, %v1243, %v1237
        %1246 = vrot.lane.b32.xlu0 %v1244, 113
        %v1247 = vpop.permute.xlu0 %1246
        %v1249 = vsel %vm714, %v1247, 0.0
        %v1250 = vrot.slane %v1207, 7
        %1251 = vrot.lane.b32.xlu0 %v1250, 112
        %v1252 = vpop.permute.xlu0 %1251
        %1254 = vrot.lane.b32.xlu0 %v1252, 16
        %v1255 = vpop.permute.xlu0 %1254
        %v1256 = vsel %vm705, %v1255, %v1252
        %1257 = vrot.lane.b32.xlu0 %v1256, 16
        %v1258 = vpop.permute.xlu0 %1257
        %v1259 = vsel %vm705, %v1258, %v1252
        %1261 = vrot.lane.b32.xlu0 %v1259, 113
        %v1262 = vpop.permute.xlu0 %1261
        %v1264 = vsel %vm714, %v1262, 0.0
        %s1265 = sld [smem:[#allocation2 + $0x9]]
        %v1266 = vstv %s1265
        %v1267 = vmul.f32 %v1235, %v1266
        %v1268 = vadd.f32 %v1177, %v1267
        %v1269 = vmul.f32 %v1249, %v1266
        %v1270 = vadd.f32 %v1179, %v1269
        %v1271 = vmul.f32 %v1264, %v1266
        %v1272 = vadd.f32 %v1181, %v1271
        %s1273 = sld [smem:[#allocation2 + $0x2d]]
        %v1274 = vstv %s1273
        %v1275 = vmul.f32 %v1235, %v1274
        %v1276 = vadd.f32 %v1185, %v1275
        %v1277 = vmul.f32 %v1249, %v1274
        %v1278 = vadd.f32 %v1187, %v1277
        %v1279 = vmul.f32 %v1264, %v1274
        %v1280 = vadd.f32 %v1189, %v1279
        %s1281 = sld [smem:[#allocation2 + $0x51]]
        %v1282 = vstv %s1281
        %v1283 = vmul.f32 %v1235, %v1282
        %v1284 = vadd.f32 %v1193, %v1283
        %v1285 = vmul.f32 %v1249, %v1282
        %v1286 = vadd.f32 %v1195, %v1285
        %v1287 = vmul.f32 %v1264, %v1282
        %v1288 = vadd.f32 %v1197, %v1287
        %s1289 = sld [smem:[#allocation2 + $0x75]]
        %v1290 = vstv %s1289
        %v1291 = vmul.f32 %v1235, %v1290
        %v1292 = vadd.f32 %v1201, %v1291
        %v1293 = vmul.f32 %v1249, %v1290
        %v1294 = vadd.f32 %v1203, %v1293
        %v1295 = vmul.f32 %v1264, %v1290
        %v1296 = vadd.f32 %v1205, %v1295
        %s1297 = sld [smem:[#allocation2 + $0xa]]
        %v1298 = vstv %s1297
        %v1299 = vmul.f32 %v1224, %v1298
        %v1300 = vadd.f32 %v1268, %v1299
        %v1301 = vmul.f32 %v1209, %v1298
        %v1303 = vrot.slane %v1301, 1
        %v1305 = vadd.f32 %v1270, %v1303
        %v1306 = vmul.f32 %v1207, %v1298
        %v1308 = vrot.slane %v1306, 7
        %1309 = vrot.lane.b32.xlu0 %v1308, 112
        %v1310 = vpop.permute.xlu0 %1309
        %v1312 = vadd.f32 %v1272, %v1310
        %s1313 = sld [smem:[#allocation2 + $0x2e]]
        %v1314 = vstv %s1313
        %v1315 = vmul.f32 %v1224, %v1314
        %v1316 = vadd.f32 %v1276, %v1315
        %v1317 = vmul.f32 %v1209, %v1314
        %v1319 = vrot.slane %v1317, 1
        %v1321 = vadd.f32 %v1278, %v1319
        %v1322 = vmul.f32 %v1207, %v1314
        %v1324 = vrot.slane %v1322, 7
        %1325 = vrot.lane.b32.xlu0 %v1324, 112
        %v1326 = vpop.permute.xlu0 %1325
        %v1328 = vadd.f32 %v1280, %v1326
        %s1329 = sld [smem:[#allocation2 + $0x52]]
        %v1330 = vstv %s1329
        %v1331 = vmul.f32 %v1224, %v1330
        %v1332 = vadd.f32 %v1284, %v1331
        %v1333 = vmul.f32 %v1209, %v1330
        %v1335 = vrot.slane %v1333, 1
        %v1337 = vadd.f32 %v1286, %v1335
        %v1338 = vmul.f32 %v1207, %v1330
        %v1340 = vrot.slane %v1338, 7
        %1341 = vrot.lane.b32.xlu0 %v1340, 112
        %v1342 = vpop.permute.xlu0 %1341
        %v1344 = vadd.f32 %v1288, %v1342
        %s1345 = sld [smem:[#allocation2 + $0x76]]
        %v1346 = vstv %s1345
        %v1347 = vmul.f32 %v1224, %v1346
        %v1348 = vadd.f32 %v1292, %v1347
        %v1349 = vmul.f32 %v1209, %v1346
        %v1351 = vrot.slane %v1349, 1
        %v1353 = vadd.f32 %v1294, %v1351
        %v1354 = vmul.f32 %v1207, %v1346
        %v1356 = vrot.slane %v1354, 7
        %1357 = vrot.lane.b32.xlu0 %v1356, 112
        %v1358 = vpop.permute.xlu0 %1357
        %v1360 = vadd.f32 %v1296, %v1358
        %1361 = vrot.lane.b32.xlu0 %v1230, 127
        %v1362 = vpop.permute.xlu0 %1361
        %v1364 = vsel %vm833, %v1362, 0.0
        %1365 = vrot.lane.b32.xlu0 %v1244, 127
        %v1366 = vpop.permute.xlu0 %1365
        %v1368 = vsel %vm833, %v1366, 0.0
        %1369 = vrot.lane.b32.xlu0 %v1259, 127
        %v1370 = vpop.permute.xlu0 %1369
        %v1372 = vsel %vm833, %v1370, 0.0
        %s1373 = sld [smem:[#allocation2 + $0xb]]
        %v1374 = vstv %s1373
        %v1375 = vmul.f32 %v1364, %v1374
        %v1376 = vadd.f32 %v1300, %v1375
        %v1377 = vmul.f32 %v1368, %v1374
        %v1378 = vadd.f32 %v1305, %v1377
        %v1379 = vmul.f32 %v1372, %v1374
        %v1380 = vadd.f32 %v1312, %v1379
        %s1381 = sld [smem:[#allocation2 + $0x2f]]
        %v1382 = vstv %s1381
        %v1383 = vmul.f32 %v1364, %v1382
        %v1384 = vadd.f32 %v1316, %v1383
        %v1385 = vmul.f32 %v1368, %v1382
        %v1386 = vadd.f32 %v1321, %v1385
        %v1387 = vmul.f32 %v1372, %v1382
        %v1388 = vadd.f32 %v1328, %v1387
        %s1389 = sld [smem:[#allocation2 + $0x53]]
        %v1390 = vstv %s1389
        %v1391 = vmul.f32 %v1364, %v1390
        %v1392 = vadd.f32 %v1332, %v1391
        %v1393 = vmul.f32 %v1368, %v1390
        %v1394 = vadd.f32 %v1337, %v1393
        %v1395 = vmul.f32 %v1372, %v1390
        %v1396 = vadd.f32 %v1344, %v1395
        %s1397 = sld [smem:[#allocation2 + $0x77]]
        %v1398 = vstv %s1397
        %v1399 = vmul.f32 %v1364, %v1398
        %v1400 = vadd.f32 %v1348, %v1399
        %v1401 = vmul.f32 %v1368, %v1398
        %v1402 = vadd.f32 %v1353, %v1401
        %v1403 = vmul.f32 %v1372, %v1398
        %v1404 = vadd.f32 %v1360, %v1403
        %1405 = vrot.lane.b32.xlu0 %v1207, 16
        %v1406 = vpop.permute.xlu0 %1405
        %v1407 = vsel %vm705, %v1406, %v1207
        %1408 = vrot.lane.b32.xlu0 %v1407, 16
        %v1409 = vpop.permute.xlu0 %1408
        %v1410 = vsel %vm705, %v1409, %v1207
        %1412 = vrot.lane.b32.xlu0 %v1410, 113
        %v1413 = vpop.permute.xlu0 %1412
        %v1415 = vsel %vm714, %v1413, 0.0
        %1416 = vrot.lane.b32.xlu0 %v1211, 16
        %v1417 = vpop.permute.xlu0 %1416
        %v1418 = vsel %vm705, %v1417, %v1211
        %1419 = vrot.lane.b32.xlu0 %v1418, 16
        %v1420 = vpop.permute.xlu0 %1419
        %v1421 = vsel %vm705, %v1420, %v1211
        %1423 = vrot.lane.b32.xlu0 %v1421, 113
        %v1424 = vpop.permute.xlu0 %1423
        %v1426 = vsel %vm714, %v1424, 0.0
        %1427 = vrot.lane.b32.xlu0 %v1213, 16
        %v1428 = vpop.permute.xlu0 %1427
        %v1429 = vsel %vm705, %v1428, %v1213
        %1430 = vrot.lane.b32.xlu0 %v1429, 16
        %v1431 = vpop.permute.xlu0 %1430
        %v1432 = vsel %vm705, %v1431, %v1213
        %1434 = vrot.lane.b32.xlu0 %v1432, 113
        %v1435 = vpop.permute.xlu0 %1434
        %v1437 = vsel %vm714, %v1435, 0.0
        %s1438 = sld [smem:[#allocation2 + $0xc]]
        %v1439 = vstv %s1438
        %v1440 = vmul.f32 %v1415, %v1439
        %v1441 = vadd.f32 %v1376, %v1440
        %v1442 = vmul.f32 %v1426, %v1439
        %v1443 = vadd.f32 %v1378, %v1442
        %v1444 = vmul.f32 %v1437, %v1439
        %v1445 = vadd.f32 %v1380, %v1444
        %s1446 = sld [smem:[#allocation2 + $0x30]]
        %v1447 = vstv %s1446
        %v1448 = vmul.f32 %v1415, %v1447
        %v1449 = vadd.f32 %v1384, %v1448
        %v1450 = vmul.f32 %v1426, %v1447
        %v1451 = vadd.f32 %v1386, %v1450
        %v1452 = vmul.f32 %v1437, %v1447
        %v1453 = vadd.f32 %v1388, %v1452
        %s1454 = sld [smem:[#allocation2 + $0x54]]
        %v1455 = vstv %s1454
        %v1456 = vmul.f32 %v1415, %v1455
        %v1457 = vadd.f32 %v1392, %v1456
        %v1458 = vmul.f32 %v1426, %v1455
        %v1459 = vadd.f32 %v1394, %v1458
        %v1460 = vmul.f32 %v1437, %v1455
        %v1461 = vadd.f32 %v1396, %v1460
        %s1462 = sld [smem:[#allocation2 + $0x78]]
        %v1463 = vstv %s1462
        %v1464 = vmul.f32 %v1415, %v1463
        %v1465 = vadd.f32 %v1400, %v1464
        %v1466 = vmul.f32 %v1426, %v1463
        %v1467 = vadd.f32 %v1402, %v1466
        %v1468 = vmul.f32 %v1437, %v1463
        %v1469 = vadd.f32 %v1404, %v1468
        %s1470 = sld [smem:[#allocation2 + $0xd]]
        %v1471 = vstv %s1470
        %v1472 = vmul.f32 %v1207, %v1471
        %v1473 = vadd.f32 %v1441, %v1472
        %v1474 = vmul.f32 %v1211, %v1471
        %v1475 = vadd.f32 %v1443, %v1474
        %v1476 = vmul.f32 %v1213, %v1471
        %v1477 = vadd.f32 %v1445, %v1476
        %s1478 = sld [smem:[#allocation2 + $0x31]]
        %v1479 = vstv %s1478
        %v1480 = vmul.f32 %v1207, %v1479
        %v1481 = vadd.f32 %v1449, %v1480
        %v1482 = vmul.f32 %v1211, %v1479
        %v1483 = vadd.f32 %v1451, %v1482
        %v1484 = vmul.f32 %v1213, %v1479
        %v1485 = vadd.f32 %v1453, %v1484
        %s1486 = sld [smem:[#allocation2 + $0x55]]
        %v1487 = vstv %s1486
        %v1488 = vmul.f32 %v1207, %v1487
        %v1489 = vadd.f32 %v1457, %v1488
        %v1490 = vmul.f32 %v1211, %v1487
        %v1491 = vadd.f32 %v1459, %v1490
        %v1492 = vmul.f32 %v1213, %v1487
        %v1493 = vadd.f32 %v1461, %v1492
        %s1494 = sld [smem:[#allocation2 + $0x79]]
        %v1495 = vstv %s1494
        %v1496 = vmul.f32 %v1207, %v1495
        %v1497 = vadd.f32 %v1465, %v1496
        %v1498 = vmul.f32 %v1211, %v1495
        %v1499 = vadd.f32 %v1467, %v1498
        %v1500 = vmul.f32 %v1213, %v1495
        %v1501 = vadd.f32 %v1469, %v1500
        %1502 = vrot.lane.b32.xlu0 %v1410, 127
        %v1503 = vpop.permute.xlu0 %1502
        %v1505 = vsel %vm833, %v1503, 0.0
        %1506 = vrot.lane.b32.xlu0 %v1421, 127
        %v1507 = vpop.permute.xlu0 %1506
        %v1509 = vsel %vm833, %v1507, 0.0
        %1510 = vrot.lane.b32.xlu0 %v1432, 127
        %v1511 = vpop.permute.xlu0 %1510
        %v1513 = vsel %vm833, %v1511, 0.0
        %s1514 = sld [smem:[#allocation2 + $0xe]]
        %v1515 = vstv %s1514
        %v1516 = vmul.f32 %v1505, %v1515
        %v1517 = vadd.f32 %v1473, %v1516
        %v1518 = vmul.f32 %v1509, %v1515
        %v1519 = vadd.f32 %v1475, %v1518
        %v1520 = vmul.f32 %v1513, %v1515
        %v1521 = vadd.f32 %v1477, %v1520
        %s1522 = sld [smem:[#allocation2 + $0x32]]
        %v1523 = vstv %s1522
        %v1524 = vmul.f32 %v1505, %v1523
        %v1525 = vadd.f32 %v1481, %v1524
        %v1526 = vmul.f32 %v1509, %v1523
        %v1527 = vadd.f32 %v1483, %v1526
        %v1528 = vmul.f32 %v1513, %v1523
        %v1529 = vadd.f32 %v1485, %v1528
        %s1530 = sld [smem:[#allocation2 + $0x56]]
        %v1531 = vstv %s1530
        %v1532 = vmul.f32 %v1505, %v1531
        %v1533 = vadd.f32 %v1489, %v1532
        %v1534 = vmul.f32 %v1509, %v1531
        %v1535 = vadd.f32 %v1491, %v1534
        %v1536 = vmul.f32 %v1513, %v1531
        %v1537 = vadd.f32 %v1493, %v1536
        %s1538 = sld [smem:[#allocation2 + $0x7a]]
        %v1539 = vstv %s1538
        %v1540 = vmul.f32 %v1505, %v1539
        %v1541 = vadd.f32 %v1497, %v1540
        %v1542 = vmul.f32 %v1509, %v1539
        %v1543 = vadd.f32 %v1499, %v1542
        %v1544 = vmul.f32 %v1513, %v1539
        %v1545 = vadd.f32 %v1501, %v1544
        %1546 = vrot.lane.b32.xlu0 %v1217, 16
        %v1547 = vpop.permute.xlu0 %1546
        %v1548 = vsel %vm705, %v1547, %v1217
        %1549 = vrot.lane.b32.xlu0 %v1548, 16
        %v1550 = vpop.permute.xlu0 %1549
        %v1551 = vsel %vm705, %v1550, %v1217
        %1553 = vrot.lane.b32.xlu0 %v1551, 113
        %v1554 = vpop.permute.xlu0 %1553
        %v1556 = vsel %vm714, %v1554, 0.0
        %v1558 = vrot.slane %v1211, 1
        %1560 = vrot.lane.b32.xlu0 %v1558, 16
        %v1561 = vpop.permute.xlu0 %1560
        %v1562 = vsel %vm705, %v1561, %v1558
        %1563 = vrot.lane.b32.xlu0 %v1562, 16
        %v1564 = vpop.permute.xlu0 %1563
        %v1565 = vsel %vm705, %v1564, %v1558
        %1567 = vrot.lane.b32.xlu0 %v1565, 113
        %v1568 = vpop.permute.xlu0 %1567
        %v1570 = vsel %vm714, %v1568, 0.0
        %v1572 = vrot.slane %v1213, 1
        %1574 = vrot.lane.b32.xlu0 %v1572, 16
        %v1575 = vpop.permute.xlu0 %1574
        %v1576 = vsel %vm705, %v1575, %v1572
        %1577 = vrot.lane.b32.xlu0 %v1576, 16
        %v1578 = vpop.permute.xlu0 %1577
        %v1579 = vsel %vm705, %v1578, %v1572
        %1581 = vrot.lane.b32.xlu0 %v1579, 113
        %v1582 = vpop.permute.xlu0 %1581
        %v1584 = vsel %vm714, %v1582, 0.0
        %s1585 = sld [smem:[#allocation2 + $0xf]]
        %v1586 = vstv %s1585
        %v1587 = vmul.f32 %v1556, %v1586
        %v1588 = vadd.f32 %v1517, %v1587
        %v1589 = vmul.f32 %v1570, %v1586
        %v1590 = vadd.f32 %v1519, %v1589
        %v1591 = vmul.f32 %v1584, %v1586
        %v1592 = vadd.f32 %v1521, %v1591
        %s1593 = sld [smem:[#allocation2 + $0x33]]
        %v1594 = vstv %s1593
        %v1595 = vmul.f32 %v1556, %v1594
        %v1596 = vadd.f32 %v1525, %v1595
        %v1597 = vmul.f32 %v1570, %v1594
        %v1598 = vadd.f32 %v1527, %v1597
        %v1599 = vmul.f32 %v1584, %v1594
        %v1600 = vadd.f32 %v1529, %v1599
        %s1601 = sld [smem:[#allocation2 + $0x57]]
        %v1602 = vstv %s1601
        %v1603 = vmul.f32 %v1556, %v1602
        %v1604 = vadd.f32 %v1533, %v1603
        %v1605 = vmul.f32 %v1570, %v1602
        %v1606 = vadd.f32 %v1535, %v1605
        %v1607 = vmul.f32 %v1584, %v1602
        %v1608 = vadd.f32 %v1537, %v1607
        %s1609 = sld [smem:[#allocation2 + $0x7b]]
        %v1610 = vstv %s1609
        %v1611 = vmul.f32 %v1556, %v1610
        %v1612 = vadd.f32 %v1541, %v1611
        %v1613 = vmul.f32 %v1570, %v1610
        %v1614 = vadd.f32 %v1543, %v1613
        %v1615 = vmul.f32 %v1584, %v1610
        %v1616 = vadd.f32 %v1545, %v1615
        %s1617 = sld [smem:[#allocation2 + $0x10]]
        %v1618 = vstv %s1617
        %v1619 = vmul.f32 %v1207, %v1618
        %1621 = vrot.lane.b32.xlu0 %v1619, 112
        %v1622 = vpop.permute.xlu0 %1621
        %v1624 = vadd.f32 %v1588, %v1622
        %v1625 = vmul.f32 %v1211, %v1618
        %v1627 = vrot.slane %v1625, 1
        %v1629 = vadd.f32 %v1590, %v1627
        %v1630 = vmul.f32 %v1213, %v1618
        %v1632 = vrot.slane %v1630, 1
        %v1634 = vadd.f32 %v1592, %v1632
        %s1635 = sld [smem:[#allocation2 + $0x34]]
        %v1636 = vstv %s1635
        %v1637 = vmul.f32 %v1207, %v1636
        %1639 = vrot.lane.b32.xlu0 %v1637, 112
        %v1640 = vpop.permute.xlu0 %1639
        %v1642 = vadd.f32 %v1596, %v1640
        %v1643 = vmul.f32 %v1211, %v1636
        %v1645 = vrot.slane %v1643, 1
        %v1647 = vadd.f32 %v1598, %v1645
        %v1648 = vmul.f32 %v1213, %v1636
        %v1650 = vrot.slane %v1648, 1
        %v1652 = vadd.f32 %v1600, %v1650
        %s1653 = sld [smem:[#allocation2 + $0x58]]
        %v1654 = vstv %s1653
        %v1655 = vmul.f32 %v1207, %v1654
        %1657 = vrot.lane.b32.xlu0 %v1655, 112
        %v1658 = vpop.permute.xlu0 %1657
        %v1660 = vadd.f32 %v1604, %v1658
        %v1661 = vmul.f32 %v1211, %v1654
        %v1663 = vrot.slane %v1661, 1
        %v1665 = vadd.f32 %v1606, %v1663
        %v1666 = vmul.f32 %v1213, %v1654
        %v1668 = vrot.slane %v1666, 1
        %v1670 = vadd.f32 %v1608, %v1668
        %s1671 = sld [smem:[#allocation2 + $0x7c]]
        %v1672 = vstv %s1671
        %v1673 = vmul.f32 %v1207, %v1672
        %1675 = vrot.lane.b32.xlu0 %v1673, 112
        %v1676 = vpop.permute.xlu0 %1675
        %v1678 = vadd.f32 %v1612, %v1676
        %v1679 = vmul.f32 %v1211, %v1672
        %v1681 = vrot.slane %v1679, 1
        %v1683 = vadd.f32 %v1614, %v1681
        %v1684 = vmul.f32 %v1213, %v1672
        %v1686 = vrot.slane %v1684, 1
        %v1688 = vadd.f32 %v1616, %v1686
        %1689 = vrot.lane.b32.xlu0 %v1551, 127
        %v1690 = vpop.permute.xlu0 %1689
        %v1692 = vsel %vm833, %v1690, 0.0
        %1693 = vrot.lane.b32.xlu0 %v1565, 127
        %v1694 = vpop.permute.xlu0 %1693
        %v1696 = vsel %vm833, %v1694, 0.0
        %1697 = vrot.lane.b32.xlu0 %v1579, 127
        %v1698 = vpop.permute.xlu0 %1697
        %v1700 = vsel %vm833, %v1698, 0.0
        %s1701 = sld [smem:[#allocation2 + $0x11]]
        %v1702 = vstv %s1701
        %v1703 = vmul.f32 %v1692, %v1702
        %v1704 = vadd.f32 %v1624, %v1703
        %v1705 = vmul.f32 %v1696, %v1702
        %v1706 = vadd.f32 %v1629, %v1705
        %v1707 = vmul.f32 %v1700, %v1702
        %v1708 = vadd.f32 %v1634, %v1707
        %s1709 = sld [smem:[#allocation2 + $0x35]]
        %v1710 = vstv %s1709
        %v1711 = vmul.f32 %v1692, %v1710
        %v1712 = vadd.f32 %v1642, %v1711
        %v1713 = vmul.f32 %v1696, %v1710
        %v1714 = vadd.f32 %v1647, %v1713
        %v1715 = vmul.f32 %v1700, %v1710
        %v1716 = vadd.f32 %v1652, %v1715
        %s1717 = sld [smem:[#allocation2 + $0x59]]
        %v1718 = vstv %s1717
        %v1719 = vmul.f32 %v1692, %v1718
        %v1720 = vadd.f32 %v1660, %v1719
        %v1721 = vmul.f32 %v1696, %v1718
        %v1722 = vadd.f32 %v1665, %v1721
        %v1723 = vmul.f32 %v1700, %v1718
        %v1724 = vadd.f32 %v1670, %v1723
        %s1725 = sld [smem:[#allocation2 + $0x7d]]
        %v1726 = vstv %s1725
        %v1727 = vmul.f32 %v1692, %v1726
        %v1728 = vadd.f32 %v1678, %v1727
        %v1729 = vmul.f32 %v1696, %v1726
        %v1730 = vadd.f32 %v1683, %v1729
        %v1731 = vmul.f32 %v1700, %v1726
        %v1732 = vadd.f32 %v1688, %v1731
        %s1733 = scalar_lea.vmem %s671, 16
        %v1734 = vld [vmem:[%s1733] sm:$0xff]
        %s1735 = scalar_lea.vmem %s586, 4 [#allocation8]
        %v1736 = vld [vmem:[%s1735] sm:$0x3]
        %s1737 = scalar_lea.vmem %s593, 4 [#allocation9]
        %v1738 = vld [vmem:[%s1737] sm:$0x3]
        %s1739 = scalar_lea.vmem %s600, 4 [#allocation10]
        %v1740 = vld [vmem:[%s1739] sm:$0x3]
        %v1741 = vmul.f32 %v1738, %v690
        %1743 = vrot.lane.b32.xlu0 %v1734, 112
        %v1744 = vpop.permute.xlu0 %1743
        %v1746 = vrot.slane %v1744, 7
        %v1747 = vlaneseq
        %v1748 = vshrl.u32 %v1747, 7
        %v1749 = vsub.s32 1, %v1748
        %v1750 = vrot.slane %v1741, %v1749
        %v1751 = vsel %vm699, %v1750, %v1746
        %1752 = vrot.lane.b32.xlu0 %v1751, 16
        %v1753 = vpop.permute.xlu0 %1752
        %v1754 = vsel %vm705, %v1753, %v1751
        %1755 = vrot.lane.b32.xlu0 %v1754, 16
        %v1756 = vpop.permute.xlu0 %1755
        %v1757 = vsel %vm705, %v1756, %v1751
        %1759 = vrot.lane.b32.xlu0 %v1757, 113
        %v1760 = vpop.permute.xlu0 %1759
        %v1762 = vsel %vm714, %v1760, 0.0
        %v1764 = vrot.slane %v1736, 1
        %1766 = vrot.lane.b32.xlu0 %v1764, 16
        %v1767 = vpop.permute.xlu0 %1766
        %v1768 = vsel %vm705, %v1767, %v1764
        %1769 = vrot.lane.b32.xlu0 %v1768, 16
        %v1770 = vpop.permute.xlu0 %1769
        %v1771 = vsel %vm705, %v1770, %v1764
        %1773 = vrot.lane.b32.xlu0 %v1771, 113
        %v1774 = vpop.permute.xlu0 %1773
        %v1776 = vsel %vm714, %v1774, 0.0
        %v1777 = vrot.slane %v1734, 7
        %1778 = vrot.lane.b32.xlu0 %v1777, 112
        %v1779 = vpop.permute.xlu0 %1778
        %1781 = vrot.lane.b32.xlu0 %v1779, 16
        %v1782 = vpop.permute.xlu0 %1781
        %v1783 = vsel %vm705, %v1782, %v1779
        %1784 = vrot.lane.b32.xlu0 %v1783, 16
        %v1785 = vpop.permute.xlu0 %1784
        %v1786 = vsel %vm705, %v1785, %v1779
        %1788 = vrot.lane.b32.xlu0 %v1786, 113
        %v1789 = vpop.permute.xlu0 %1788
        %v1791 = vsel %vm714, %v1789, 0.0
        %s1792 = sld [smem:[#allocation2 + $0x12]]
        %v1793 = vstv %s1792
        %v1794 = vmul.f32 %v1762, %v1793
        %v1795 = vadd.f32 %v1704, %v1794
        %v1796 = vmul.f32 %v1776, %v1793
        %v1797 = vadd.f32 %v1706, %v1796
        %v1798 = vmul.f32 %v1791, %v1793
        %v1799 = vadd.f32 %v1708, %v1798
        %s1800 = sld [smem:[#allocation2 + $0x36]]
        %v1801 = vstv %s1800
        %v1802 = vmul.f32 %v1762, %v1801
        %v1803 = vadd.f32 %v1712, %v1802
        %v1804 = vmul.f32 %v1776, %v1801
        %v1805 = vadd.f32 %v1714, %v1804
        %v1806 = vmul.f32 %v1791, %v1801
        %v1807 = vadd.f32 %v1716, %v1806
        %s1808 = sld [smem:[#allocation2 + $0x5a]]
        %v1809 = vstv %s1808
        %v1810 = vmul.f32 %v1762, %v1809
        %v1811 = vadd.f32 %v1720, %v1810
        %v1812 = vmul.f32 %v1776, %v1809
        %v1813 = vadd.f32 %v1722, %v1812
        %v1814 = vmul.f32 %v1791, %v1809
        %v1815 = vadd.f32 %v1724, %v1814
        %s1816 = sld [smem:[#allocation2 + $0x7e]]
        %v1817 = vstv %s1816
        %v1818 = vmul.f32 %v1762, %v1817
        %v1819 = vadd.f32 %v1728, %v1818
        %v1820 = vmul.f32 %v1776, %v1817
        %v1821 = vadd.f32 %v1730, %v1820
        %v1822 = vmul.f32 %v1791, %v1817
        %v1823 = vadd.f32 %v1732, %v1822
        %s1824 = sld [smem:[#allocation2 + $0x13]]
        %v1825 = vstv %s1824
        %v1826 = vmul.f32 %v1751, %v1825
        %v1827 = vadd.f32 %v1795, %v1826
        %v1828 = vmul.f32 %v1736, %v1825
        %v1830 = vrot.slane %v1828, 1
        %v1832 = vadd.f32 %v1797, %v1830
        %v1833 = vmul.f32 %v1734, %v1825
        %v1835 = vrot.slane %v1833, 7
        %1836 = vrot.lane.b32.xlu0 %v1835, 112
        %v1837 = vpop.permute.xlu0 %1836
        %v1839 = vadd.f32 %v1799, %v1837
        %s1840 = sld [smem:[#allocation2 + $0x37]]
        %v1841 = vstv %s1840
        %v1842 = vmul.f32 %v1751, %v1841
        %v1843 = vadd.f32 %v1803, %v1842
        %v1844 = vmul.f32 %v1736, %v1841
        %v1846 = vrot.slane %v1844, 1
        %v1848 = vadd.f32 %v1805, %v1846
        %v1849 = vmul.f32 %v1734, %v1841
        %v1851 = vrot.slane %v1849, 7
        %1852 = vrot.lane.b32.xlu0 %v1851, 112
        %v1853 = vpop.permute.xlu0 %1852
        %v1855 = vadd.f32 %v1807, %v1853
        %s1856 = sld [smem:[#allocation2 + $0x5b]]
        %v1857 = vstv %s1856
        %v1858 = vmul.f32 %v1751, %v1857
        %v1859 = vadd.f32 %v1811, %v1858
        %v1860 = vmul.f32 %v1736, %v1857
        %v1862 = vrot.slane %v1860, 1
        %v1864 = vadd.f32 %v1813, %v1862
        %v1865 = vmul.f32 %v1734, %v1857
        %v1867 = vrot.slane %v1865, 7
        %1868 = vrot.lane.b32.xlu0 %v1867, 112
        %v1869 = vpop.permute.xlu0 %1868
        %v1871 = vadd.f32 %v1815, %v1869
        %s1872 = sld [smem:[#allocation2 + $0x7f]]
        %v1873 = vstv %s1872
        %v1874 = vmul.f32 %v1751, %v1873
        %v1875 = vadd.f32 %v1819, %v1874
        %v1876 = vmul.f32 %v1736, %v1873
        %v1878 = vrot.slane %v1876, 1
        %v1880 = vadd.f32 %v1821, %v1878
        %v1881 = vmul.f32 %v1734, %v1873
        %v1883 = vrot.slane %v1881, 7
        %1884 = vrot.lane.b32.xlu0 %v1883, 112
        %v1885 = vpop.permute.xlu0 %1884
        %v1887 = vadd.f32 %v1823, %v1885
        %1888 = vrot.lane.b32.xlu0 %v1757, 127
        %v1889 = vpop.permute.xlu0 %1888
        %v1891 = vsel %vm833, %v1889, 0.0
        %1892 = vrot.lane.b32.xlu0 %v1771, 127
        %v1893 = vpop.permute.xlu0 %1892
        %v1895 = vsel %vm833, %v1893, 0.0
        %1896 = vrot.lane.b32.xlu0 %v1786, 127
        %v1897 = vpop.permute.xlu0 %1896
        %v1899 = vsel %vm833, %v1897, 0.0
        %s1900 = sld [smem:[#allocation2 + $0x14]]
        %v1901 = vstv %s1900
        %v1902 = vmul.f32 %v1891, %v1901
        %v1903 = vadd.f32 %v1827, %v1902
        %v1904 = vmul.f32 %v1895, %v1901
        %v1905 = vadd.f32 %v1832, %v1904
        %v1906 = vmul.f32 %v1899, %v1901
        %v1907 = vadd.f32 %v1839, %v1906
        %s1908 = sld [smem:[#allocation2 + $0x38]]
        %v1909 = vstv %s1908
        %v1910 = vmul.f32 %v1891, %v1909
        %v1911 = vadd.f32 %v1843, %v1910
        %v1912 = vmul.f32 %v1895, %v1909
        %v1913 = vadd.f32 %v1848, %v1912
        %v1914 = vmul.f32 %v1899, %v1909
        %v1915 = vadd.f32 %v1855, %v1914
        %s1916 = sld [smem:[#allocation2 + $0x5c]]
        %v1917 = vstv %s1916
        %v1918 = vmul.f32 %v1891, %v1917
        %v1919 = vadd.f32 %v1859, %v1918
        %v1920 = vmul.f32 %v1895, %v1917
        %v1921 = vadd.f32 %v1864, %v1920
        %v1922 = vmul.f32 %v1899, %v1917
        %v1923 = vadd.f32 %v1871, %v1922
        %s1924 = sld [smem:[#allocation2 + $0x80]]
        %v1925 = vstv %s1924
        %v1926 = vmul.f32 %v1891, %v1925
        %v1927 = vadd.f32 %v1875, %v1926
        %v1928 = vmul.f32 %v1895, %v1925
        %v1929 = vadd.f32 %v1880, %v1928
        %v1930 = vmul.f32 %v1899, %v1925
        %v1931 = vadd.f32 %v1887, %v1930
        %1932 = vrot.lane.b32.xlu0 %v1734, 16
        %v1933 = vpop.permute.xlu0 %1932
        %v1934 = vsel %vm705, %v1933, %v1734
        %1935 = vrot.lane.b32.xlu0 %v1934, 16
        %v1936 = vpop.permute.xlu0 %1935
        %v1937 = vsel %vm705, %v1936, %v1734
        %1939 = vrot.lane.b32.xlu0 %v1937, 113
        %v1940 = vpop.permute.xlu0 %1939
        %v1942 = vsel %vm714, %v1940, 0.0
        %1943 = vrot.lane.b32.xlu0 %v1738, 16
        %v1944 = vpop.permute.xlu0 %1943
        %v1945 = vsel %vm705, %v1944, %v1738
        %1946 = vrot.lane.b32.xlu0 %v1945, 16
        %v1947 = vpop.permute.xlu0 %1946
        %v1948 = vsel %vm705, %v1947, %v1738
        %1950 = vrot.lane.b32.xlu0 %v1948, 113
        %v1951 = vpop.permute.xlu0 %1950
        %v1953 = vsel %vm714, %v1951, 0.0
        %1954 = vrot.lane.b32.xlu0 %v1740, 16
        %v1955 = vpop.permute.xlu0 %1954
        %v1956 = vsel %vm705, %v1955, %v1740
        %1957 = vrot.lane.b32.xlu0 %v1956, 16
        %v1958 = vpop.permute.xlu0 %1957
        %v1959 = vsel %vm705, %v1958, %v1740
        %1961 = vrot.lane.b32.xlu0 %v1959, 113
        %v1962 = vpop.permute.xlu0 %1961
        %v1964 = vsel %vm714, %v1962, 0.0
        %s1965 = sld [smem:[#allocation2 + $0x15]]
        %v1966 = vstv %s1965
        %v1967 = vmul.f32 %v1942, %v1966
        %v1968 = vadd.f32 %v1903, %v1967
        %v1969 = vmul.f32 %v1953, %v1966
        %v1970 = vadd.f32 %v1905, %v1969
        %v1971 = vmul.f32 %v1964, %v1966
        %v1972 = vadd.f32 %v1907, %v1971
        %s1973 = sld [smem:[#allocation2 + $0x39]]
        %v1974 = vstv %s1973
        %v1975 = vmul.f32 %v1942, %v1974
        %v1976 = vadd.f32 %v1911, %v1975
        %v1977 = vmul.f32 %v1953, %v1974
        %v1978 = vadd.f32 %v1913, %v1977
        %v1979 = vmul.f32 %v1964, %v1974
        %v1980 = vadd.f32 %v1915, %v1979
        %s1981 = sld [smem:[#allocation2 + $0x5d]]
        %v1982 = vstv %s1981
        %v1983 = vmul.f32 %v1942, %v1982
        %v1984 = vadd.f32 %v1919, %v1983
        %v1985 = vmul.f32 %v1953, %v1982
        %v1986 = vadd.f32 %v1921, %v1985
        %v1987 = vmul.f32 %v1964, %v1982
        %v1988 = vadd.f32 %v1923, %v1987
        %s1989 = sld [smem:[#allocation2 + $0x81]]
        %v1990 = vstv %s1989
        %v1991 = vmul.f32 %v1942, %v1990
        %v1992 = vadd.f32 %v1927, %v1991
        %v1993 = vmul.f32 %v1953, %v1990
        %v1994 = vadd.f32 %v1929, %v1993
        %v1995 = vmul.f32 %v1964, %v1990
        %v1996 = vadd.f32 %v1931, %v1995
        %s1997 = sld [smem:[#allocation2 + $0x16]]
        %v1998 = vstv %s1997
        %v1999 = vmul.f32 %v1734, %v1998
        %v2000 = vadd.f32 %v1968, %v1999
        %v2001 = vmul.f32 %v1738, %v1998
        %v2002 = vadd.f32 %v1970, %v2001
        %v2003 = vmul.f32 %v1740, %v1998
        %v2004 = vadd.f32 %v1972, %v2003
        %s2005 = sld [smem:[#allocation2 + $0x3a]]
        %v2006 = vstv %s2005
        %v2007 = vmul.f32 %v1734, %v2006
        %v2008 = vadd.f32 %v1976, %v2007
        %v2009 = vmul.f32 %v1738, %v2006
        %v2010 = vadd.f32 %v1978, %v2009
        %v2011 = vmul.f32 %v1740, %v2006
        %v2012 = vadd.f32 %v1980, %v2011
        %s2013 = sld [smem:[#allocation2 + $0x5e]]
        %v2014 = vstv %s2013
        %v2015 = vmul.f32 %v1734, %v2014
        %v2016 = vadd.f32 %v1984, %v2015
        %v2017 = vmul.f32 %v1738, %v2014
        %v2018 = vadd.f32 %v1986, %v2017
        %v2019 = vmul.f32 %v1740, %v2014
        %v2020 = vadd.f32 %v1988, %v2019
        %s2021 = sld [smem:[#allocation2 + $0x82]]
        %v2022 = vstv %s2021
        %v2023 = vmul.f32 %v1734, %v2022
        %v2024 = vadd.f32 %v1992, %v2023
        %v2025 = vmul.f32 %v1738, %v2022
        %v2026 = vadd.f32 %v1994, %v2025
        %v2027 = vmul.f32 %v1740, %v2022
        %v2028 = vadd.f32 %v1996, %v2027
        %2029 = vrot.lane.b32.xlu0 %v1937, 127
        %v2030 = vpop.permute.xlu0 %2029
        %v2032 = vsel %vm833, %v2030, 0.0
        %2033 = vrot.lane.b32.xlu0 %v1948, 127
        %v2034 = vpop.permute.xlu0 %2033
        %v2036 = vsel %vm833, %v2034, 0.0
        %2037 = vrot.lane.b32.xlu0 %v1959, 127
        %v2038 = vpop.permute.xlu0 %2037
        %v2040 = vsel %vm833, %v2038, 0.0
        %s2041 = sld [smem:[#allocation2 + $0x17]]
        %v2042 = vstv %s2041
        %v2043 = vmul.f32 %v2032, %v2042
        %v2044 = vadd.f32 %v2000, %v2043
        %v2045 = vmul.f32 %v2036, %v2042
        %v2046 = vadd.f32 %v2002, %v2045
        %v2047 = vmul.f32 %v2040, %v2042
        %v2048 = vadd.f32 %v2004, %v2047
        %s2049 = sld [smem:[#allocation2 + $0x3b]]
        %v2050 = vstv %s2049
        %v2051 = vmul.f32 %v2032, %v2050
        %v2052 = vadd.f32 %v2008, %v2051
        %v2053 = vmul.f32 %v2036, %v2050
        %v2054 = vadd.f32 %v2010, %v2053
        %v2055 = vmul.f32 %v2040, %v2050
        %v2056 = vadd.f32 %v2012, %v2055
        %s2057 = sld [smem:[#allocation2 + $0x5f]]
        %v2058 = vstv %s2057
        %v2059 = vmul.f32 %v2032, %v2058
        %v2060 = vadd.f32 %v2016, %v2059
        %v2061 = vmul.f32 %v2036, %v2058
        %v2062 = vadd.f32 %v2018, %v2061
        %v2063 = vmul.f32 %v2040, %v2058
        %v2064 = vadd.f32 %v2020, %v2063
        %s2065 = sld [smem:[#allocation2 + $0x83]]
        %v2066 = vstv %s2065
        %v2067 = vmul.f32 %v2032, %v2066
        %v2068 = vadd.f32 %v2024, %v2067
        %v2069 = vmul.f32 %v2036, %v2066
        %v2070 = vadd.f32 %v2026, %v2069
        %v2071 = vmul.f32 %v2040, %v2066
        %v2072 = vadd.f32 %v2028, %v2071
        %2073 = vrot.lane.b32.xlu0 %v1744, 16
        %v2074 = vpop.permute.xlu0 %2073
        %v2075 = vsel %vm705, %v2074, %v1744
        %2076 = vrot.lane.b32.xlu0 %v2075, 16
        %v2077 = vpop.permute.xlu0 %2076
        %v2078 = vsel %vm705, %v2077, %v1744
        %2080 = vrot.lane.b32.xlu0 %v2078, 113
        %v2081 = vpop.permute.xlu0 %2080
        %v2083 = vsel %vm714, %v2081, 0.0
        %v2085 = vrot.slane %v1738, 1
        %2087 = vrot.lane.b32.xlu0 %v2085, 16
        %v2088 = vpop.permute.xlu0 %2087
        %v2089 = vsel %vm705, %v2088, %v2085
        %2090 = vrot.lane.b32.xlu0 %v2089, 16
        %v2091 = vpop.permute.xlu0 %2090
        %v2092 = vsel %vm705, %v2091, %v2085
        %2094 = vrot.lane.b32.xlu0 %v2092, 113
        %v2095 = vpop.permute.xlu0 %2094
        %v2097 = vsel %vm714, %v2095, 0.0
        %v2099 = vrot.slane %v1740, 1
        %2101 = vrot.lane.b32.xlu0 %v2099, 16
        %v2102 = vpop.permute.xlu0 %2101
        %v2103 = vsel %vm705, %v2102, %v2099
        %2104 = vrot.lane.b32.xlu0 %v2103, 16
        %v2105 = vpop.permute.xlu0 %2104
        %v2106 = vsel %vm705, %v2105, %v2099
        %2108 = vrot.lane.b32.xlu0 %v2106, 113
        %v2109 = vpop.permute.xlu0 %2108
        %v2111 = vsel %vm714, %v2109, 0.0
        %s2112 = sld [smem:[#allocation2 + $0x18]]
        %v2113 = vstv %s2112
        %v2114 = vmul.f32 %v2083, %v2113
        %v2115 = vadd.f32 %v2044, %v2114
        %v2116 = vmul.f32 %v2097, %v2113
        %v2117 = vadd.f32 %v2046, %v2116
        %v2118 = vmul.f32 %v2111, %v2113
        %v2119 = vadd.f32 %v2048, %v2118
        %s2120 = sld [smem:[#allocation2 + $0x3c]]
        %v2121 = vstv %s2120
        %v2122 = vmul.f32 %v2083, %v2121
        %v2123 = vadd.f32 %v2052, %v2122
        %v2124 = vmul.f32 %v2097, %v2121
        %v2125 = vadd.f32 %v2054, %v2124
        %v2126 = vmul.f32 %v2111, %v2121
        %v2127 = vadd.f32 %v2056, %v2126
        %s2128 = sld [smem:[#allocation2 + $0x60]]
        %v2129 = vstv %s2128
        %v2130 = vmul.f32 %v2083, %v2129
        %v2131 = vadd.f32 %v2060, %v2130
        %v2132 = vmul.f32 %v2097, %v2129
        %v2133 = vadd.f32 %v2062, %v2132
        %v2134 = vmul.f32 %v2111, %v2129
        %v2135 = vadd.f32 %v2064, %v2134
        %s2136 = sld [smem:[#allocation2 + $0x84]]
        %v2137 = vstv %s2136
        %v2138 = vmul.f32 %v2083, %v2137
        %v2139 = vadd.f32 %v2068, %v2138
        %v2140 = vmul.f32 %v2097, %v2137
        %v2141 = vadd.f32 %v2070, %v2140
        %v2142 = vmul.f32 %v2111, %v2137
        %v2143 = vadd.f32 %v2072, %v2142
        %s2144 = sld [smem:[#allocation2 + $0x19]]
        %v2145 = vstv %s2144
        %v2146 = vmul.f32 %v1734, %v2145
        %2148 = vrot.lane.b32.xlu0 %v2146, 112
        %v2149 = vpop.permute.xlu0 %2148
        %v2151 = vadd.f32 %v2115, %v2149
        %v2152 = vmul.f32 %v1738, %v2145
        %v2154 = vrot.slane %v2152, 1
        %v2156 = vadd.f32 %v2117, %v2154
        %v2157 = vmul.f32 %v1740, %v2145
        %v2159 = vrot.slane %v2157, 1
        %v2161 = vadd.f32 %v2119, %v2159
        %s2162 = sld [smem:[#allocation2 + $0x3d]]
        %v2163 = vstv %s2162
        %v2164 = vmul.f32 %v1734, %v2163
        %2166 = vrot.lane.b32.xlu0 %v2164, 112
        %v2167 = vpop.permute.xlu0 %2166
        %v2169 = vadd.f32 %v2123, %v2167
        %v2170 = vmul.f32 %v1738, %v2163
        %v2172 = vrot.slane %v2170, 1
        %v2174 = vadd.f32 %v2125, %v2172
        %v2175 = vmul.f32 %v1740, %v2163
        %v2177 = vrot.slane %v2175, 1
        %v2179 = vadd.f32 %v2127, %v2177
        %s2180 = sld [smem:[#allocation2 + $0x61]]
        %v2181 = vstv %s2180
        %v2182 = vmul.f32 %v1734, %v2181
        %2184 = vrot.lane.b32.xlu0 %v2182, 112
        %v2185 = vpop.permute.xlu0 %2184
        %v2187 = vadd.f32 %v2131, %v2185
        %v2188 = vmul.f32 %v1738, %v2181
        %v2190 = vrot.slane %v2188, 1
        %v2192 = vadd.f32 %v2133, %v2190
        %v2193 = vmul.f32 %v1740, %v2181
        %v2195 = vrot.slane %v2193, 1
        %v2197 = vadd.f32 %v2135, %v2195
        %s2198 = sld [smem:[#allocation2 + $0x85]]
        %v2199 = vstv %s2198
        %v2200 = vmul.f32 %v1734, %v2199
        %2202 = vrot.lane.b32.xlu0 %v2200, 112
        %v2203 = vpop.permute.xlu0 %2202
        %v2205 = vadd.f32 %v2139, %v2203
        %v2206 = vmul.f32 %v1738, %v2199
        %v2208 = vrot.slane %v2206, 1
        %v2210 = vadd.f32 %v2141, %v2208
        %v2211 = vmul.f32 %v1740, %v2199
        %v2213 = vrot.slane %v2211, 1
        %v2215 = vadd.f32 %v2143, %v2213
        %2216 = vrot.lane.b32.xlu0 %v2078, 127
        %v2217 = vpop.permute.xlu0 %2216
        %v2219 = vsel %vm833, %v2217, 0.0
        %2220 = vrot.lane.b32.xlu0 %v2092, 127
        %v2221 = vpop.permute.xlu0 %2220
        %v2223 = vsel %vm833, %v2221, 0.0
        %2224 = vrot.lane.b32.xlu0 %v2106, 127
        %v2225 = vpop.permute.xlu0 %2224
        %v2227 = vsel %vm833, %v2225, 0.0
        %s2228 = sld [smem:[#allocation2 + $0x1a]]
        %v2229 = vstv %s2228
        %v2230 = vmul.f32 %v2219, %v2229
        %v2231 = vadd.f32 %v2151, %v2230
        %v2232 = vmul.f32 %v2223, %v2229
        %v2233 = vadd.f32 %v2156, %v2232
        %v2234 = vmul.f32 %v2227, %v2229
        %v2235 = vadd.f32 %v2161, %v2234
        %s2236 = sld [smem:[#allocation2 + $0x3e]]
        %v2237 = vstv %s2236
        %v2238 = vmul.f32 %v2219, %v2237
        %v2239 = vadd.f32 %v2169, %v2238
        %v2240 = vmul.f32 %v2223, %v2237
        %v2241 = vadd.f32 %v2174, %v2240
        %v2242 = vmul.f32 %v2227, %v2237
        %v2243 = vadd.f32 %v2179, %v2242
        %s2244 = sld [smem:[#allocation2 + $0x62]]
        %v2245 = vstv %s2244
        %v2246 = vmul.f32 %v2219, %v2245
        %v2247 = vadd.f32 %v2187, %v2246
        %v2248 = vmul.f32 %v2223, %v2245
        %v2249 = vadd.f32 %v2192, %v2248
        %v2250 = vmul.f32 %v2227, %v2245
        %v2251 = vadd.f32 %v2197, %v2250
        %s2252 = sld [smem:[#allocation2 + $0x86]]
        %v2253 = vstv %s2252
        %v2254 = vmul.f32 %v2219, %v2253
        %v2255 = vadd.f32 %v2205, %v2254
        %v2256 = vmul.f32 %v2223, %v2253
        %v2257 = vadd.f32 %v2210, %v2256
        %v2258 = vmul.f32 %v2227, %v2253
        %v2259 = vadd.f32 %v2215, %v2258
        %s2260 = scalar_lea.vmem %s671, 24
        %v2261 = vld [vmem:[%s2260] sm:$0xff]
        %s2262 = scalar_lea.vmem %s586, 6 [#allocation8]
        %v2263 = vld [vmem:[%s2262] sm:$0x3]
        %s2264 = scalar_lea.vmem %s593, 6 [#allocation9]
        %v2265 = vld [vmem:[%s2264] sm:$0x3]
        %s2266 = scalar_lea.vmem %s600, 6 [#allocation10]
        %v2267 = vld [vmem:[%s2266] sm:$0x3]
        %v2268 = vmul.f32 %v2265, %v690
        %2270 = vrot.lane.b32.xlu0 %v2261, 112
        %v2271 = vpop.permute.xlu0 %2270
        %v2273 = vrot.slane %v2271, 7
        %v2274 = vlaneseq
        %v2275 = vshrl.u32 %v2274, 7
        %v2276 = vsub.s32 1, %v2275
        %v2277 = vrot.slane %v2268, %v2276
        %v2278 = vsel %vm699, %v2277, %v2273
        %2279 = vrot.lane.b32.xlu0 %v2278, 16
        %v2280 = vpop.permute.xlu0 %2279
        %v2281 = vsel %vm705, %v2280, %v2278
        %2282 = vrot.lane.b32.xlu0 %v2281, 16
        %v2283 = vpop.permute.xlu0 %2282
        %v2284 = vsel %vm705, %v2283, %v2278
        %2286 = vrot.lane.b32.xlu0 %v2284, 113
        %v2287 = vpop.permute.xlu0 %2286
        %v2289 = vsel %vm714, %v2287, 0.0
        %v2291 = vrot.slane %v2263, 1
        %2293 = vrot.lane.b32.xlu0 %v2291, 16
        %v2294 = vpop.permute.xlu0 %2293
        %v2295 = vsel %vm705, %v2294, %v2291
        %2296 = vrot.lane.b32.xlu0 %v2295, 16
        %v2297 = vpop.permute.xlu0 %2296
        %v2298 = vsel %vm705, %v2297, %v2291
        %2300 = vrot.lane.b32.xlu0 %v2298, 113
        %v2301 = vpop.permute.xlu0 %2300
        %v2303 = vsel %vm714, %v2301, 0.0
        %v2304 = vrot.slane %v2261, 7
        %2305 = vrot.lane.b32.xlu0 %v2304, 112
        %v2306 = vpop.permute.xlu0 %2305
        %2308 = vrot.lane.b32.xlu0 %v2306, 16
        %v2309 = vpop.permute.xlu0 %2308
        %v2310 = vsel %vm705, %v2309, %v2306
        %2311 = vrot.lane.b32.xlu0 %v2310, 16
        %v2312 = vpop.permute.xlu0 %2311
        %v2313 = vsel %vm705, %v2312, %v2306
        %2315 = vrot.lane.b32.xlu0 %v2313, 113
        %v2316 = vpop.permute.xlu0 %2315
        %v2318 = vsel %vm714, %v2316, 0.0
        %s2319 = sld [smem:[#allocation2 + $0x1b]]
        %v2320 = vstv %s2319
        %v2321 = vmul.f32 %v2289, %v2320
        %v2322 = vadd.f32 %v2231, %v2321
        %v2323 = vmul.f32 %v2303, %v2320
        %v2324 = vadd.f32 %v2233, %v2323
        %v2325 = vmul.f32 %v2318, %v2320
        %v2326 = vadd.f32 %v2235, %v2325
        %s2327 = sld [smem:[#allocation2 + $0x3f]]
        %v2328 = vstv %s2327
        %v2329 = vmul.f32 %v2289, %v2328
        %v2330 = vadd.f32 %v2239, %v2329
        %v2331 = vmul.f32 %v2303, %v2328
        %v2332 = vadd.f32 %v2241, %v2331
        %v2333 = vmul.f32 %v2318, %v2328
        %v2334 = vadd.f32 %v2243, %v2333
        %s2335 = sld [smem:[#allocation2 + $0x63]]
        %v2336 = vstv %s2335
        %v2337 = vmul.f32 %v2289, %v2336
        %v2338 = vadd.f32 %v2247, %v2337
        %v2339 = vmul.f32 %v2303, %v2336
        %v2340 = vadd.f32 %v2249, %v2339
        %v2341 = vmul.f32 %v2318, %v2336
        %v2342 = vadd.f32 %v2251, %v2341
        %s2343 = sld [smem:[#allocation2 + $0x87]]
        %v2344 = vstv %s2343
        %v2345 = vmul.f32 %v2289, %v2344
        %v2346 = vadd.f32 %v2255, %v2345
        %v2347 = vmul.f32 %v2303, %v2344
        %v2348 = vadd.f32 %v2257, %v2347
        %v2349 = vmul.f32 %v2318, %v2344
        %v2350 = vadd.f32 %v2259, %v2349
        %s2351 = sld [smem:[#allocation2 + $0x1c]]
        %v2352 = vstv %s2351
        %v2353 = vmul.f32 %v2278, %v2352
        %v2354 = vadd.f32 %v2322, %v2353
        %v2355 = vmul.f32 %v2263, %v2352
        %v2357 = vrot.slane %v2355, 1
        %v2359 = vadd.f32 %v2324, %v2357
        %v2360 = vmul.f32 %v2261, %v2352
        %v2362 = vrot.slane %v2360, 7
        %2363 = vrot.lane.b32.xlu0 %v2362, 112
        %v2364 = vpop.permute.xlu0 %2363
        %v2366 = vadd.f32 %v2326, %v2364
        %s2367 = sld [smem:[#allocation2 + $0x40]]
        %v2368 = vstv %s2367
        %v2369 = vmul.f32 %v2278, %v2368
        %v2370 = vadd.f32 %v2330, %v2369
        %v2371 = vmul.f32 %v2263, %v2368
        %v2373 = vrot.slane %v2371, 1
        %v2375 = vadd.f32 %v2332, %v2373
        %v2376 = vmul.f32 %v2261, %v2368
        %v2378 = vrot.slane %v2376, 7
        %2379 = vrot.lane.b32.xlu0 %v2378, 112
        %v2380 = vpop.permute.xlu0 %2379
        %v2382 = vadd.f32 %v2334, %v2380
        %s2383 = sld [smem:[#allocation2 + $0x64]]
        %v2384 = vstv %s2383
        %v2385 = vmul.f32 %v2278, %v2384
        %v2386 = vadd.f32 %v2338, %v2385
        %v2387 = vmul.f32 %v2263, %v2384
        %v2389 = vrot.slane %v2387, 1
        %v2391 = vadd.f32 %v2340, %v2389
        %v2392 = vmul.f32 %v2261, %v2384
        %v2394 = vrot.slane %v2392, 7
        %2395 = vrot.lane.b32.xlu0 %v2394, 112
        %v2396 = vpop.permute.xlu0 %2395
        %v2398 = vadd.f32 %v2342, %v2396
        %s2399 = sld [smem:[#allocation2 + $0x88]]
        %v2400 = vstv %s2399
        %v2401 = vmul.f32 %v2278, %v2400
        %v2402 = vadd.f32 %v2346, %v2401
        %v2403 = vmul.f32 %v2263, %v2400
        %v2405 = vrot.slane %v2403, 1
        %v2407 = vadd.f32 %v2348, %v2405
        %v2408 = vmul.f32 %v2261, %v2400
        %v2410 = vrot.slane %v2408, 7
        %2411 = vrot.lane.b32.xlu0 %v2410, 112
        %v2412 = vpop.permute.xlu0 %2411
        %v2414 = vadd.f32 %v2350, %v2412
        %2415 = vrot.lane.b32.xlu0 %v2284, 127
        %v2416 = vpop.permute.xlu0 %2415
        %v2418 = vsel %vm833, %v2416, 0.0
        %2419 = vrot.lane.b32.xlu0 %v2298, 127
        %v2420 = vpop.permute.xlu0 %2419
        %v2422 = vsel %vm833, %v2420, 0.0
        %2423 = vrot.lane.b32.xlu0 %v2313, 127
        %v2424 = vpop.permute.xlu0 %2423
        %v2426 = vsel %vm833, %v2424, 0.0
        %s2427 = sld [smem:[#allocation2 + $0x1d]]
        %v2428 = vstv %s2427
        %v2429 = vmul.f32 %v2418, %v2428
        %v2430 = vadd.f32 %v2354, %v2429
        %v2431 = vmul.f32 %v2422, %v2428
        %v2432 = vadd.f32 %v2359, %v2431
        %v2433 = vmul.f32 %v2426, %v2428
        %v2434 = vadd.f32 %v2366, %v2433
        %s2435 = sld [smem:[#allocation2 + $0x41]]
        %v2436 = vstv %s2435
        %v2437 = vmul.f32 %v2418, %v2436
        %v2438 = vadd.f32 %v2370, %v2437
        %v2439 = vmul.f32 %v2422, %v2436
        %v2440 = vadd.f32 %v2375, %v2439
        %v2441 = vmul.f32 %v2426, %v2436
        %v2442 = vadd.f32 %v2382, %v2441
        %s2443 = sld [smem:[#allocation2 + $0x65]]
        %v2444 = vstv %s2443
        %v2445 = vmul.f32 %v2418, %v2444
        %v2446 = vadd.f32 %v2386, %v2445
        %v2447 = vmul.f32 %v2422, %v2444
        %v2448 = vadd.f32 %v2391, %v2447
        %v2449 = vmul.f32 %v2426, %v2444
        %v2450 = vadd.f32 %v2398, %v2449
        %s2451 = sld [smem:[#allocation2 + $0x89]]
        %v2452 = vstv %s2451
        %v2453 = vmul.f32 %v2418, %v2452
        %v2454 = vadd.f32 %v2402, %v2453
        %v2455 = vmul.f32 %v2422, %v2452
        %v2456 = vadd.f32 %v2407, %v2455
        %v2457 = vmul.f32 %v2426, %v2452
        %v2458 = vadd.f32 %v2414, %v2457
        %2459 = vrot.lane.b32.xlu0 %v2261, 16
        %v2460 = vpop.permute.xlu0 %2459
        %v2461 = vsel %vm705, %v2460, %v2261
        %2462 = vrot.lane.b32.xlu0 %v2461, 16
        %v2463 = vpop.permute.xlu0 %2462
        %v2464 = vsel %vm705, %v2463, %v2261
        %2466 = vrot.lane.b32.xlu0 %v2464, 113
        %v2467 = vpop.permute.xlu0 %2466
        %v2469 = vsel %vm714, %v2467, 0.0
        %2470 = vrot.lane.b32.xlu0 %v2265, 16
        %v2471 = vpop.permute.xlu0 %2470
        %v2472 = vsel %vm705, %v2471, %v2265
        %2473 = vrot.lane.b32.xlu0 %v2472, 16
        %v2474 = vpop.permute.xlu0 %2473
        %v2475 = vsel %vm705, %v2474, %v2265
        %2477 = vrot.lane.b32.xlu0 %v2475, 113
        %v2478 = vpop.permute.xlu0 %2477
        %v2480 = vsel %vm714, %v2478, 0.0
        %2481 = vrot.lane.b32.xlu0 %v2267, 16
        %v2482 = vpop.permute.xlu0 %2481
        %v2483 = vsel %vm705, %v2482, %v2267
        %2484 = vrot.lane.b32.xlu0 %v2483, 16
        %v2485 = vpop.permute.xlu0 %2484
        %v2486 = vsel %vm705, %v2485, %v2267
        %2488 = vrot.lane.b32.xlu0 %v2486, 113
        %v2489 = vpop.permute.xlu0 %2488
        %v2491 = vsel %vm714, %v2489, 0.0
        %s2492 = sld [smem:[#allocation2 + $0x1e]]
        %v2493 = vstv %s2492
        %v2494 = vmul.f32 %v2469, %v2493
        %v2495 = vadd.f32 %v2430, %v2494
        %v2496 = vmul.f32 %v2480, %v2493
        %v2497 = vadd.f32 %v2432, %v2496
        %v2498 = vmul.f32 %v2491, %v2493
        %v2499 = vadd.f32 %v2434, %v2498
        %s2500 = sld [smem:[#allocation2 + $0x42]]
        %v2501 = vstv %s2500
        %v2502 = vmul.f32 %v2469, %v2501
        %v2503 = vadd.f32 %v2438, %v2502
        %v2504 = vmul.f32 %v2480, %v2501
        %v2505 = vadd.f32 %v2440, %v2504
        %v2506 = vmul.f32 %v2491, %v2501
        %v2507 = vadd.f32 %v2442, %v2506
        %s2508 = sld [smem:[#allocation2 + $0x66]]
        %v2509 = vstv %s2508
        %v2510 = vmul.f32 %v2469, %v2509
        %v2511 = vadd.f32 %v2446, %v2510
        %v2512 = vmul.f32 %v2480, %v2509
        %v2513 = vadd.f32 %v2448, %v2512
        %v2514 = vmul.f32 %v2491, %v2509
        %v2515 = vadd.f32 %v2450, %v2514
        %s2516 = sld [smem:[#allocation2 + $0x8a]]
        %v2517 = vstv %s2516
        %v2518 = vmul.f32 %v2469, %v2517
        %v2519 = vadd.f32 %v2454, %v2518
        %v2520 = vmul.f32 %v2480, %v2517
        %v2521 = vadd.f32 %v2456, %v2520
        %v2522 = vmul.f32 %v2491, %v2517
        %v2523 = vadd.f32 %v2458, %v2522
        %s2524 = sld [smem:[#allocation2 + $0x1f]]
        %v2525 = vstv %s2524
        %v2526 = vmul.f32 %v2261, %v2525
        %v2527 = vadd.f32 %v2495, %v2526
        %v2528 = vmul.f32 %v2265, %v2525
        %v2529 = vadd.f32 %v2497, %v2528
        %v2530 = vmul.f32 %v2267, %v2525
        %v2531 = vadd.f32 %v2499, %v2530
        %s2532 = sld [smem:[#allocation2 + $0x43]]
        %v2533 = vstv %s2532
        %v2534 = vmul.f32 %v2261, %v2533
        %v2535 = vadd.f32 %v2503, %v2534
        %v2536 = vmul.f32 %v2265, %v2533
        %v2537 = vadd.f32 %v2505, %v2536
        %v2538 = vmul.f32 %v2267, %v2533
        %v2539 = vadd.f32 %v2507, %v2538
        %s2540 = sld [smem:[#allocation2 + $0x67]]
        %v2541 = vstv %s2540
        %v2542 = vmul.f32 %v2261, %v2541
        %v2543 = vadd.f32 %v2511, %v2542
        %v2544 = vmul.f32 %v2265, %v2541
        %v2545 = vadd.f32 %v2513, %v2544
        %v2546 = vmul.f32 %v2267, %v2541
        %v2547 = vadd.f32 %v2515, %v2546
        %s2548 = sld [smem:[#allocation2 + $0x8b]]
        %v2549 = vstv %s2548
        %v2550 = vmul.f32 %v2261, %v2549
        %v2551 = vadd.f32 %v2519, %v2550
        %v2552 = vmul.f32 %v2265, %v2549
        %v2553 = vadd.f32 %v2521, %v2552
        %v2554 = vmul.f32 %v2267, %v2549
        %v2555 = vadd.f32 %v2523, %v2554
        %2556 = vrot.lane.b32.xlu0 %v2464, 127
        %v2557 = vpop.permute.xlu0 %2556
        %v2559 = vsel %vm833, %v2557, 0.0
        %2560 = vrot.lane.b32.xlu0 %v2475, 127
        %v2561 = vpop.permute.xlu0 %2560
        %v2563 = vsel %vm833, %v2561, 0.0
        %2564 = vrot.lane.b32.xlu0 %v2486, 127
        %v2565 = vpop.permute.xlu0 %2564
        %v2567 = vsel %vm833, %v2565, 0.0
        %s2568 = sld [smem:[#allocation2 + $0x20]]
        %v2569 = vstv %s2568
        %v2570 = vmul.f32 %v2559, %v2569
        %v2571 = vadd.f32 %v2527, %v2570
        %v2572 = vmul.f32 %v2563, %v2569
        %v2573 = vadd.f32 %v2529, %v2572
        %v2574 = vmul.f32 %v2567, %v2569
        %v2575 = vadd.f32 %v2531, %v2574
        %s2576 = sld [smem:[#allocation2 + $0x44]]
        %v2577 = vstv %s2576
        %v2578 = vmul.f32 %v2559, %v2577
        %v2579 = vadd.f32 %v2535, %v2578
        %v2580 = vmul.f32 %v2563, %v2577
        %v2581 = vadd.f32 %v2537, %v2580
        %v2582 = vmul.f32 %v2567, %v2577
        %v2583 = vadd.f32 %v2539, %v2582
        %s2584 = sld [smem:[#allocation2 + $0x68]]
        %v2585 = vstv %s2584
        %v2586 = vmul.f32 %v2559, %v2585
        %v2587 = vadd.f32 %v2543, %v2586
        %v2588 = vmul.f32 %v2563, %v2585
        %v2589 = vadd.f32 %v2545, %v2588
        %v2590 = vmul.f32 %v2567, %v2585
        %v2591 = vadd.f32 %v2547, %v2590
        %s2592 = sld [smem:[#allocation2 + $0x8c]]
        %v2593 = vstv %s2592
        %v2594 = vmul.f32 %v2559, %v2593
        %v2595 = vadd.f32 %v2551, %v2594
        %v2596 = vmul.f32 %v2563, %v2593
        %v2597 = vadd.f32 %v2553, %v2596
        %v2598 = vmul.f32 %v2567, %v2593
        %v2599 = vadd.f32 %v2555, %v2598
        %2600 = vrot.lane.b32.xlu0 %v2271, 16
        %v2601 = vpop.permute.xlu0 %2600
        %v2602 = vsel %vm705, %v2601, %v2271
        %2603 = vrot.lane.b32.xlu0 %v2602, 16
        %v2604 = vpop.permute.xlu0 %2603
        %v2605 = vsel %vm705, %v2604, %v2271
        %2607 = vrot.lane.b32.xlu0 %v2605, 113
        %v2608 = vpop.permute.xlu0 %2607
        %v2610 = vsel %vm714, %v2608, 0.0
        %v2612 = vrot.slane %v2265, 1
        %2614 = vrot.lane.b32.xlu0 %v2612, 16
        %v2615 = vpop.permute.xlu0 %2614
        %v2616 = vsel %vm705, %v2615, %v2612
        %2617 = vrot.lane.b32.xlu0 %v2616, 16
        %v2618 = vpop.permute.xlu0 %2617
        %v2619 = vsel %vm705, %v2618, %v2612
        %2621 = vrot.lane.b32.xlu0 %v2619, 113
        %v2622 = vpop.permute.xlu0 %2621
        %v2624 = vsel %vm714, %v2622, 0.0
        %v2626 = vrot.slane %v2267, 1
        %2628 = vrot.lane.b32.xlu0 %v2626, 16
        %v2629 = vpop.permute.xlu0 %2628
        %v2630 = vsel %vm705, %v2629, %v2626
        %2631 = vrot.lane.b32.xlu0 %v2630, 16
        %v2632 = vpop.permute.xlu0 %2631
        %v2633 = vsel %vm705, %v2632, %v2626
        %2635 = vrot.lane.b32.xlu0 %v2633, 113
        %v2636 = vpop.permute.xlu0 %2635
        %v2638 = vsel %vm714, %v2636, 0.0
        %s2639 = sld [smem:[#allocation2 + $0x21]]
        %v2640 = vstv %s2639
        %v2641 = vmul.f32 %v2610, %v2640
        %v2642 = vadd.f32 %v2571, %v2641
        %v2643 = vmul.f32 %v2624, %v2640
        %v2644 = vadd.f32 %v2573, %v2643
        %v2645 = vmul.f32 %v2638, %v2640
        %v2646 = vadd.f32 %v2575, %v2645
        %s2647 = sld [smem:[#allocation2 + $0x45]]
        %v2648 = vstv %s2647
        %v2649 = vmul.f32 %v2610, %v2648
        %v2650 = vadd.f32 %v2579, %v2649
        %v2651 = vmul.f32 %v2624, %v2648
        %v2652 = vadd.f32 %v2581, %v2651
        %v2653 = vmul.f32 %v2638, %v2648
        %v2654 = vadd.f32 %v2583, %v2653
        %s2655 = sld [smem:[#allocation2 + $0x69]]
        %v2656 = vstv %s2655
        %v2657 = vmul.f32 %v2610, %v2656
        %v2658 = vadd.f32 %v2587, %v2657
        %v2659 = vmul.f32 %v2624, %v2656
        %v2660 = vadd.f32 %v2589, %v2659
        %v2661 = vmul.f32 %v2638, %v2656
        %v2662 = vadd.f32 %v2591, %v2661
        %s2663 = sld [smem:[#allocation2 + $0x8d]]
        %v2664 = vstv %s2663
        %v2665 = vmul.f32 %v2610, %v2664
        %v2666 = vadd.f32 %v2595, %v2665
        %v2667 = vmul.f32 %v2624, %v2664
        %v2668 = vadd.f32 %v2597, %v2667
        %v2669 = vmul.f32 %v2638, %v2664
        %v2670 = vadd.f32 %v2599, %v2669
        %s2671 = sld [smem:[#allocation2 + $0x22]]
        %v2672 = vstv %s2671
        %v2673 = vmul.f32 %v2261, %v2672
        %2675 = vrot.lane.b32.xlu0 %v2673, 112
        %v2676 = vpop.permute.xlu0 %2675
        %v2678 = vadd.f32 %v2642, %v2676
        %v2679 = vmul.f32 %v2265, %v2672
        %v2681 = vrot.slane %v2679, 1
        %v2683 = vadd.f32 %v2644, %v2681
        %v2684 = vmul.f32 %v2267, %v2672
        %v2686 = vrot.slane %v2684, 1
        %v2688 = vadd.f32 %v2646, %v2686
        %s2689 = sld [smem:[#allocation2 + $0x46]]
        %v2690 = vstv %s2689
        %v2691 = vmul.f32 %v2261, %v2690
        %2693 = vrot.lane.b32.xlu0 %v2691, 112
        %v2694 = vpop.permute.xlu0 %2693
        %v2696 = vadd.f32 %v2650, %v2694
        %v2697 = vmul.f32 %v2265, %v2690
        %v2699 = vrot.slane %v2697, 1
        %v2701 = vadd.f32 %v2652, %v2699
        %v2702 = vmul.f32 %v2267, %v2690
        %v2704 = vrot.slane %v2702, 1
        %v2706 = vadd.f32 %v2654, %v2704
        %s2707 = sld [smem:[#allocation2 + $0x6a]]
        %v2708 = vstv %s2707
        %v2709 = vmul.f32 %v2261, %v2708
        %2711 = vrot.lane.b32.xlu0 %v2709, 112
        %v2712 = vpop.permute.xlu0 %2711
        %v2714 = vadd.f32 %v2658, %v2712
        %v2715 = vmul.f32 %v2265, %v2708
        %v2717 = vrot.slane %v2715, 1
        %v2719 = vadd.f32 %v2660, %v2717
        %v2720 = vmul.f32 %v2267, %v2708
        %v2722 = vrot.slane %v2720, 1
        %v2724 = vadd.f32 %v2662, %v2722
        %s2725 = sld [smem:[#allocation2 + $0x8e]]
        %v2726 = vstv %s2725
        %v2727 = vmul.f32 %v2261, %v2726
        %2729 = vrot.lane.b32.xlu0 %v2727, 112
        %v2730 = vpop.permute.xlu0 %2729
        %v2732 = vadd.f32 %v2666, %v2730
        %v2733 = vmul.f32 %v2265, %v2726
        %v2735 = vrot.slane %v2733, 1
        %v2737 = vadd.f32 %v2668, %v2735
        %v2738 = vmul.f32 %v2267, %v2726
        %v2740 = vrot.slane %v2738, 1
        %v2742 = vadd.f32 %v2670, %v2740
        %2743 = vrot.lane.b32.xlu0 %v2605, 127
        %v2744 = vpop.permute.xlu0 %2743
        %v2746 = vsel %vm833, %v2744, 0.0
        %2747 = vrot.lane.b32.xlu0 %v2619, 127
        %v2748 = vpop.permute.xlu0 %2747
        %v2750 = vsel %vm833, %v2748, 0.0
        %2751 = vrot.lane.b32.xlu0 %v2633, 127
        %v2752 = vpop.permute.xlu0 %2751
        %v2754 = vsel %vm833, %v2752, 0.0
        %s2755 = sld [smem:[#allocation2 + $0x23]]
        %v2756 = vstv %s2755
        %v2757 = vmul.f32 %v2746, %v2756
        %v2758 = vadd.f32 %v2678, %v2757
        %v2759 = vmul.f32 %v2750, %v2756
        %v2760 = vadd.f32 %v2683, %v2759
        %v2761 = vmul.f32 %v2754, %v2756
        %v2762 = vadd.f32 %v2688, %v2761
        %s2763 = sld [smem:[#allocation2 + $0x47]]
        %v2764 = vstv %s2763
        %v2765 = vmul.f32 %v2746, %v2764
        %v2766 = vadd.f32 %v2696, %v2765
        %v2767 = vmul.f32 %v2750, %v2764
        %v2768 = vadd.f32 %v2701, %v2767
        %v2769 = vmul.f32 %v2754, %v2764
        %v2770 = vadd.f32 %v2706, %v2769
        %s2771 = sld [smem:[#allocation2 + $0x6b]]
        %v2772 = vstv %s2771
        %v2773 = vmul.f32 %v2746, %v2772
        %v2774 = vadd.f32 %v2714, %v2773
        %v2775 = vmul.f32 %v2750, %v2772
        %v2776 = vadd.f32 %v2719, %v2775
        %v2777 = vmul.f32 %v2754, %v2772
        %v2778 = vadd.f32 %v2724, %v2777
        %s2779 = sld [smem:[#allocation2 + $0x8f]]
        %v2780 = vstv %s2779
        %v2781 = vmul.f32 %v2746, %v2780
        %v2782 = vadd.f32 %v2732, %v2781
        %v2783 = vmul.f32 %v2750, %v2780
        %v2784 = vadd.f32 %v2737, %v2783
        %v2785 = vmul.f32 %v2754, %v2780
        %v2786 = vadd.f32 %v2742, %v2785
        %s2787 = sld [smem:[#allocation5]]
        %v2788 = vstv %s2787
        %v2789 = vmul.f32 %v2758, %v2788
        %v2790 = vmax.f32 %v2758, %v2766
        %v2791 = vadd.f32 %v2758, %v2766
        %s2792 = sld [smem:[#allocation5 + $0x1]]
        %v2793 = vstv %s2792
        %v2794 = vmul.f32 %v2766, %v2793
        %v2795 = vadd.f32 %v2789, %v2794
        %v2796 = vmax.f32 %v2790, %v2774
        %v2797 = vadd.f32 %v2791, %v2774
        %s2798 = sld [smem:[#allocation5 + $0x2]]
        %v2799 = vstv %s2798
        %v2800 = vmul.f32 %v2774, %v2799
        %v2801 = vadd.f32 %v2795, %v2800
        %v2802 = vmax.f32 %v2796, %v2782
        %v2803 = vadd.f32 %v2797, %v2782
        %s2804 = sld [smem:[#allocation5 + $0x3]]
        %v2805 = vstv %s2804
        %v2806 = vmul.f32 %v2782, %v2805
        %v2807 = vadd.f32 %v2801, %v2806
        %v2808 = vmul.f32 %v2803, 0.25
        %v2809 = vmul.f32 %v2760, %v2788
        %v2810 = vmax.f32 %v2760, %v2768
        %v2811 = vadd.f32 %v2760, %v2768
        %v2812 = vmul.f32 %v2768, %v2793
        %v2813 = vadd.f32 %v2809, %v2812
        %v2814 = vmax.f32 %v2810, %v2776
        %v2815 = vadd.f32 %v2811, %v2776
        %v2816 = vmul.f32 %v2776, %v2799
        %v2817 = vadd.f32 %v2813, %v2816
        %v2818 = vmax.f32 %v2814, %v2784
        %v2819 = vadd.f32 %v2815, %v2784
        %v2820 = vmul.f32 %v2784, %v2805
        %v2821 = vadd.f32 %v2817, %v2820
        %v2822 = vmul.f32 %v2819, 0.25
        %v2823 = vmul.f32 %v2818, %v690
        %v2824 = vmul.f32 %v2822, %v690
        %v2825 = vmul.f32 %v2821, %v690
        %v2826 = vmul.f32 %v2762, %v2788
        %v2827 = vmax.f32 %v2762, %v2770
        %v2828 = vadd.f32 %v2762, %v2770
        %v2829 = vmul.f32 %v2770, %v2793
        %v2830 = vadd.f32 %v2826, %v2829
        %v2831 = vmax.f32 %v2827, %v2778
        %v2832 = vadd.f32 %v2828, %v2778
        %v2833 = vmul.f32 %v2778, %v2799
        %v2834 = vadd.f32 %v2830, %v2833
        %v2835 = vmax.f32 %v2831, %v2786
        %v2836 = vadd.f32 %v2832, %v2786
        %v2837 = vmul.f32 %v2786, %v2805
        %v2838 = vadd.f32 %v2834, %v2837
        %v2839 = vmul.f32 %v2836, 0.25
        %v2840 = vmul.f32 %v2835, %v690
        %v2841 = vmul.f32 %v2839, %v690
        %v2842 = vmul.f32 %v2838, %v690
        %v2843 = vrot.slane %v2802, 7
        %v2844 = vlaneseq
        %v2845 = vshrl.u32 %v2844, 7
        %v2846 = vsub.s32 0, %v2845
        %v2847 = vrot.slane %v2823, %v2846
        %v2848 = vsel %vm699, %v2847, %v2843
        %v2849 = vrot.slane %v2802, 1
        %vm2850 = vcmp.eq.s32.totalorder %v698, 7
        %v2851 = vlaneseq
        %v2852 = vshrl.u32 %v2851, 7
        %v2853 = vsub.s32 0, %v2852
        %v2854 = vrot.slane %v2840, %v2853
        %v2855 = vsel %vm2850, %v2854, %v2849
        %2856 = vrot.lane.b32.xlu0 %v2848, 16
        %v2857 = vpop.permute.xlu0 %2856
        %v2858 = vsel %vm705, %v2857, %v2848
        %2859 = vrot.lane.b32.xlu0 %v2858, 16
        %v2860 = vpop.permute.xlu0 %2859
        %v2861 = vsel %vm705, %v2860, %v2848
        %vm2862 = vcmp.ge.s32.totalorder %v713, 2
        %2864 = vrot.lane.b32.xlu0 %v2861, 114
        %v2865 = vpop.permute.xlu0 %2864
        %v2867 = vsel %vm2862, %v2865, 0.0
        %s2868 = sld [smem:[#allocation7]]
        %v2869 = vstv %s2868
        %v2870 = vmul.f32 %v2867, %v2869
        %s2871 = sld [smem:[#allocation7 + $0x1]]
        %v2872 = vstv %s2871
        %v2873 = vmul.f32 %v2848, %v2872
        %v2874 = vadd.f32 %v2870, %v2873
        %vm2875 = vcmp.lt.s32.totalorder %v713, 14
        %2876 = vrot.lane.b32.xlu0 %v2861, 126
        %v2877 = vpop.permute.xlu0 %2876
        %v2879 = vsel %vm2875, %v2877, 0.0
        %s2880 = sld [smem:[#allocation7 + $0x2]]
        %v2881 = vstv %s2880
        %v2882 = vmul.f32 %v2879, %v2881
        %v2883 = vadd.f32 %v2874, %v2882
        %2884 = vrot.lane.b32.xlu0 %v2802, 16
        %v2885 = vpop.permute.xlu0 %2884
        %v2886 = vsel %vm705, %v2885, %v2802
        %2887 = vrot.lane.b32.xlu0 %v2886, 16
        %v2888 = vpop.permute.xlu0 %2887
        %v2889 = vsel %vm705, %v2888, %v2802
        %2891 = vrot.lane.b32.xlu0 %v2889, 114
        %v2892 = vpop.permute.xlu0 %2891
        %v2894 = vsel %vm2862, %v2892, 0.0
        %s2895 = sld [smem:[#allocation7 + $0x3]]
        %v2896 = vstv %s2895
        %v2897 = vmul.f32 %v2894, %v2896
        %v2898 = vadd.f32 %v2883, %v2897
        %s2899 = sld [smem:[#allocation7 + $0x4]]
        %v2900 = vstv %s2899
        %v2901 = vmul.f32 %v2802, %v2900
        %v2902 = vadd.f32 %v2898, %v2901
        %2903 = vrot.lane.b32.xlu0 %v2889, 126
        %v2904 = vpop.permute.xlu0 %2903
        %v2906 = vsel %vm2875, %v2904, 0.0
        %s2907 = sld [smem:[#allocation7 + $0x5]]
        %v2908 = vstv %s2907
        %v2909 = vmul.f32 %v2906, %v2908
        %v2910 = vadd.f32 %v2902, %v2909
        %2911 = vrot.lane.b32.xlu0 %v2855, 16
        %v2912 = vpop.permute.xlu0 %2911
        %v2913 = vsel %vm705, %v2912, %v2855
        %2914 = vrot.lane.b32.xlu0 %v2913, 16
        %v2915 = vpop.permute.xlu0 %2914
        %v2916 = vsel %vm705, %v2915, %v2855
        %2918 = vrot.lane.b32.xlu0 %v2916, 114
        %v2919 = vpop.permute.xlu0 %2918
        %v2921 = vsel %vm2862, %v2919, 0.0
        %s2922 = sld [smem:[#allocation7 + $0x6]]
        %v2923 = vstv %s2922
        %v2924 = vmul.f32 %v2921, %v2923
        %v2925 = vadd.f32 %v2910, %v2924
        %s2926 = sld [smem:[#allocation7 + $0x7]]
        %v2927 = vstv %s2926
        %v2928 = vmul.f32 %v2855, %v2927
        %v2929 = vadd.f32 %v2925, %v2928
        %2930 = vrot.lane.b32.xlu0 %v2916, 126
        %v2931 = vpop.permute.xlu0 %2930
        %v2933 = vsel %vm2875, %v2931, 0.0
        %s2934 = sld [smem:[#allocation7 + $0x8]]
        %v2935 = vstv %s2934
        %v2936 = vmul.f32 %v2933, %v2935
        %v2937 = vadd.f32 %v2929, %v2936
        %v2938 = vrot.slane %v2808, 7
        %v2939 = vlaneseq
        %v2940 = vshrl.u32 %v2939, 7
        %v2941 = vsub.s32 0, %v2940
        %v2942 = vrot.slane %v2824, %v2941
        %v2943 = vsel %vm699, %v2942, %v2938
        %v2944 = vrot.slane %v2808, 1
        %v2945 = vlaneseq
        %v2946 = vshrl.u32 %v2945, 7
        %v2947 = vsub.s32 0, %v2946
        %v2948 = vrot.slane %v2841, %v2947
        %v2949 = vsel %vm2850, %v2948, %v2944
        %2950 = vrot.lane.b32.xlu0 %v2943, 16
        %v2951 = vpop.permute.xlu0 %2950
        %v2952 = vsel %vm705, %v2951, %v2943
        %2953 = vrot.lane.b32.xlu0 %v2952, 16
        %v2954 = vpop.permute.xlu0 %2953
        %v2955 = vsel %vm705, %v2954, %v2943
        %2957 = vrot.lane.b32.xlu0 %v2955, 114
        %v2958 = vpop.permute.xlu0 %2957
        %v2960 = vsel %vm2862, %v2958, 0.0
        %s2961 = sld [smem:[#allocation7 + $0x9]]
        %v2962 = vstv %s2961
        %v2963 = vmul.f32 %v2960, %v2962
        %v2964 = vadd.f32 %v2937, %v2963
        %s2965 = sld [smem:[#allocation7 + $0xa]]
        %v2966 = vstv %s2965
        %v2967 = vmul.f32 %v2943, %v2966
        %v2968 = vadd.f32 %v2964, %v2967
        %2969 = vrot.lane.b32.xlu0 %v2955, 126
        %v2970 = vpop.permute.xlu0 %2969
        %v2972 = vsel %vm2875, %v2970, 0.0
        %s2973 = sld [smem:[#allocation7 + $0xb]]
        %v2974 = vstv %s2973
        %v2975 = vmul.f32 %v2972, %v2974
        %v2976 = vadd.f32 %v2968, %v2975
        %2977 = vrot.lane.b32.xlu0 %v2808, 16
        %v2978 = vpop.permute.xlu0 %2977
        %v2979 = vsel %vm705, %v2978, %v2808
        %2980 = vrot.lane.b32.xlu0 %v2979, 16
        %v2981 = vpop.permute.xlu0 %2980
        %v2982 = vsel %vm705, %v2981, %v2808
        %2984 = vrot.lane.b32.xlu0 %v2982, 114
        %v2985 = vpop.permute.xlu0 %2984
        %v2987 = vsel %vm2862, %v2985, 0.0
        %s2988 = sld [smem:[#allocation7 + $0xc]]
        %v2989 = vstv %s2988
        %v2990 = vmul.f32 %v2987, %v2989
        %v2991 = vadd.f32 %v2976, %v2990
        %s2992 = sld [smem:[#allocation7 + $0xd]]
        %v2993 = vstv %s2992
        %v2994 = vmul.f32 %v2808, %v2993
        %v2995 = vadd.f32 %v2991, %v2994
        %2996 = vrot.lane.b32.xlu0 %v2982, 126
        %v2997 = vpop.permute.xlu0 %2996
        %v2999 = vsel %vm2875, %v2997, 0.0
        %s3000 = sld [smem:[#allocation7 + $0xe]]
        %v3001 = vstv %s3000
        %v3002 = vmul.f32 %v2999, %v3001
        %v3003 = vadd.f32 %v2995, %v3002
        %3004 = vrot.lane.b32.xlu0 %v2949, 16
        %v3005 = vpop.permute.xlu0 %3004
        %v3006 = vsel %vm705, %v3005, %v2949
        %3007 = vrot.lane.b32.xlu0 %v3006, 16
        %v3008 = vpop.permute.xlu0 %3007
        %v3009 = vsel %vm705, %v3008, %v2949
        %3011 = vrot.lane.b32.xlu0 %v3009, 114
        %v3012 = vpop.permute.xlu0 %3011
        %v3014 = vsel %vm2862, %v3012, 0.0
        %s3015 = sld [smem:[#allocation7 + $0xf]]
        %v3016 = vstv %s3015
        %v3017 = vmul.f32 %v3014, %v3016
        %v3018 = vadd.f32 %v3003, %v3017
        %s3019 = sld [smem:[#allocation7 + $0x10]]
        %v3020 = vstv %s3019
        %v3021 = vmul.f32 %v2949, %v3020
        %v3022 = vadd.f32 %v3018, %v3021
        %3023 = vrot.lane.b32.xlu0 %v3009, 126
        %v3024 = vpop.permute.xlu0 %3023
        %v3026 = vsel %vm2875, %v3024, 0.0
        %s3027 = sld [smem:[#allocation7 + $0x11]]
        %v3028 = vstv %s3027
        %v3029 = vmul.f32 %v3026, %v3028
        %v3030 = vadd.f32 %v3022, %v3029
        %v3031 = vrot.slane %v2807, 7
        %v3032 = vlaneseq
        %v3033 = vshrl.u32 %v3032, 7
        %v3034 = vsub.s32 0, %v3033
        %v3035 = vrot.slane %v2825, %v3034
        %v3036 = vsel %vm699, %v3035, %v3031
        %v3037 = vrot.slane %v2807, 1
        %v3038 = vlaneseq
        %v3039 = vshrl.u32 %v3038, 7
        %v3040 = vsub.s32 0, %v3039
        %v3041 = vrot.slane %v2842, %v3040
        %v3042 = vsel %vm2850, %v3041, %v3037
        %3043 = vrot.lane.b32.xlu0 %v3036, 16
        %v3044 = vpop.permute.xlu0 %3043
        %v3045 = vsel %vm705, %v3044, %v3036
        %3046 = vrot.lane.b32.xlu0 %v3045, 16
        %v3047 = vpop.permute.xlu0 %3046
        %v3048 = vsel %vm705, %v3047, %v3036
        %3050 = vrot.lane.b32.xlu0 %v3048, 114
        %v3051 = vpop.permute.xlu0 %3050
        %v3053 = vsel %vm2862, %v3051, 0.0
        %s3054 = sld [smem:[#allocation7 + $0x12]]
        %v3055 = vstv %s3054
        %v3056 = vmul.f32 %v3053, %v3055
        %v3057 = vadd.f32 %v3030, %v3056
        %s3058 = sld [smem:[#allocation7 + $0x13]]
        %v3059 = vstv %s3058
        %v3060 = vmul.f32 %v3036, %v3059
        %v3061 = vadd.f32 %v3057, %v3060
        %3062 = vrot.lane.b32.xlu0 %v3048, 126
        %v3063 = vpop.permute.xlu0 %3062
        %v3065 = vsel %vm2875, %v3063, 0.0
        %s3066 = sld [smem:[#allocation7 + $0x14]]
        %v3067 = vstv %s3066
        %v3068 = vmul.f32 %v3065, %v3067
        %v3069 = vadd.f32 %v3061, %v3068
        %3070 = vrot.lane.b32.xlu0 %v2807, 16
        %v3071 = vpop.permute.xlu0 %3070
        %v3072 = vsel %vm705, %v3071, %v2807
        %3073 = vrot.lane.b32.xlu0 %v3072, 16
        %v3074 = vpop.permute.xlu0 %3073
        %v3075 = vsel %vm705, %v3074, %v2807
        %3077 = vrot.lane.b32.xlu0 %v3075, 114
        %v3078 = vpop.permute.xlu0 %3077
        %v3080 = vsel %vm2862, %v3078, 0.0
        %s3081 = sld [smem:[#allocation7 + $0x15]]
        %v3082 = vstv %s3081
        %v3083 = vmul.f32 %v3080, %v3082
        %v3084 = vadd.f32 %v3069, %v3083
        %s3085 = sld [smem:[#allocation7 + $0x16]]
        %v3086 = vstv %s3085
        %v3087 = vmul.f32 %v2807, %v3086
        %v3088 = vadd.f32 %v3084, %v3087
        %3089 = vrot.lane.b32.xlu0 %v3075, 126
        %v3090 = vpop.permute.xlu0 %3089
        %v3092 = vsel %vm2875, %v3090, 0.0
        %s3093 = sld [smem:[#allocation7 + $0x17]]
        %v3094 = vstv %s3093
        %v3095 = vmul.f32 %v3092, %v3094
        %v3096 = vadd.f32 %v3088, %v3095
        %3097 = vrot.lane.b32.xlu0 %v3042, 16
        %v3098 = vpop.permute.xlu0 %3097
        %v3099 = vsel %vm705, %v3098, %v3042
        %3100 = vrot.lane.b32.xlu0 %v3099, 16
        %v3101 = vpop.permute.xlu0 %3100
        %v3102 = vsel %vm705, %v3101, %v3042
        %3104 = vrot.lane.b32.xlu0 %v3102, 114
        %v3105 = vpop.permute.xlu0 %3104
        %v3107 = vsel %vm2862, %v3105, 0.0
        %s3108 = sld [smem:[#allocation7 + $0x18]]
        %v3109 = vstv %s3108
        %v3110 = vmul.f32 %v3107, %v3109
        %v3111 = vadd.f32 %v3096, %v3110
        %s3112 = sld [smem:[#allocation7 + $0x19]]
        %v3113 = vstv %s3112
        %v3114 = vmul.f32 %v3042, %v3113
        %v3115 = vadd.f32 %v3111, %v3114
        %3116 = vrot.lane.b32.xlu0 %v3102, 126
        %v3117 = vpop.permute.xlu0 %3116
        %v3119 = vsel %vm2875, %v3117, 0.0
        %s3120 = sld [smem:[#allocation7 + $0x1a]]
        %v3121 = vstv %s3120
        %v3122 = vmul.f32 %v3119, %v3121
        %v3123 = vadd.f32 %v3115, %v3122
        %v3124 = vadd.s32 %v698, 8
        %v3125 = vmul.u32 %v713, 2
        %vm3126 = vcmp.eq.s32.totalorder %v698, %v3125
        %vm3127 = vcmp.eq.s32.totalorder %v3124, %v3125
        %v3128 = vsel %vm3126, 1, 0
        %v3129 = vsel %vm3127, 1, 0
        %v3130 = vcvt.s32.f32 %v3128
        %v3131 = vcvt.s32.f32 %v3129
        %vm3132 = vcmask 130048
        %v3134 = vsel %vm3132, %v3123, 0
        %3136 = vmatprep.subr.mxu0 0.0
        %3137 = vmatpush1.msra.mxu0 0.0
        %3138 = vmatprep.subr.mxu0 0.0
        %3139 = vmatpush1.msra.mxu0 0.0
        %3140 = vmatprep.subr.mxu0 0.0
        %3141 = vmatpush1.msra.mxu0 0.0
        %3142 = vmatprep.subr.mxu0 0.0
        %3143 = vmatpush1.msra.mxu0 0.0
        %3144 = vmatprep.subr.mxu0 0.0
        %3145 = vmatpush1.msra.mxu0 0.0
        %3146 = vmatprep.subr.mxu0 0.0
        %3147 = vmatpush1.msra.mxu0 0.0
        %3148 = vmatprep.subr.mxu0 0.0
        %3149 = vmatpush1.msra.mxu0 0.0
        %3150 = vmatprep.subr.mxu0 0.0
        %3151 = vmatpush1.msra.mxu0 0.0
        %3152 = vmatprep.subr.mxu0 0.0
        %3153 = vmatpush1.msra.mxu0 0.0
        %3154 = vmatprep.subr.mxu0 0.0
        %3155 = vmatpush1.msra.mxu0 0.0
        %3156 = vmatprep.subr.mxu0 0.0
        %3157 = vmatpush1.msra.mxu0 0.0
        %3158 = vmatprep.subr.mxu0 0.0
        %3159 = vmatpush1.msra.mxu0 0.0
        %3160 = vmatprep.subr.mxu0 0.0
        %3161 = vmatpush1.msra.mxu0 0.0
        %3162 = vmatprep.subr.mxu0 0.0
        %3163 = vmatpush1.msra.mxu0 0.0
        %3164 = vmatprep.subr.mxu0 0.0
        %3165 = vmatpush1.msra.mxu0 %v3131
        %3166 = vmatprep.subr.mxu0 0.0
        %3167 = vmatpush1.msra.mxu0 %v3130
        %3168 = vmatprep.subr.mxu0 0.0
        %3169 = vmatpush2.msra.mxu0 0.0
        %3170 = vmatprep.subr.mxu0 0.0
        %3171 = vmatpush2.msra.mxu0 0.0
        %3172 = vmatprep.subr.mxu0 0.0
        %3173 = vmatpush2.msra.mxu0 0.0
        %3174 = vmatprep.subr.mxu0 0.0
        %3175 = vmatpush2.msra.mxu0 0.0
        %3176 = vmatprep.subr.mxu0 0.0
        %3177 = vmatpush2.msra.mxu0 0.0
        %3178 = vmatprep.subr.mxu0 0.0
        %3179 = vmatpush2.msra.mxu0 0.0
        %3180 = vmatprep.subr.mxu0 0.0
        %3181 = vmatpush2.msra.mxu0 0.0
        %3182 = vmatprep.subr.mxu0 0.0
        %3183 = vmatpush2.msra.mxu0 0.0
        %3184 = vmatprep.subr.mxu0 0.0
        %3185 = vmatpush2.msra.mxu0 0.0
        %3186 = vmatprep.subr.mxu0 0.0
        %3187 = vmatpush2.msra.mxu0 0.0
        %3188 = vmatprep.subr.mxu0 0.0
        %3189 = vmatpush2.msra.mxu0 0.0
        %3190 = vmatprep.subr.mxu0 0.0
        %3191 = vmatpush2.msra.mxu0 0.0
        %3192 = vmatprep.subr.mxu0 0.0
        %3193 = vmatpush2.msra.mxu0 0.0
        %3194 = vmatprep.subr.mxu0 0.0
        %3195 = vmatpush2.msra.mxu0 0.0
        %3196 = vmatprep.subr.mxu0 0.0
        %3197 = vmatpush2.msra.mxu0 0.0
        %3198 = vmatprep.subr.mxu0 0.0
        %3199 = vmatpush2.msra.mxu0 0.0
        %3200 = vmatprep.mubr.f32.mxu0 0.0
        %3201 = vmatmul.mubr.f32.gmra.mxu0 %v3134
        %v3202 = vpop.f32.mrf.mxu0
        %v3203 = vadd.f32 0.0, %v3202
        %v3204 = vpop.f32.mrf.mxu0
        %3205 = vdwg.mxu0
        %v3206 = vxor.u32 %v3203, 2147483648
        %v3207 = vmul.f32 %v3206, 1.442695
        %v3208 = vpow.pop %v3207
        %v3209 = vadd.f32 %v3208, 1.0
        %v3210 = vrcp.pop %v3209
        %v3211 = vmul.f32 1.0, %v3210
        %v3212 = vld [vmem:[%s683] sm:$0xff]
        %v3213 = vld [vmem:[%s683 + $0x8] sm:$0xff]
        %v3214 = vld [vmem:[%s683 + $0x10] sm:$0xff]
        %v3215 = vld [vmem:[%s683 + $0x18] sm:$0xff]
        %v3216 = vadd.f32 %v3211, 1.0
        %v3217 = vmul.f32 %v3212, %v3216
        %v3218 = vmul.f32 %v3213, %v3216
        %v3219 = vmul.f32 %v3214, %v3216
        %v3220 = vmul.f32 %v3215, %v3216
        %vm3221 = vcmask 64512
        %3222 = vst.msk [vmem:[%s655] sm:$0xff] %vm3221, %v3217
        %3223 = vst.msk [vmem:[%s655 + $0x8] sm:$0xff] %vm3221, %v3218
        %3224 = vst.msk [vmem:[%s655 + $0x10] sm:$0xff] %vm3221, %v3219
        %3225 = vst.msk [vmem:[%s655 + $0x18] sm:$0xff] %vm3221, %v3220
        %s3226 = sand.u32 %s273, 1
        %s3227 = scalar_lea.sflag [#allocation3], %s3226
        %s3228 = sand.u32 %s273, 1
        %s3229 = smul.addr %s3228, 32
        %s3230 = scalar_lea.vmem [#allocation11], %s3229
        // Predicated region
        $region188: #{_cla_forward.1} parent=162 // pred_check
          %p3231 = pneg %p283
        $region189: #{_cla_forward.1} parent=162 // pred_check_branch
          %3233 = sbr.rel (%p3231) target = $region191
        $region190: #{_cla_forward.1} parent=162 // pred_region
          %s3235 = ssub.s32 512, 512
          %3236 = vsyncadd %s3227, %s3235
          %s3237 = smul.addr %s28, 4
          %s3238 = sadd.s32 %s29, %s3237
          %s3239 = smul.addr %s3238, 128
          %s3240 = scalar_lea.hbm %s8, %s3239
          %s3241 = sshll.u32 %s3230, 4
          %s3242 = int_to_ptr.vmem [resolvable:$true] %s3241
          %3247 = dma.vmem_to_hbm [thread:$0]  %s3242, 512, %s3240, %s3227, 128, 128, 8
        $region191: #{_cla_forward.1} parent=162 // pred_fallthru
          _
      $region163: #{_cla_forward.1} parent=5 // pred_fallthru
        _
      %p3248 = scmp.le.s32.totalorder 2, %s19
      // Predicated region
      $region192: #{_cla_forward.1} parent=5 // pred_check
        %p3249 = pneg %p3248
      $region193: #{_cla_forward.1} parent=5 // pred_check_branch
        %3251 = sbr.rel (%p3249) target = $region195
      $region194: #{_cla_forward.1} parent=5 // pred_region
        %s3252 = ssub.s32 %s19, 2
        // Predicated region
        $region196: #{_cla_forward.1} parent=194 // pred_check
          %p3253 = pneg %p289
        $region197: #{_cla_forward.1} parent=194 // pred_check_branch
          %3255 = sbr.rel (%p3253) target = $region199
        $region198: #{_cla_forward.1} parent=194 // pred_region
          %s3256 = sand.u32 %s274, 1
          %s3257 = scalar_lea.sflag [#allocation3], %s3256
          %s3258 = sand.u32 %s274, 1
          %s3259 = smul.addr %s3258, 32
          %s3260 = scalar_lea.vmem [#allocation11], %s3259
          %3261 = dma.done %s3257, 512
        $region199: #{_cla_forward.1} parent=194 // pred_fallthru
          _
      $region195: #{_cla_forward.1} parent=5 // pred_fallthru
        _
    $region6: #{_cla_forward.1} parent=1 // loop_footer
      %s23 = sadd.s32 1, %s19
    $region7: #{_cla_forward.1} parent=1 // loop_footer_branch
      %18 = sbr.rel target = $region3
    $region8: #{_cla_forward.1} parent=1 // loop_exit
      _
    %3262 = vsyncpa [#allocation3], 1
    %s3263 = scalar_lea.sflag [#allocation3], 1
    %3264 = vsyncpa %s3263, 1
    %3265 = vsyncpa [#allocation4], 1
    %s3266 = scalar_lea.sflag [#allocation4], 1
    %3267 = vsyncpa %s3266, 1
    %3268 = vsyncpa [#allocation6], 1

</llo_original>
